<compile_context>
chip_gen: v5e
topology: v5e:2x2
jax: 0.10.0
libtpu: 0.0.40
codegen_flags: <defaults>
</compile_context>

<pallas_src>
import jax
import jax.numpy as jnp
from jax.experimental import pallas as pl
from jax.experimental.pallas import tpu as pltpu


CLASS_PAD = 128   # class dim 10 padded to one full lane group -> unmasked vst


def _round_up(x, m):
    return ((x + m - 1) // m) * m


def _has_multiple_tensorcores():
    """True on chips with >1 TensorCore per chip (v7x): want >=2 grid steps."""
    try:
        kind = jax.devices()[0].device_kind.lower()
    except Exception:
        return False
    return ("v7" in kind) or ("7x" in kind)


def _choose_tb(batch, prefer_multi_step):
    """Pick the batch tile: amortize per-step overhead, minimize padding waste,
    and (on multi-TC chips) keep >=2, preferably even, grid steps."""
    b8 = _round_up(max(batch, 1), 8)          # f32 sublane alignment
    if b8 <= 128:
        return b8                             # tiny batch: single full tile
    cands = [1024, 512, 256, 128]
    steps = lambda t: _round_up(b8, t) // t
    waste = lambda t: _round_up(b8, t) - b8
    if prefer_multi_step:
        multi = [t for t in cands if steps(t) >= 2]
        if multi:
            cands = multi
        # minimize waste, then prefer an even step count, then the largest tile
        return min(cands, key=lambda t: (waste(t), steps(t) % 2, -t))
    return min(cands, key=lambda t: (waste(t), -t))


def _deep_mlp_kernel(x_ref,
                     w1_ref, b1_ref,
                     w2_ref, b2_ref,
                     w3_ref, b3_ref,
                     w4_ref, b4_ref,
                     o_ref):
    # x arrives as f32 (TB, 784); cast to bf16 in-kernel (VPU) for the MXU.
    x = x_ref[...].astype(jnp.bfloat16)

    # fc1: (TB, 784) @ (784, 512), f32 accumulate, +bias, ReLU, back to bf16.
    h = jnp.dot(x, w1_ref[...], preferred_element_type=jnp.float32)
    h = jnp.maximum(h + b1_ref[...], 0.0).astype(jnp.bfloat16)

    # fc2: (TB, 512) @ (512, 256)
    h = jnp.dot(h, w2_ref[...], preferred_element_type=jnp.float32)
    h = jnp.maximum(h + b2_ref[...], 0.0).astype(jnp.bfloat16)

    # fc3: (TB, 256) @ (256, 128)
    h = jnp.dot(h, w3_ref[...], preferred_element_type=jnp.float32)
    h = jnp.maximum(h + b3_ref[...], 0.0).astype(jnp.bfloat16)

    # fc4: (TB, 128) @ (128, 128) -> logits (class dim zero-padded to 128).
    h = jnp.dot(h, w4_ref[...], preferred_element_type=jnp.float32)
    o_ref[...] = (h + b4_ref[...]).astype(o_ref.dtype)


def pack_params(params):
    """One-time (out,in)->(in,out) transpose, class-dim padding, bf16 cast.

    Keep the result around; do NOT call this per forward step.
    """
    # TODO(synk): optional W1 quantization (fp8 on v7x / int8 on v5e) for the
    # dominant 784x512 layer; left in bf16 pending an accuracy check.
    def pad_to(a, shape):
        buf = jnp.zeros(shape, a.dtype)
        return buf.at[tuple(slice(0, s) for s in a.shape)].set(a)

    w1 = params["w1"].T.astype(jnp.bfloat16)                            # (784, 512)
    w2 = params["w2"].T.astype(jnp.bfloat16)                            # (512, 256)
    w3 = params["w3"].T.astype(jnp.bfloat16)                            # (256, 128)
    w4 = pad_to(params["w4"].T, (128, CLASS_PAD)).astype(jnp.bfloat16)  # (128, 128)

    b1 = params["b1"][None, :].astype(jnp.float32)
    b2 = params["b2"][None, :].astype(jnp.float32)
    b3 = params["b3"][None, :].astype(jnp.float32)
    b4 = pad_to(params["b4"][None, :], (1, CLASS_PAD)).astype(jnp.float32)

    return (w1, b1, w2, b2, w3, b3, w4, b4)


def deep_mlp_forward(x, packed, num_classes=10, tb=None):
    """x: (B, ...) flattened to (B, in_features) like x.view(B, -1)."""
    B = x.shape[0]
    x = x.reshape(B, -1)
    in_features = x.shape[1]
    w1, b1, w2, b2, w3, b3, w4, b4 = packed
    assert w1.shape[0] == in_features, (w1.shape, in_features)

    if tb is None:
        TB = _choose_tb(B, _has_multiple_tensorcores())
    else:
        TB = max(8, min(_round_up(tb, 8), _round_up(B, 8)))
    B_pad = _round_up(B, TB)

    # Only batch padding (when B % TB != 0); no feature pad, no host-side cast.
    if B_pad != B:
        x_p = jnp.zeros((B_pad, in_features), x.dtype).at[:B].set(x)
    else:
        x_p = x

    grid = (B_pad // TB,)

    cp_kwargs = dict(dimension_semantics=("parallel",))   # megacore split on v7x
    if TB >= 1024:
        # v5e's default scoped VMEM (16 MiB) is tight at TB>=1024; harmless on
        # v6e/v7x (32 MiB default, 128/64 MiB physical).
        cp_kwargs["vmem_limit_bytes"] = 48 * 1024 * 1024
    compiler_params = pltpu.CompilerParams(**cp_kwargs)

    def run(single_buffer_weights):
        if single_buffer_weights:
            # Constant index_map -> DMA'd once; single-buffer them to reclaim
            # the dead ~1.25 MB double-buffer.
            const = lambda s: pl.BlockSpec(s, lambda i: (0, 0),
                                           pipeline_mode=pl.Buffered(1))
        else:
            const = lambda s: pl.BlockSpec(s, lambda i: (0, 0))
        return pl.pallas_call(
            _deep_mlp_kernel,
            out_shape=jax.ShapeDtypeStruct((B_pad, CLASS_PAD), jnp.bfloat16),
            grid=grid,
            in_specs=[
                pl.BlockSpec((TB, in_features), lambda i: (i, 0)),  # stream x
                const(w1.shape), const(b1.shape),
                const(w2.shape), const(b2.shape),
                const(w3.shape), const(b3.shape),
                const(w4.shape), const(b4.shape),
            ],
            out_specs=pl.BlockSpec((TB, CLASS_PAD), lambda i: (i, 0)),
            compiler_params=compiler_params,
        )(x_p, w1, b1, w2, b2, w3, b3, w4, b4)

    # TODO(synk): for latency-critical tiny-batch loops, persist/prefetch the
    # ~1.2 MB of weights across calls (cross-pallas_call VMEM+semaphore future)
    # instead of re-DMAing them every call.
    try:
        out = run(single_buffer_weights=True)
    except Exception:
        out = run(single_buffer_weights=False)   # fallback if Buffered(1) rejected

    return out[:B, :num_classes]


def init_params(key, input_size=784, num_classes=10):
    """Deterministic param init matching DeepMLP's shapes (PyTorch (out,in))."""
    dims = [(512, input_size), (256, 512), (128, 256), (num_classes, 128)]
    params = {}
    for i, (out_f, in_f) in enumerate(dims, start=1):
        key, kw, kb = jax.random.split(key, 3)
        bound = 1.0 / jnp.sqrt(in_f)
        params[f"w{i}"] = jax.random.uniform(
            kw, (out_f, in_f), jnp.float32, minval=-bound, maxval=bound)
        params[f"b{i}"] = jax.random.uniform(
            kb, (out_f,), jnp.float32, minval=-bound, maxval=bound)
    return params


def reference_forward(x, params):
    h = x.reshape(x.shape[0], -1)
    for i in range(1, 5):
        h = h @ params[f"w{i}"].T + params[f"b{i}"]
        if i < 4:
            h = jnp.maximum(h, 0.0)
    return h


if __name__ == "__main__":
    key = jax.random.PRNGKey(0)
    key, kx, kx2, kp = jax.random.split(key, 4)

    INPUT_SIZE, NUM_CLASSES = 784, 10
    params = init_params(kp, INPUT_SIZE, NUM_CLASSES)
    packed = pack_params(params)   # one-time weight prep (transpose/pad/bf16)

    # Small image-like batch (grid = 1 tile), mirrors x.view(B, -1).
    B = 2
    x = jax.random.normal(kx, (B, 1, 28, 28), jnp.float32)
    out = jax.block_until_ready(deep_mlp_forward(x, packed, num_classes=NUM_CLASSES))
    ref = reference_forward(x, params)
    assert out.shape == (B, NUM_CLASSES)
    err = jnp.max(jnp.abs(out.astype(jnp.float32) - ref))
    assert jnp.allclose(out.astype(jnp.float32), ref, atol=5e-2, rtol=5e-2), (
        f"max abs err {err}")

    # Awkward batch (exercises TB selection + multi-step grid + batch padding).
    B2 = 300
    x2 = jax.random.normal(kx2, (B2, INPUT_SIZE), jnp.float32)
    out2 = jax.block_until_ready(deep_mlp_forward(x2, packed, num_classes=NUM_CLASSES))
    ref2 = reference_forward(x2, params)
    assert out2.shape == (B2, NUM_CLASSES)
    err2 = jnp.max(jnp.abs(out2.astype(jnp.float32) - ref2))
    assert jnp.allclose(out2.astype(jnp.float32), ref2, atol=5e-2, rtol=5e-2), (
        f"max abs err {err2}")

    print("KERNEL_OK")
</pallas_src>

<mosaic_0001>
module attributes {stable_mosaic.version = 11 : i64} {
  func.func @_deep_mlp_kernel(%arg0: i32, %arg1: memref<8x784xf32, #tpu.memory_space<vmem>>, %arg2: memref<784x512xbf16, #tpu.memory_space<vmem>>, %arg3: memref<1x512xf32, #tpu.memory_space<vmem>>, %arg4: memref<512x256xbf16, #tpu.memory_space<vmem>>, %arg5: memref<1x256xf32, #tpu.memory_space<vmem>>, %arg6: memref<256x128xbf16, #tpu.memory_space<vmem>>, %arg7: memref<1x128xf32, #tpu.memory_space<vmem>>, %arg8: memref<128x128xbf16, #tpu.memory_space<vmem>>, %arg9: memref<1x128xf32, #tpu.memory_space<vmem>>, %arg10: memref<8x128xbf16, #tpu.memory_space<vmem>>) attributes {dimension_semantics = [#tpu.dimension_semantics<parallel>], iteration_bounds = array<i64: 1>, scalar_prefetch = 0 : i64, scratch_operands = 0 : i64, tpu.core_type = #tpu.core_type<tc>, window_params = [{transform_indices = @transform_0, window_bounds = array<i64: 8, 784>}, {pipeline_mode = #tpu.pipeline_mode<synchronous>, transform_indices = @transform_1, window_bounds = array<i64: 784, 512>}, {pipeline_mode = #tpu.pipeline_mode<synchronous>, transform_indices = @transform_2, window_bounds = array<i64: 1, 512>}, {pipeline_mode = #tpu.pipeline_mode<synchronous>, transform_indices = @transform_3, window_bounds = array<i64: 512, 256>}, {pipeline_mode = #tpu.pipeline_mode<synchronous>, transform_indices = @transform_4, window_bounds = array<i64: 1, 256>}, {pipeline_mode = #tpu.pipeline_mode<synchronous>, transform_indices = @transform_5, window_bounds = array<i64: 256, 128>}, {pipeline_mode = #tpu.pipeline_mode<synchronous>, transform_indices = @transform_6, window_bounds = array<i64: 1, 128>}, {pipeline_mode = #tpu.pipeline_mode<synchronous>, transform_indices = @transform_7, window_bounds = array<i64: 128, 128>}, {pipeline_mode = #tpu.pipeline_mode<synchronous>, transform_indices = @transform_8, window_bounds = array<i64: 1, 128>}, {transform_indices = @transform_9, window_bounds = array<i64: 8, 128>}]} {
    %c0 = arith.constant 0 : index
    %c0_0 = arith.constant 0 : index
    %0 = vector.load %arg1[%c0, %c0_0] : memref<8x784xf32, #tpu.memory_space<vmem>>, vector<8x784xf32>
    %1 = arith.truncf %0 : vector<8x784xf32> to vector<8x784xbf16>
    %c0_1 = arith.constant 0 : index
    %c0_2 = arith.constant 0 : index
    %2 = vector.load %arg2[%c0_1, %c0_2] : memref<784x512xbf16, #tpu.memory_space<vmem>>, vector<784x512xbf16>
    %cst = arith.constant dense<0.000000e+00> : vector<8x512xf32>
    %3 = tpu.matmul %1, %2, %cst {dimension_numbers = #tpu.dot_dimension_numbers<[1], [0], [0], [1], [0, 0, 1, 1], [], []>} : vector<8x784xbf16>, vector<784x512xbf16>, vector<8x512xf32> -> vector<8x512xf32>
    %c0_3 = arith.constant 0 : index
    %c0_4 = arith.constant 0 : index
    %4 = vector.load %arg3[%c0_3, %c0_4] : memref<1x512xf32, #tpu.memory_space<vmem>>, vector<1x512xf32>
    %5 = vector.broadcast %4 : vector<1x512xf32> to vector<8x512xf32>
    %6 = arith.addf %3, %5 : vector<8x512xf32>
    %cst_5 = arith.constant 0.000000e+00 : f32
    %7 = vector.broadcast %cst_5 : f32 to vector<8x512xf32>
    %8 = arith.maximumf %6, %7 : vector<8x512xf32>
    %9 = arith.truncf %8 : vector<8x512xf32> to vector<8x512xbf16>
    %c0_6 = arith.constant 0 : index
    %c0_7 = arith.constant 0 : index
    %10 = vector.load %arg4[%c0_6, %c0_7] : memref<512x256xbf16, #tpu.memory_space<vmem>>, vector<512x256xbf16>
    %cst_8 = arith.constant dense<0.000000e+00> : vector<8x256xf32>
    %11 = tpu.matmul %9, %10, %cst_8 {dimension_numbers = #tpu.dot_dimension_numbers<[1], [0], [0], [1], [0, 0, 1, 1], [], []>} : vector<8x512xbf16>, vector<512x256xbf16>, vector<8x256xf32> -> vector<8x256xf32>
    %c0_9 = arith.constant 0 : index
    %c0_10 = arith.constant 0 : index
    %12 = vector.load %arg5[%c0_9, %c0_10] : memref<1x256xf32, #tpu.memory_space<vmem>>, vector<1x256xf32>
    %13 = vector.broadcast %12 : vector<1x256xf32> to vector<8x256xf32>
    %14 = arith.addf %11, %13 : vector<8x256xf32>
    %cst_11 = arith.constant 0.000000e+00 : f32
    %15 = vector.broadcast %cst_11 : f32 to vector<8x256xf32>
    %16 = arith.maximumf %14, %15 : vector<8x256xf32>
    %17 = arith.truncf %16 : vector<8x256xf32> to vector<8x256xbf16>
    %c0_12 = arith.constant 0 : index
    %c0_13 = arith.constant 0 : index
    %18 = vector.load %arg6[%c0_12, %c0_13] : memref<256x128xbf16, #tpu.memory_space<vmem>>, vector<256x128xbf16>
    %cst_14 = arith.constant dense<0.000000e+00> : vector<8x128xf32>
    %19 = tpu.matmul %17, %18, %cst_14 {dimension_numbers = #tpu.dot_dimension_numbers<[1], [0], [0], [1], [0, 0, 1, 1], [], []>} : vector<8x256xbf16>, vector<256x128xbf16>, vector<8x128xf32> -> vector<8x128xf32>
    %c0_15 = arith.constant 0 : index
    %c0_16 = arith.constant 0 : index
    %20 = vector.load %arg7[%c0_15, %c0_16] : memref<1x128xf32, #tpu.memory_space<vmem>>, vector<1x128xf32>
    %21 = vector.broadcast %20 : vector<1x128xf32> to vector<8x128xf32>
    %22 = arith.addf %19, %21 : vector<8x128xf32>
    %cst_17 = arith.constant 0.000000e+00 : f32
    %23 = vector.broadcast %cst_17 : f32 to vector<8x128xf32>
    %24 = arith.maximumf %22, %23 : vector<8x128xf32>
    %25 = arith.truncf %24 : vector<8x128xf32> to vector<8x128xbf16>
    %c0_18 = arith.constant 0 : index
    %c0_19 = arith.constant 0 : index
    %26 = vector.load %arg8[%c0_18, %c0_19] : memref<128x128xbf16, #tpu.memory_space<vmem>>, vector<128x128xbf16>
    %cst_20 = arith.constant dense<0.000000e+00> : vector<8x128xf32>
    %27 = tpu.matmul %25, %26, %cst_20 {dimension_numbers = #tpu.dot_dimension_numbers<[1], [0], [0], [1], [0, 0, 1, 1], [], []>} : vector<8x128xbf16>, vector<128x128xbf16>, vector<8x128xf32> -> vector<8x128xf32>
    %c0_21 = arith.constant 0 : index
    %c0_22 = arith.constant 0 : index
    %28 = vector.load %arg9[%c0_21, %c0_22] : memref<1x128xf32, #tpu.memory_space<vmem>>, vector<1x128xf32>
    %29 = vector.broadcast %28 : vector<1x128xf32> to vector<8x128xf32>
    %30 = arith.addf %27, %29 : vector<8x128xf32>
    %31 = arith.truncf %30 : vector<8x128xf32> to vector<8x128xbf16>
    %c0_23 = arith.constant 0 : index
    %c0_24 = arith.constant 0 : index
    %32 = vector.load %arg10[%c0_23, %c0_24] : memref<8x128xbf16, #tpu.memory_space<vmem>>, vector<8x128xbf16>
    tpu.vector_store %arg10[%c0_23, %c0_24], %31 {strides = array<i32>} : memref<8x128xbf16, #tpu.memory_space<vmem>>, vector<8x128xbf16>,
    return
  }
  func.func @transform_0(%arg0: i32) -> (i32, i32) {
    %c0_i32 = arith.constant 0 : i32
    %c0_i32_0 = arith.constant 0 : i32
    return %arg0, %c0_i32 : i32, i32
  }
  func.func @transform_1(%arg0: i32) -> (i32, i32) {
    %c0_i32 = arith.constant 0 : i32
    %c0_i32_0 = arith.constant 0 : i32
    %c0_i32_1 = arith.constant 0 : i32
    return %c0_i32, %c0_i32_0 : i32, i32
  }
  func.func @transform_2(%arg0: i32) -> (i32, i32) {
    %c0_i32 = arith.constant 0 : i32
    %c0_i32_0 = arith.constant 0 : i32
    %c0_i32_1 = arith.constant 0 : i32
    return %c0_i32, %c0_i32_0 : i32, i32
  }
  func.func @transform_3(%arg0: i32) -> (i32, i32) {
    %c0_i32 = arith.constant 0 : i32
    %c0_i32_0 = arith.constant 0 : i32
    %c0_i32_1 = arith.constant 0 : i32
    return %c0_i32, %c0_i32_0 : i32, i32
  }
  func.func @transform_4(%arg0: i32) -> (i32, i32) {
    %c0_i32 = arith.constant 0 : i32
    %c0_i32_0 = arith.constant 0 : i32
    %c0_i32_1 = arith.constant 0 : i32
    return %c0_i32, %c0_i32_0 : i32, i32
  }
  func.func @transform_5(%arg0: i32) -> (i32, i32) {
    %c0_i32 = arith.constant 0 : i32
    %c0_i32_0 = arith.constant 0 : i32
    %c0_i32_1 = arith.constant 0 : i32
    return %c0_i32, %c0_i32_0 : i32, i32
  }
  func.func @transform_6(%arg0: i32) -> (i32, i32) {
    %c0_i32 = arith.constant 0 : i32
    %c0_i32_0 = arith.constant 0 : i32
    %c0_i32_1 = arith.constant 0 : i32
    return %c0_i32, %c0_i32_0 : i32, i32
  }
  func.func @transform_7(%arg0: i32) -> (i32, i32) {
    %c0_i32 = arith.constant 0 : i32
    %c0_i32_0 = arith.constant 0 : i32
    %c0_i32_1 = arith.constant 0 : i32
    return %c0_i32, %c0_i32_0 : i32, i32
  }
  func.func @transform_8(%arg0: i32) -> (i32, i32) {
    %c0_i32 = arith.constant 0 : i32
    %c0_i32_0 = arith.constant 0 : i32
    %c0_i32_1 = arith.constant 0 : i32
    return %c0_i32, %c0_i32_0 : i32, i32
  }
  func.func @transform_9(%arg0: i32) -> (i32, i32) {
    %c0_i32 = arith.constant 0 : i32
    %c0_i32_0 = arith.constant 0 : i32
    return %arg0, %c0_i32 : i32, i32
  }
}

module attributes {stable_mosaic.version = 11 : i64} {
  func.func @_deep_mlp_kernel(%arg0: i32, %arg1: memref<8x784xf32, #tpu.memory_space<vmem>>, %arg2: memref<784x512xbf16, #tpu.memory_space<vmem>>, %arg3: memref<1x512xf32, #tpu.memory_space<vmem>>, %arg4: memref<512x256xbf16, #tpu.memory_space<vmem>>, %arg5: memref<1x256xf32, #tpu.memory_space<vmem>>, %arg6: memref<256x128xbf16, #tpu.memory_space<vmem>>, %arg7: memref<1x128xf32, #tpu.memory_space<vmem>>, %arg8: memref<128x128xbf16, #tpu.memory_space<vmem>>, %arg9: memref<1x128xf32, #tpu.memory_space<vmem>>, %arg10: memref<8x128xbf16, #tpu.memory_space<vmem>>) attributes {dimension_semantics = [#tpu.dimension_semantics<parallel>], iteration_bounds = array<i64: 1>, scalar_prefetch = 0 : i64, scratch_operands = 0 : i64, tpu.core_type = #tpu.core_type<tc>, window_params = [{transform_indices = @transform_0, window_bounds = array<i64: 8, 784>}, {pipeline_mode = #tpu.pipeline_mode<synchronous>, transform_indices = @transform_1, window_bounds = array<i64: 784, 512>}, {pipeline_mode = #tpu.pipeline_mode<synchronous>, transform_indices = @transform_2, window_bounds = array<i64: 1, 512>}, {pipeline_mode = #tpu.pipeline_mode<synchronous>, transform_indices = @transform_3, window_bounds = array<i64: 512, 256>}, {pipeline_mode = #tpu.pipeline_mode<synchronous>, transform_indices = @transform_4, window_bounds = array<i64: 1, 256>}, {pipeline_mode = #tpu.pipeline_mode<synchronous>, transform_indices = @transform_5, window_bounds = array<i64: 256, 128>}, {pipeline_mode = #tpu.pipeline_mode<synchronous>, transform_indices = @transform_6, window_bounds = array<i64: 1, 128>}, {pipeline_mode = #tpu.pipeline_mode<synchronous>, transform_indices = @transform_7, window_bounds = array<i64: 128, 128>}, {pipeline_mode = #tpu.pipeline_mode<synchronous>, transform_indices = @transform_8, window_bounds = array<i64: 1, 128>}, {transform_indices = @transform_9, window_bounds = array<i64: 8, 128>}]} {
    %c0 = arith.constant 0 : index
    %c0_0 = arith.constant 0 : index
    %0 = vector.load %arg1[%c0, %c0_0] : memref<8x784xf32, #tpu.memory_space<vmem>>, vector<8x784xf32>
    %1 = arith.truncf %0 : vector<8x784xf32> to vector<8x784xbf16>
    %c0_1 = arith.constant 0 : index
    %c0_2 = arith.constant 0 : index
    %2 = vector.load %arg2[%c0_1, %c0_2] : memref<784x512xbf16, #tpu.memory_space<vmem>>, vector<784x512xbf16>
    %cst = arith.constant dense<0.000000e+00> : vector<8x512xf32>
    %3 = tpu.matmul %1, %2, %cst {dimension_numbers = #tpu.dot_dimension_numbers<[1], [0], [0], [1], [0, 0, 1, 1], [], []>} : vector<8x784xbf16>, vector<784x512xbf16>, vector<8x512xf32> -> vector<8x512xf32>
    %c0_3 = arith.constant 0 : index
    %c0_4 = arith.constant 0 : index
    %4 = vector.load %arg3[%c0_3, %c0_4] : memref<1x512xf32, #tpu.memory_space<vmem>>, vector<1x512xf32>
    %5 = vector.broadcast %4 : vector<1x512xf32> to vector<8x512xf32>
    %6 = arith.addf %3, %5 : vector<8x512xf32>
    %cst_5 = arith.constant 0.000000e+00 : f32
    %7 = vector.broadcast %cst_5 : f32 to vector<8x512xf32>
    %8 = arith.maximumf %6, %7 : vector<8x512xf32>
    %9 = arith.truncf %8 : vector<8x512xf32> to vector<8x512xbf16>
    %c0_6 = arith.constant 0 : index
    %c0_7 = arith.constant 0 : index
    %10 = vector.load %arg4[%c0_6, %c0_7] : memref<512x256xbf16, #tpu.memory_space<vmem>>, vector<512x256xbf16>
    %cst_8 = arith.constant dense<0.000000e+00> : vector<8x256xf32>
    %11 = tpu.matmul %9, %10, %cst_8 {dimension_numbers = #tpu.dot_dimension_numbers<[1], [0], [0], [1], [0, 0, 1, 1], [], []>} : vector<8x512xbf16>, vector<512x256xbf16>, vector<8x256xf32> -> vector<8x256xf32>
    %c0_9 = arith.constant 0 : index
    %c0_10 = arith.constant 0 : index
    %12 = vector.load %arg5[%c0_9, %c0_10] : memref<1x256xf32, #tpu.memory_space<vmem>>, vector<1x256xf32>
    %13 = vector.broadcast %12 : vector<1x256xf32> to vector<8x256xf32>
    %14 = arith.addf %11, %13 : vector<8x256xf32>
    %cst_11 = arith.constant 0.000000e+00 : f32
    %15 = vector.broadcast %cst_11 : f32 to vector<8x256xf32>
    %16 = arith.maximumf %14, %15 : vector<8x256xf32>
    %17 = arith.truncf %16 : vector<8x256xf32> to vector<8x256xbf16>
    %c0_12 = arith.constant 0 : index
    %c0_13 = arith.constant 0 : index
    %18 = vector.load %arg6[%c0_12, %c0_13] : memref<256x128xbf16, #tpu.memory_space<vmem>>, vector<256x128xbf16>
    %cst_14 = arith.constant dense<0.000000e+00> : vector<8x128xf32>
    %19 = tpu.matmul %17, %18, %cst_14 {dimension_numbers = #tpu.dot_dimension_numbers<[1], [0], [0], [1], [0, 0, 1, 1], [], []>} : vector<8x256xbf16>, vector<256x128xbf16>, vector<8x128xf32> -> vector<8x128xf32>
    %c0_15 = arith.constant 0 : index
    %c0_16 = arith.constant 0 : index
    %20 = vector.load %arg7[%c0_15, %c0_16] : memref<1x128xf32, #tpu.memory_space<vmem>>, vector<1x128xf32>
    %21 = vector.broadcast %20 : vector<1x128xf32> to vector<8x128xf32>
    %22 = arith.addf %19, %21 : vector<8x128xf32>
    %cst_17 = arith.constant 0.000000e+00 : f32
    %23 = vector.broadcast %cst_17 : f32 to vector<8x128xf32>
    %24 = arith.maximumf %22, %23 : vector<8x128xf32>
    %25 = arith.truncf %24 : vector<8x128xf32> to vector<8x128xbf16>
    %c0_18 = arith.constant 0 : index
    %c0_19 = arith.constant 0 : index
    %26 = vector.load %arg8[%c0_18, %c0_19] : memref<128x128xbf16, #tpu.memory_space<vmem>>, vector<128x128xbf16>
    %cst_20 = arith.constant dense<0.000000e+00> : vector<8x128xf32>
    %27 = tpu.matmul %25, %26, %cst_20 {dimension_numbers = #tpu.dot_dimension_numbers<[1], [0], [0], [1], [0, 0, 1, 1], [], []>} : vector<8x128xbf16>, vector<128x128xbf16>, vector<8x128xf32> -> vector<8x128xf32>
    %c0_21 = arith.constant 0 : index
    %c0_22 = arith.constant 0 : index
    %28 = vector.load %arg9[%c0_21, %c0_22] : memref<1x128xf32, #tpu.memory_space<vmem>>, vector<1x128xf32>
    %29 = vector.broadcast %28 : vector<1x128xf32> to vector<8x128xf32>
    %30 = arith.addf %27, %29 : vector<8x128xf32>
    %31 = arith.truncf %30 : vector<8x128xf32> to vector<8x128xbf16>
    %c0_23 = arith.constant 0 : index
    %c0_24 = arith.constant 0 : index
    %32 = vector.load %arg10[%c0_23, %c0_24] : memref<8x128xbf16, #tpu.memory_space<vmem>>, vector<8x128xbf16>
    tpu.vector_store %arg10[%c0_23, %c0_24], %31 {strides = array<i32>} : memref<8x128xbf16, #tpu.memory_space<vmem>>, vector<8x128xbf16>,
    return
  }
  func.func @transform_0(%arg0: i32) -> (i32, i32) {
    %c0_i32 = arith.constant 0 : i32
    %c0_i32_0 = arith.constant 0 : i32
    return %arg0, %c0_i32 : i32, i32
  }
  func.func @transform_1(%arg0: i32) -> (i32, i32) {
    %c0_i32 = arith.constant 0 : i32
    %c0_i32_0 = arith.constant 0 : i32
    %c0_i32_1 = arith.constant 0 : i32
    return %c0_i32, %c0_i32_0 : i32, i32
  }
  func.func @transform_2(%arg0: i32) -> (i32, i32) {
    %c0_i32 = arith.constant 0 : i32
    %c0_i32_0 = arith.constant 0 : i32
    %c0_i32_1 = arith.constant 0 : i32
    return %c0_i32, %c0_i32_0 : i32, i32
  }
  func.func @transform_3(%arg0: i32) -> (i32, i32) {
    %c0_i32 = arith.constant 0 : i32
    %c0_i32_0 = arith.constant 0 : i32
    %c0_i32_1 = arith.constant 0 : i32
    return %c0_i32, %c0_i32_0 : i32, i32
  }
  func.func @transform_4(%arg0: i32) -> (i32, i32) {
    %c0_i32 = arith.constant 0 : i32
    %c0_i32_0 = arith.constant 0 : i32
    %c0_i32_1 = arith.constant 0 : i32
    return %c0_i32, %c0_i32_0 : i32, i32
  }
  func.func @transform_5(%arg0: i32) -> (i32, i32) {
    %c0_i32 = arith.constant 0 : i32
    %c0_i32_0 = arith.constant 0 : i32
    %c0_i32_1 = arith.constant 0 : i32
    return %c0_i32, %c0_i32_0 : i32, i32
  }
  func.func @transform_6(%arg0: i32) -> (i32, i32) {
    %c0_i32 = arith.constant 0 : i32
    %c0_i32_0 = arith.constant 0 : i32
    %c0_i32_1 = arith.constant 0 : i32
    return %c0_i32, %c0_i32_0 : i32, i32
  }
  func.func @transform_7(%arg0: i32) -> (i32, i32) {
    %c0_i32 = arith.constant 0 : i32
    %c0_i32_0 = arith.constant 0 : i32
    %c0_i32_1 = arith.constant 0 : i32
    return %c0_i32, %c0_i32_0 : i32, i32
  }
  func.func @transform_8(%arg0: i32) -> (i32, i32) {
    %c0_i32 = arith.constant 0 : i32
    %c0_i32_0 = arith.constant 0 : i32
    %c0_i32_1 = arith.constant 0 : i32
    return %c0_i32, %c0_i32_0 : i32, i32
  }
  func.func @transform_9(%arg0: i32) -> (i32, i32) {
    %c0_i32 = arith.constant 0 : i32
    %c0_i32_0 = arith.constant 0 : i32
    return %arg0, %c0_i32 : i32, i32
  }
}

</mosaic_0001>

<llo_original>
// kernel: tpu_custom_call.1
$region0: #{tpu_custom_call.1}
  #allocation0 [shape = 'u32[]', space=smem, size = 0x4, offset = 0x4, fixed_abs, tag = 'smem constant byte address 0x4 - core index']
  #allocation1 [shape = 'u32[72,128]{1,0:T(1,128)}', space=vmem, size = 0x9000, scoped, tag = 'internal scratch']
  %s0 = inlined_call_operand.hbm [shape: f32[8,784], index: 0, kind: input, shape index: {}]
  %s1 = inlined_call_operand.hbm [shape: bf16[784,512], index: 1, kind: input, shape index: {}]
  %s2 = inlined_call_operand.hbm [shape: f32[1,512], index: 2, kind: input, shape index: {}]
  %s3 = inlined_call_operand.hbm [shape: bf16[512,256], index: 3, kind: input, shape index: {}]
  %s4 = inlined_call_operand.vmem [shape: f32[1,256], index: 4, kind: input, shape index: {}]
  %s5 = inlined_call_operand.hbm [shape: bf16[256,128], index: 5, kind: input, shape index: {}]
  %s6 = inlined_call_operand.vmem [shape: f32[1,128], index: 6, kind: input, shape index: {}]
  %s7 = inlined_call_operand.hbm [shape: bf16[128,128], index: 7, kind: input, shape index: {}]
  %s8 = inlined_call_operand.vmem [shape: f32[1,128], index: 8, kind: input, shape index: {}]
  %s9 = inlined_call_operand.hbm [shape: bf16[8,128], index: 9, kind: output, shape index: {}]
  %s10 = sld [smem:[#allocation0]]
  $region70: #{tpu_custom_call.1} parent=0
    _
  %s12 = ssub.s32 1, %s10
  %s13 = scalar_select 0, %s12, %s10
  $region1: #{tpu_custom_call.1} parent=0
    #allocation2 [shape = 'u8[28672]{0}', space=vmem, size = 0x7000, scoped, tag = 'input window, operand 0, single buffered']
    #allocation3 [shape = 's32[1]{0}', space=sflag, size = 0x4, scoped, tag = 'scoped memory for tpu_custom_call.1']
    #allocation4 [shape = 's32[1]{0}', space=sflag, size = 0x4, scoped, tag = 'scoped memory for tpu_custom_call.1']
    #allocation5 [shape = 'u8[802816]{0}', space=vmem, size = 0xc4000, scoped, tag = 'input window, operand 1, single buffered']
    #allocation6 [shape = 's32[1]{0}', space=sflag, size = 0x4, scoped, tag = 'scoped memory for tpu_custom_call.1']
    #allocation7 [shape = 'u8[2048]{0}', space=vmem, size = 0x800, scoped, tag = 'input window, operand 2, single buffered']
    #allocation8 [shape = 'u8[262144]{0}', space=vmem, size = 0x40000, scoped, tag = 'input window, operand 3, single buffered']
    #allocation9 [shape = 's32[1]{0}', space=sflag, size = 0x4, scoped, tag = 'scoped memory for tpu_custom_call.1']
    #allocation10 [shape = 'u8[65536]{0}', space=vmem, size = 0x10000, scoped, tag = 'input window, operand 5, single buffered']
    #allocation11 [shape = 'u8[32768]{0}', space=vmem, size = 0x8000, scoped, tag = 'input window, operand 7, single buffered']
    #allocation12 [shape = 's32[1]{0}', space=sflag, size = 0x4, scoped, tag = 'scoped memory for tpu_custom_call.1']
    #allocation13 [shape = 'u8[2048]{0}', space=vmem, size = 0x800, scoped, tag = 'output window, operand 0, single buffered']
    %14 = vsyncpa [#allocation3], 0
    %15 = vsyncpa [#allocation6], 0
    %16 = vsyncpa [#allocation9], 0
    %17 = vsyncpa [#allocation12], 0
    %18 = vsyncpa [#allocation4], 0
    // Predicated region
    $region2: #{tpu_custom_call.1} parent=1 // pred_check
      _
    $region3: #{tpu_custom_call.1} parent=1 // pred_check_branch
      %20 = sbr.rel (0) target = $region5
    $region4: #{tpu_custom_call.1} parent=1 // pred_region
      %22 = vsyncadd [#allocation3], 0
      %s24 = sshll.u32 %s0, 4
      %s25 = int_to_ptr.hbm [resolvable:$true] %s24
      %s26 = sshll.u32 [#allocation2], 4
      %s27 = int_to_ptr.vmem [resolvable:$true] %s26
      %29 = dma.hbm_to_vmem [thread:$0]  %s25, 896, %s27, [#allocation3]
    $region5: #{tpu_custom_call.1} parent=1 // pred_fallthru
      _
    // Predicated region
    $region6: #{tpu_custom_call.1} parent=1 // pred_check
      _
    $region7: #{tpu_custom_call.1} parent=1 // pred_check_branch
      %31 = sbr.rel (0) target = $region9
    $region8: #{tpu_custom_call.1} parent=1 // pred_region
      %33 = vsyncadd [#allocation6], 0
      %s34 = sshll.u32 %s1, 4
      %s35 = int_to_ptr.hbm [resolvable:$true] %s34
      %s36 = sshll.u32 [#allocation5], 4
      %s37 = int_to_ptr.vmem [resolvable:$true] %s36
      %42 = dma.hbm_to_vmem [thread:$0]  %s35, 25088, %s37, [#allocation6], 256, 256, 16
    $region9: #{tpu_custom_call.1} parent=1 // pred_fallthru
      _
    // Predicated region
    $region10: #{tpu_custom_call.1} parent=1 // pred_check
      _
    $region11: #{tpu_custom_call.1} parent=1 // pred_check_branch
      %44 = sbr.rel (0) target = $region13
    $region12: #{tpu_custom_call.1} parent=1 // pred_region
      %46 = vsyncadd [#allocation6], 0
      %s48 = sshll.u32 %s2, 4
      %s49 = int_to_ptr.hbm [resolvable:$true] %s48
      %s50 = sshll.u32 [#allocation7], 4
      %s51 = int_to_ptr.vmem [resolvable:$true] %s50
      %53 = dma.hbm_to_vmem [thread:$0]  %s49, 64, %s51, [#allocation6]
    $region13: #{tpu_custom_call.1} parent=1 // pred_fallthru
      _
    // Predicated region
    $region14: #{tpu_custom_call.1} parent=1 // pred_check
      _
    $region15: #{tpu_custom_call.1} parent=1 // pred_check_branch
      %55 = sbr.rel (0) target = $region17
    $region16: #{tpu_custom_call.1} parent=1 // pred_region
      %57 = vsyncadd [#allocation9], 0
      %s58 = sshll.u32 %s3, 4
      %s59 = int_to_ptr.hbm [resolvable:$true] %s58
      %s60 = sshll.u32 [#allocation8], 4
      %s61 = int_to_ptr.vmem [resolvable:$true] %s60
      %66 = dma.hbm_to_vmem [thread:$0]  %s59, 8192, %s61, [#allocation9], 128, 128, 8
    $region17: #{tpu_custom_call.1} parent=1 // pred_fallthru
      _
    // Predicated region
    $region18: #{tpu_custom_call.1} parent=1 // pred_check
      _
    $region19: #{tpu_custom_call.1} parent=1 // pred_check_branch
      %68 = sbr.rel (0) target = $region21
    $region20: #{tpu_custom_call.1} parent=1 // pred_region
      _
    $region21: #{tpu_custom_call.1} parent=1 // pred_fallthru
      _
    // Predicated region
    $region22: #{tpu_custom_call.1} parent=1 // pred_check
      _
    $region23: #{tpu_custom_call.1} parent=1 // pred_check_branch
      %70 = sbr.rel (0) target = $region25
    $region24: #{tpu_custom_call.1} parent=1 // pred_region
      %72 = vsyncadd [#allocation9], 0
      %s73 = sshll.u32 %s5, 4
      %s74 = int_to_ptr.hbm [resolvable:$true] %s73
      %s75 = sshll.u32 [#allocation10], 4
      %s76 = int_to_ptr.vmem [resolvable:$true] %s75
      %81 = dma.hbm_to_vmem [thread:$0]  %s74, 2048, %s76, [#allocation9], 64, 64, 4
    $region25: #{tpu_custom_call.1} parent=1 // pred_fallthru
      _
    // Predicated region
    $region26: #{tpu_custom_call.1} parent=1 // pred_check
      _
    $region27: #{tpu_custom_call.1} parent=1 // pred_check_branch
      %83 = sbr.rel (0) target = $region29
    $region28: #{tpu_custom_call.1} parent=1 // pred_region
      _
    $region29: #{tpu_custom_call.1} parent=1 // pred_fallthru
      _
    // Predicated region
    $region30: #{tpu_custom_call.1} parent=1 // pred_check
      _
    $region31: #{tpu_custom_call.1} parent=1 // pred_check_branch
      %85 = sbr.rel (0) target = $region33
    $region32: #{tpu_custom_call.1} parent=1 // pred_region
      %87 = vsyncadd [#allocation12], 0
      %s88 = sshll.u32 %s7, 4
      %s89 = int_to_ptr.hbm [resolvable:$true] %s88
      %s90 = sshll.u32 [#allocation11], 4
      %s91 = int_to_ptr.vmem [resolvable:$true] %s90
      %96 = dma.hbm_to_vmem [thread:$0]  %s89, 1024, %s91, [#allocation12], 64, 64, 4
    $region33: #{tpu_custom_call.1} parent=1 // pred_fallthru
      _
    // Predicated region
    $region34: #{tpu_custom_call.1} parent=1 // pred_check
      _
    $region35: #{tpu_custom_call.1} parent=1 // pred_check_branch
      %98 = sbr.rel (0) target = $region37
    $region36: #{tpu_custom_call.1} parent=1 // pred_region
      _
    $region37: #{tpu_custom_call.1} parent=1 // pred_fallthru
      _
    // Predicated region
    $region38: #{tpu_custom_call.1} parent=1 // pred_check
      _
    $region39: #{tpu_custom_call.1} parent=1 // pred_check_branch
      %100 = sbr.rel (0) target = $region41
    $region40: #{tpu_custom_call.1} parent=1 // pred_region
      %102 = dma.done [#allocation3], 896
    $region41: #{tpu_custom_call.1} parent=1 // pred_fallthru
      _
    // Predicated region
    $region42: #{tpu_custom_call.1} parent=1 // pred_check
      _
    $region43: #{tpu_custom_call.1} parent=1 // pred_check_branch
      %104 = sbr.rel (0) target = $region45
    $region44: #{tpu_custom_call.1} parent=1 // pred_region
      %106 = dma.done [#allocation6], 25088
    $region45: #{tpu_custom_call.1} parent=1 // pred_fallthru
      _
    // Predicated region
    $region46: #{tpu_custom_call.1} parent=1 // pred_check
      _
    $region47: #{tpu_custom_call.1} parent=1 // pred_check_branch
      %108 = sbr.rel (0) target = $region49
    $region48: #{tpu_custom_call.1} parent=1 // pred_region
      %110 = dma.done [#allocation6], 64
    $region49: #{tpu_custom_call.1} parent=1 // pred_fallthru
      _
    // Predicated region
    $region50: #{tpu_custom_call.1} parent=1 // pred_check
      _
    $region51: #{tpu_custom_call.1} parent=1 // pred_check_branch
      %112 = sbr.rel (0) target = $region53
    $region52: #{tpu_custom_call.1} parent=1 // pred_region
      %114 = dma.done [#allocation9], 8192
    $region53: #{tpu_custom_call.1} parent=1 // pred_fallthru
      _
    // Predicated region
    $region54: #{tpu_custom_call.1} parent=1 // pred_check
      _
    $region55: #{tpu_custom_call.1} parent=1 // pred_check_branch
      %116 = sbr.rel (0) target = $region57
    $region56: #{tpu_custom_call.1} parent=1 // pred_region
      %118 = dma.done [#allocation9], 2048
    $region57: #{tpu_custom_call.1} parent=1 // pred_fallthru
      _
    // Predicated region
    $region58: #{tpu_custom_call.1} parent=1 // pred_check
      _
    $region59: #{tpu_custom_call.1} parent=1 // pred_check_branch
      %120 = sbr.rel (0) target = $region61
    $region60: #{tpu_custom_call.1} parent=1 // pred_region
      %122 = dma.done [#allocation12], 1024
    $region61: #{tpu_custom_call.1} parent=1 // pred_fallthru
      _
    %v124 = vld [vmem:[#allocation2] sm:$0xff]
    %v125 = vld [vmem:[#allocation2 + $0x8] sm:$0xff]
    %v126 = vld [vmem:[#allocation2 + $0x10] sm:$0xff]
    %v127 = vld [vmem:[#allocation2 + $0x18] sm:$0xff]
    %v128 = vld [vmem:[#allocation2 + $0x20] sm:$0xff]
    %v129 = vld [vmem:[#allocation2 + $0x28] sm:$0xff]
    %v130 = vld [vmem:[#allocation2 + $0x30] sm:$0xff]
    %v131 = vpack.c.bf16 %v124, %v124
    %v132 = vpack.c.bf16 %v125, %v125
    %v133 = vpack.c.bf16 %v126, %v126
    %v134 = vpack.c.bf16 %v127, %v127
    %v135 = vpack.c.bf16 %v128, %v128
    %v136 = vpack.c.bf16 %v129, %v129
    %v137 = vpack.c.bf16 %v130, %v130
    %v138 = vld [vmem:[#allocation5] sm:$0xff]
    %v139 = vld [vmem:[#allocation5 + $0x8] sm:$0xff]
    %v140 = vld [vmem:[#allocation5 + $0x10] sm:$0xff]
    %v141 = vld [vmem:[#allocation5 + $0x18] sm:$0xff]
    %v142 = vld [vmem:[#allocation5 + $0x20] sm:$0xff]
    %v143 = vld [vmem:[#allocation5 + $0x28] sm:$0xff]
    %v144 = vld [vmem:[#allocation5 + $0x30] sm:$0xff]
    %v145 = vld [vmem:[#allocation5 + $0x38] sm:$0xff]
    %v146 = vld [vmem:[#allocation5 + $0x40] sm:$0xff]
    %v147 = vld [vmem:[#allocation5 + $0x48] sm:$0xff]
    %v148 = vld [vmem:[#allocation5 + $0x50] sm:$0xff]
    %v149 = vld [vmem:[#allocation5 + $0x58] sm:$0xff]
    %v150 = vld [vmem:[#allocation5 + $0x60] sm:$0xff]
    %v151 = vld [vmem:[#allocation5 + $0x68] sm:$0xff]
    %v152 = vld [vmem:[#allocation5 + $0x70] sm:$0xff]
    %v153 = vld [vmem:[#allocation5 + $0x78] sm:$0xff]
    %v154 = vld [vmem:[#allocation5 + $0x80] sm:$0xff]
    %v155 = vld [vmem:[#allocation5 + $0x88] sm:$0xff]
    %v156 = vld [vmem:[#allocation5 + $0x90] sm:$0xff]
    %v157 = vld [vmem:[#allocation5 + $0x98] sm:$0xff]
    %v158 = vld [vmem:[#allocation5 + $0xa0] sm:$0xff]
    %v159 = vld [vmem:[#allocation5 + $0xa8] sm:$0xff]
    %v160 = vld [vmem:[#allocation5 + $0xb0] sm:$0xff]
    %v161 = vld [vmem:[#allocation5 + $0xb8] sm:$0xff]
    %v162 = vld [vmem:[#allocation5 + $0xc0] sm:$0xff]
    %v163 = vld [vmem:[#allocation5 + $0xc8] sm:$0xff]
    %v164 = vld [vmem:[#allocation5 + $0xd0] sm:$0xff]
    %v165 = vld [vmem:[#allocation5 + $0xd8] sm:$0xff]
    %v166 = vld [vmem:[#allocation5 + $0xe0] sm:$0xff]
    %v167 = vld [vmem:[#allocation5 + $0xe8] sm:$0xff]
    %v168 = vld [vmem:[#allocation5 + $0xf0] sm:$0xff]
    %v169 = vld [vmem:[#allocation5 + $0xf8] sm:$0xff]
    %v170 = vld [vmem:[#allocation5 + $0x100] sm:$0xff]
    %v171 = vld [vmem:[#allocation5 + $0x108] sm:$0xff]
    %v172 = vld [vmem:[#allocation5 + $0x110] sm:$0xff]
    %v173 = vld [vmem:[#allocation5 + $0x118] sm:$0xff]
    %v174 = vld [vmem:[#allocation5 + $0x120] sm:$0xff]
    %v175 = vld [vmem:[#allocation5 + $0x128] sm:$0xff]
    %v176 = vld [vmem:[#allocation5 + $0x130] sm:$0xff]
    %v177 = vld [vmem:[#allocation5 + $0x138] sm:$0xff]
    %v178 = vld [vmem:[#allocation5 + $0x140] sm:$0xff]
    %v179 = vld [vmem:[#allocation5 + $0x148] sm:$0xff]
    %v180 = vld [vmem:[#allocation5 + $0x150] sm:$0xff]
    %v181 = vld [vmem:[#allocation5 + $0x158] sm:$0xff]
    %v182 = vld [vmem:[#allocation5 + $0x160] sm:$0xff]
    %v183 = vld [vmem:[#allocation5 + $0x168] sm:$0xff]
    %v184 = vld [vmem:[#allocation5 + $0x170] sm:$0xff]
    %v185 = vld [vmem:[#allocation5 + $0x178] sm:$0xff]
    %v186 = vld [vmem:[#allocation5 + $0x180] sm:$0xff]
    %v187 = vld [vmem:[#allocation5 + $0x188] sm:$0xff]
    %v188 = vld [vmem:[#allocation5 + $0x190] sm:$0xff]
    %v189 = vld [vmem:[#allocation5 + $0x198] sm:$0xff]
    %v190 = vld [vmem:[#allocation5 + $0x1a0] sm:$0xff]
    %v191 = vld [vmem:[#allocation5 + $0x1a8] sm:$0xff]
    %v192 = vld [vmem:[#allocation5 + $0x1b0] sm:$0xff]
    %v193 = vld [vmem:[#allocation5 + $0x1b8] sm:$0xff]
    %v194 = vld [vmem:[#allocation5 + $0x1c0] sm:$0xff]
    %v195 = vld [vmem:[#allocation5 + $0x1c8] sm:$0xff]
    %v196 = vld [vmem:[#allocation5 + $0x1d0] sm:$0xff]
    %v197 = vld [vmem:[#allocation5 + $0x1d8] sm:$0xff]
    %v198 = vld [vmem:[#allocation5 + $0x1e0] sm:$0xff]
    %v199 = vld [vmem:[#allocation5 + $0x1e8] sm:$0xff]
    %v200 = vld [vmem:[#allocation5 + $0x1f0] sm:$0xff]
    %v201 = vld [vmem:[#allocation5 + $0x1f8] sm:$0xff]
    %v202 = vld [vmem:[#allocation5 + $0x200] sm:$0xff]
    %v203 = vld [vmem:[#allocation5 + $0x208] sm:$0xff]
    %v204 = vld [vmem:[#allocation5 + $0x210] sm:$0xff]
    %v205 = vld [vmem:[#allocation5 + $0x218] sm:$0xff]
    %v206 = vld [vmem:[#allocation5 + $0x220] sm:$0xff]
    %v207 = vld [vmem:[#allocation5 + $0x228] sm:$0xff]
    %v208 = vld [vmem:[#allocation5 + $0x230] sm:$0xff]
    %v209 = vld [vmem:[#allocation5 + $0x238] sm:$0xff]
    %v210 = vld [vmem:[#allocation5 + $0x240] sm:$0xff]
    %v211 = vld [vmem:[#allocation5 + $0x248] sm:$0xff]
    %v212 = vld [vmem:[#allocation5 + $0x250] sm:$0xff]
    %v213 = vld [vmem:[#allocation5 + $0x258] sm:$0xff]
    %v214 = vld [vmem:[#allocation5 + $0x260] sm:$0xff]
    %v215 = vld [vmem:[#allocation5 + $0x268] sm:$0xff]
    %v216 = vld [vmem:[#allocation5 + $0x270] sm:$0xff]
    %v217 = vld [vmem:[#allocation5 + $0x278] sm:$0xff]
    %v218 = vld [vmem:[#allocation5 + $0x280] sm:$0xff]
    %v219 = vld [vmem:[#allocation5 + $0x288] sm:$0xff]
    %v220 = vld [vmem:[#allocation5 + $0x290] sm:$0xff]
    %v221 = vld [vmem:[#allocation5 + $0x298] sm:$0xff]
    %v222 = vld [vmem:[#allocation5 + $0x2a0] sm:$0xff]
    %v223 = vld [vmem:[#allocation5 + $0x2a8] sm:$0xff]
    %v224 = vld [vmem:[#allocation5 + $0x2b0] sm:$0xff]
    %v225 = vld [vmem:[#allocation5 + $0x2b8] sm:$0xff]
    %v226 = vld [vmem:[#allocation5 + $0x2c0] sm:$0xff]
    %v227 = vld [vmem:[#allocation5 + $0x2c8] sm:$0xff]
    %v228 = vld [vmem:[#allocation5 + $0x2d0] sm:$0xff]
    %v229 = vld [vmem:[#allocation5 + $0x2d8] sm:$0xff]
    %v230 = vld [vmem:[#allocation5 + $0x2e0] sm:$0xff]
    %v231 = vld [vmem:[#allocation5 + $0x2e8] sm:$0xff]
    %v232 = vld [vmem:[#allocation5 + $0x2f0] sm:$0xff]
    %v233 = vld [vmem:[#allocation5 + $0x2f8] sm:$0xff]
    %v234 = vld [vmem:[#allocation5 + $0x300] sm:$0xff]
    %v235 = vld [vmem:[#allocation5 + $0x308] sm:$0xff]
    %v236 = vld [vmem:[#allocation5 + $0x310] sm:$0xff]
    %v237 = vld [vmem:[#allocation5 + $0x318] sm:$0xff]
    %v238 = vld [vmem:[#allocation5 + $0x320] sm:$0xff]
    %v239 = vld [vmem:[#allocation5 + $0x328] sm:$0xff]
    %v240 = vld [vmem:[#allocation5 + $0x330] sm:$0xff]
    %v241 = vld [vmem:[#allocation5 + $0x338] sm:$0xff]
    %v242 = vld [vmem:[#allocation5 + $0x340] sm:$0xff]
    %v243 = vld [vmem:[#allocation5 + $0x348] sm:$0xff]
    %v244 = vld [vmem:[#allocation5 + $0x350] sm:$0xff]
    %v245 = vld [vmem:[#allocation5 + $0x358] sm:$0xff]
    %v246 = vld [vmem:[#allocation5 + $0x360] sm:$0xff]
    %v247 = vld [vmem:[#allocation5 + $0x368] sm:$0xff]
    %v248 = vld [vmem:[#allocation5 + $0x370] sm:$0xff]
    %v249 = vld [vmem:[#allocation5 + $0x378] sm:$0xff]
    %v250 = vld [vmem:[#allocation5 + $0x380] sm:$0xff]
    %v251 = vld [vmem:[#allocation5 + $0x388] sm:$0xff]
    %v252 = vld [vmem:[#allocation5 + $0x390] sm:$0xff]
    %v253 = vld [vmem:[#allocation5 + $0x398] sm:$0xff]
    %v254 = vld [vmem:[#allocation5 + $0x3a0] sm:$0xff]
    %v255 = vld [vmem:[#allocation5 + $0x3a8] sm:$0xff]
    %v256 = vld [vmem:[#allocation5 + $0x3b0] sm:$0xff]
    %v257 = vld [vmem:[#allocation5 + $0x3b8] sm:$0xff]
    %v258 = vld [vmem:[#allocation5 + $0x3c0] sm:$0xff]
    %v259 = vld [vmem:[#allocation5 + $0x3c8] sm:$0xff]
    %v260 = vld [vmem:[#allocation5 + $0x3d0] sm:$0xff]
    %v261 = vld [vmem:[#allocation5 + $0x3d8] sm:$0xff]
    %v262 = vld [vmem:[#allocation5 + $0x3e0] sm:$0xff]
    %v263 = vld [vmem:[#allocation5 + $0x3e8] sm:$0xff]
    %v264 = vld [vmem:[#allocation5 + $0x3f0] sm:$0xff]
    %v265 = vld [vmem:[#allocation5 + $0x3f8] sm:$0xff]
    %v266 = vld [vmem:[#allocation5 + $0x400] sm:$0xff]
    %v267 = vld [vmem:[#allocation5 + $0x408] sm:$0xff]
    %v268 = vld [vmem:[#allocation5 + $0x410] sm:$0xff]
    %v269 = vld [vmem:[#allocation5 + $0x418] sm:$0xff]
    %v270 = vld [vmem:[#allocation5 + $0x420] sm:$0xff]
    %v271 = vld [vmem:[#allocation5 + $0x428] sm:$0xff]
    %v272 = vld [vmem:[#allocation5 + $0x430] sm:$0xff]
    %v273 = vld [vmem:[#allocation5 + $0x438] sm:$0xff]
    %v274 = vld [vmem:[#allocation5 + $0x440] sm:$0xff]
    %v275 = vld [vmem:[#allocation5 + $0x448] sm:$0xff]
    %v276 = vld [vmem:[#allocation5 + $0x450] sm:$0xff]
    %v277 = vld [vmem:[#allocation5 + $0x458] sm:$0xff]
    %v278 = vld [vmem:[#allocation5 + $0x460] sm:$0xff]
    %v279 = vld [vmem:[#allocation5 + $0x468] sm:$0xff]
    %v280 = vld [vmem:[#allocation5 + $0x470] sm:$0xff]
    %v281 = vld [vmem:[#allocation5 + $0x478] sm:$0xff]
    %v282 = vld [vmem:[#allocation5 + $0x480] sm:$0xff]
    %v283 = vld [vmem:[#allocation5 + $0x488] sm:$0xff]
    %v284 = vld [vmem:[#allocation5 + $0x490] sm:$0xff]
    %v285 = vld [vmem:[#allocation5 + $0x498] sm:$0xff]
    %v286 = vld [vmem:[#allocation5 + $0x4a0] sm:$0xff]
    %v287 = vld [vmem:[#allocation5 + $0x4a8] sm:$0xff]
    %v288 = vld [vmem:[#allocation5 + $0x4b0] sm:$0xff]
    %v289 = vld [vmem:[#allocation5 + $0x4b8] sm:$0xff]
    %v290 = vld [vmem:[#allocation5 + $0x4c0] sm:$0xff]
    %v291 = vld [vmem:[#allocation5 + $0x4c8] sm:$0xff]
    %v292 = vld [vmem:[#allocation5 + $0x4d0] sm:$0xff]
    %v293 = vld [vmem:[#allocation5 + $0x4d8] sm:$0xff]
    %v294 = vld [vmem:[#allocation5 + $0x4e0] sm:$0xff]
    %v295 = vld [vmem:[#allocation5 + $0x4e8] sm:$0xff]
    %v296 = vld [vmem:[#allocation5 + $0x4f0] sm:$0xff]
    %v297 = vld [vmem:[#allocation5 + $0x4f8] sm:$0xff]
    %v298 = vld [vmem:[#allocation5 + $0x500] sm:$0xff]
    %v299 = vld [vmem:[#allocation5 + $0x508] sm:$0xff]
    %v300 = vld [vmem:[#allocation5 + $0x510] sm:$0xff]
    %v301 = vld [vmem:[#allocation5 + $0x518] sm:$0xff]
    %v302 = vld [vmem:[#allocation5 + $0x520] sm:$0xff]
    %v303 = vld [vmem:[#allocation5 + $0x528] sm:$0xff]
    %v304 = vld [vmem:[#allocation5 + $0x530] sm:$0xff]
    %v305 = vld [vmem:[#allocation5 + $0x538] sm:$0xff]
    %v306 = vld [vmem:[#allocation5 + $0x540] sm:$0xff]
    %v307 = vld [vmem:[#allocation5 + $0x548] sm:$0xff]
    %v308 = vld [vmem:[#allocation5 + $0x550] sm:$0xff]
    %v309 = vld [vmem:[#allocation5 + $0x558] sm:$0xff]
    %v310 = vld [vmem:[#allocation5 + $0x560] sm:$0xff]
    %v311 = vld [vmem:[#allocation5 + $0x568] sm:$0xff]
    %v312 = vld [vmem:[#allocation5 + $0x570] sm:$0xff]
    %v313 = vld [vmem:[#allocation5 + $0x578] sm:$0xff]
    %v314 = vld [vmem:[#allocation5 + $0x580] sm:$0xff]
    %v315 = vld [vmem:[#allocation5 + $0x588] sm:$0xff]
    %v316 = vld [vmem:[#allocation5 + $0x590] sm:$0xff]
    %v317 = vld [vmem:[#allocation5 + $0x598] sm:$0xff]
    %v318 = vld [vmem:[#allocation5 + $0x5a0] sm:$0xff]
    %v319 = vld [vmem:[#allocation5 + $0x5a8] sm:$0xff]
    %v320 = vld [vmem:[#allocation5 + $0x5b0] sm:$0xff]
    %v321 = vld [vmem:[#allocation5 + $0x5b8] sm:$0xff]
    %v322 = vld [vmem:[#allocation5 + $0x5c0] sm:$0xff]
    %v323 = vld [vmem:[#allocation5 + $0x5c8] sm:$0xff]
    %v324 = vld [vmem:[#allocation5 + $0x5d0] sm:$0xff]
    %v325 = vld [vmem:[#allocation5 + $0x5d8] sm:$0xff]
    %v326 = vld [vmem:[#allocation5 + $0x5e0] sm:$0xff]
    %v327 = vld [vmem:[#allocation5 + $0x5e8] sm:$0xff]
    %v328 = vld [vmem:[#allocation5 + $0x5f0] sm:$0xff]
    %v329 = vld [vmem:[#allocation5 + $0x5f8] sm:$0xff]
    %v330 = vld [vmem:[#allocation5 + $0x600] sm:$0xff]
    %v331 = vld [vmem:[#allocation5 + $0x608] sm:$0xff]
    %v332 = vld [vmem:[#allocation5 + $0x610] sm:$0xff]
    %v333 = vld [vmem:[#allocation5 + $0x618] sm:$0xff]
    %v334 = vld [vmem:[#allocation7] sm:$0xf]
    %v336 = vperm.slane %v334, 0
    %v337 = vperm.slane %v334, 1
    %v338 = vperm.slane %v334, 2
    %v339 = vperm.slane %v334, 3
    %v540 = vunpack.c.l.b16 %v138
    %v541 = vunpack.c.h.b16 %v138
    %v542 = vunpack.c.l.b16 %v139
    %v543 = vunpack.c.h.b16 %v139
    %v544 = vunpack.c.l.b16 %v140
    %v545 = vunpack.c.h.b16 %v140
    %v546 = vunpack.c.l.b16 %v141
    %v547 = vunpack.c.h.b16 %v141
    %v548 = vunpack.c.l.b16 %v142
    %v549 = vunpack.c.h.b16 %v142
    %v550 = vunpack.c.l.b16 %v143
    %v551 = vunpack.c.h.b16 %v143
    %v552 = vunpack.c.l.b16 %v144
    %v553 = vunpack.c.h.b16 %v144
    %v554 = vunpack.c.l.b16 %v145
    %v555 = vunpack.c.h.b16 %v145
    %v556 = vunpack.c.l.b16 %v146
    %v557 = vunpack.c.h.b16 %v146
    %v558 = vunpack.c.l.b16 %v147
    %v559 = vunpack.c.h.b16 %v147
    %v560 = vunpack.c.l.b16 %v148
    %v561 = vunpack.c.h.b16 %v148
    %v562 = vunpack.c.l.b16 %v149
    %v563 = vunpack.c.h.b16 %v149
    %v564 = vunpack.c.l.b16 %v150
    %v565 = vunpack.c.h.b16 %v150
    %v566 = vunpack.c.l.b16 %v151
    %v567 = vunpack.c.h.b16 %v151
    %v568 = vunpack.c.l.b16 %v152
    %v569 = vunpack.c.h.b16 %v152
    %v570 = vunpack.c.l.b16 %v153
    %v571 = vunpack.c.h.b16 %v153
    %v572 = vunpack.c.l.b16 %v154
    %v573 = vunpack.c.h.b16 %v154
    %v574 = vunpack.c.l.b16 %v155
    %v575 = vunpack.c.h.b16 %v155
    %v576 = vunpack.c.l.b16 %v156
    %v577 = vunpack.c.h.b16 %v156
    %v578 = vunpack.c.l.b16 %v157
    %v579 = vunpack.c.h.b16 %v157
    %v580 = vunpack.c.l.b16 %v158
    %v581 = vunpack.c.h.b16 %v158
    %v582 = vunpack.c.l.b16 %v159
    %v583 = vunpack.c.h.b16 %v159
    %v584 = vunpack.c.l.b16 %v160
    %v585 = vunpack.c.h.b16 %v160
    %v586 = vunpack.c.l.b16 %v161
    %v587 = vunpack.c.h.b16 %v161
    %v588 = vunpack.c.l.b16 %v162
    %v589 = vunpack.c.h.b16 %v162
    %v590 = vunpack.c.l.b16 %v163
    %v591 = vunpack.c.h.b16 %v163
    %v592 = vunpack.c.l.b16 %v164
    %v593 = vunpack.c.h.b16 %v164
    %v594 = vunpack.c.l.b16 %v165
    %v595 = vunpack.c.h.b16 %v165
    %v596 = vunpack.c.l.b16 %v166
    %v597 = vunpack.c.h.b16 %v166
    %v598 = vunpack.c.l.b16 %v167
    %v599 = vunpack.c.h.b16 %v167
    %v600 = vunpack.c.l.b16 %v168
    %v601 = vunpack.c.h.b16 %v168
    %v602 = vunpack.c.l.b16 %v169
    %v603 = vunpack.c.h.b16 %v169
    %v604 = vunpack.c.l.b16 %v170
    %v605 = vunpack.c.h.b16 %v170
    %v606 = vunpack.c.l.b16 %v171
    %v607 = vunpack.c.h.b16 %v171
    %v608 = vunpack.c.l.b16 %v172
    %v609 = vunpack.c.h.b16 %v172
    %v610 = vunpack.c.l.b16 %v173
    %v611 = vunpack.c.h.b16 %v173
    %v612 = vunpack.c.l.b16 %v174
    %v613 = vunpack.c.h.b16 %v174
    %v614 = vunpack.c.l.b16 %v175
    %v615 = vunpack.c.h.b16 %v175
    %v616 = vunpack.c.l.b16 %v176
    %v617 = vunpack.c.h.b16 %v176
    %v618 = vunpack.c.l.b16 %v177
    %v619 = vunpack.c.h.b16 %v177
    %v620 = vunpack.c.l.b16 %v178
    %v621 = vunpack.c.h.b16 %v178
    %v622 = vunpack.c.l.b16 %v179
    %v623 = vunpack.c.h.b16 %v179
    %v624 = vunpack.c.l.b16 %v180
    %v625 = vunpack.c.h.b16 %v180
    %v626 = vunpack.c.l.b16 %v181
    %v627 = vunpack.c.h.b16 %v181
    %v628 = vunpack.c.l.b16 %v182
    %v629 = vunpack.c.h.b16 %v182
    %v630 = vunpack.c.l.b16 %v183
    %v631 = vunpack.c.h.b16 %v183
    %v632 = vunpack.c.l.b16 %v184
    %v633 = vunpack.c.h.b16 %v184
    %v634 = vunpack.c.l.b16 %v185
    %v635 = vunpack.c.h.b16 %v185
    %v636 = vunpack.c.l.b16 %v186
    %v637 = vunpack.c.h.b16 %v186
    %v638 = vunpack.c.l.b16 %v187
    %v639 = vunpack.c.h.b16 %v187
    %v640 = vunpack.c.l.b16 %v188
    %v641 = vunpack.c.h.b16 %v188
    %v642 = vunpack.c.l.b16 %v189
    %v643 = vunpack.c.h.b16 %v189
    %v644 = vunpack.c.l.b16 %v190
    %v645 = vunpack.c.h.b16 %v190
    %v646 = vunpack.c.l.b16 %v191
    %v647 = vunpack.c.h.b16 %v191
    %v648 = vunpack.c.l.b16 %v192
    %v649 = vunpack.c.h.b16 %v192
    %v650 = vunpack.c.l.b16 %v193
    %v651 = vunpack.c.h.b16 %v193
    %v652 = vunpack.c.l.b16 %v194
    %v653 = vunpack.c.h.b16 %v194
    %v654 = vunpack.c.l.b16 %v195
    %v655 = vunpack.c.h.b16 %v195
    %v656 = vunpack.c.l.b16 %v196
    %v657 = vunpack.c.h.b16 %v196
    %v658 = vunpack.c.l.b16 %v197
    %v659 = vunpack.c.h.b16 %v197
    %v660 = vunpack.c.l.b16 %v198
    %v661 = vunpack.c.h.b16 %v198
    %v662 = vunpack.c.l.b16 %v199
    %v663 = vunpack.c.h.b16 %v199
    %v664 = vunpack.c.l.b16 %v200
    %v665 = vunpack.c.h.b16 %v200
    %v666 = vunpack.c.l.b16 %v201
    %v667 = vunpack.c.h.b16 %v201
    %v668 = vunpack.c.l.b16 %v202
    %v669 = vunpack.c.h.b16 %v202
    %v670 = vunpack.c.l.b16 %v203
    %v671 = vunpack.c.h.b16 %v203
    %v672 = vunpack.c.l.b16 %v204
    %v673 = vunpack.c.h.b16 %v204
    %v674 = vunpack.c.l.b16 %v205
    %v675 = vunpack.c.h.b16 %v205
    %v676 = vunpack.c.l.b16 %v206
    %v677 = vunpack.c.h.b16 %v206
    %v678 = vunpack.c.l.b16 %v207
    %v679 = vunpack.c.h.b16 %v207
    %v680 = vunpack.c.l.b16 %v208
    %v681 = vunpack.c.h.b16 %v208
    %v682 = vunpack.c.l.b16 %v209
    %v683 = vunpack.c.h.b16 %v209
    %v684 = vunpack.c.l.b16 %v210
    %v685 = vunpack.c.h.b16 %v210
    %v686 = vunpack.c.l.b16 %v211
    %v687 = vunpack.c.h.b16 %v211
    %v688 = vunpack.c.l.b16 %v212
    %v689 = vunpack.c.h.b16 %v212
    %v690 = vunpack.c.l.b16 %v213
    %v691 = vunpack.c.h.b16 %v213
    %v692 = vunpack.c.l.b16 %v214
    %v693 = vunpack.c.h.b16 %v214
    %v694 = vunpack.c.l.b16 %v215
    %v695 = vunpack.c.h.b16 %v215
    %v696 = vunpack.c.l.b16 %v216
    %v697 = vunpack.c.h.b16 %v216
    %v698 = vunpack.c.l.b16 %v217
    %v699 = vunpack.c.h.b16 %v217
    %v700 = vunpack.c.l.b16 %v218
    %v701 = vunpack.c.h.b16 %v218
    %v702 = vunpack.c.l.b16 %v219
    %v703 = vunpack.c.h.b16 %v219
    %v704 = vunpack.c.l.b16 %v220
    %v705 = vunpack.c.h.b16 %v220
    %v706 = vunpack.c.l.b16 %v221
    %v707 = vunpack.c.h.b16 %v221
    %v708 = vunpack.c.l.b16 %v222
    %v709 = vunpack.c.h.b16 %v222
    %v710 = vunpack.c.l.b16 %v223
    %v711 = vunpack.c.h.b16 %v223
    %v712 = vunpack.c.l.b16 %v224
    %v713 = vunpack.c.h.b16 %v224
    %v714 = vunpack.c.l.b16 %v225
    %v715 = vunpack.c.h.b16 %v225
    %v716 = vunpack.c.l.b16 %v226
    %v717 = vunpack.c.h.b16 %v226
    %v718 = vunpack.c.l.b16 %v227
    %v719 = vunpack.c.h.b16 %v227
    %v720 = vunpack.c.l.b16 %v228
    %v721 = vunpack.c.h.b16 %v228
    %v722 = vunpack.c.l.b16 %v229
    %v723 = vunpack.c.h.b16 %v229
    %v724 = vunpack.c.l.b16 %v230
    %v725 = vunpack.c.h.b16 %v230
    %v726 = vunpack.c.l.b16 %v231
    %v727 = vunpack.c.h.b16 %v231
    %v728 = vunpack.c.l.b16 %v232
    %v729 = vunpack.c.h.b16 %v232
    %v730 = vunpack.c.l.b16 %v233
    %v731 = vunpack.c.h.b16 %v233
    %v732 = vunpack.c.l.b16 %v234
    %v733 = vunpack.c.h.b16 %v234
    %v734 = vunpack.c.l.b16 %v235
    %v735 = vunpack.c.h.b16 %v235
    %v736 = vunpack.c.l.b16 %v236
    %v737 = vunpack.c.h.b16 %v236
    %v738 = vunpack.c.l.b16 %v237
    %v739 = vunpack.c.h.b16 %v237
    %v740 = vunpack.c.l.b16 %v238
    %v741 = vunpack.c.h.b16 %v238
    %v742 = vunpack.c.l.b16 %v239
    %v743 = vunpack.c.h.b16 %v239
    %v744 = vunpack.c.l.b16 %v240
    %v745 = vunpack.c.h.b16 %v240
    %v746 = vunpack.c.l.b16 %v241
    %v747 = vunpack.c.h.b16 %v241
    %v748 = vunpack.c.l.b16 %v242
    %v749 = vunpack.c.h.b16 %v242
    %v750 = vunpack.c.l.b16 %v243
    %v751 = vunpack.c.h.b16 %v243
    %v752 = vunpack.c.l.b16 %v244
    %v753 = vunpack.c.h.b16 %v244
    %v754 = vunpack.c.l.b16 %v245
    %v755 = vunpack.c.h.b16 %v245
    %v756 = vunpack.c.l.b16 %v246
    %v757 = vunpack.c.h.b16 %v246
    %v758 = vunpack.c.l.b16 %v247
    %v759 = vunpack.c.h.b16 %v247
    %v760 = vunpack.c.l.b16 %v248
    %v761 = vunpack.c.h.b16 %v248
    %v762 = vunpack.c.l.b16 %v249
    %v763 = vunpack.c.h.b16 %v249
    %v764 = vunpack.c.l.b16 %v250
    %v765 = vunpack.c.h.b16 %v250
    %v766 = vunpack.c.l.b16 %v251
    %v767 = vunpack.c.h.b16 %v251
    %v768 = vunpack.c.l.b16 %v252
    %v769 = vunpack.c.h.b16 %v252
    %v770 = vunpack.c.l.b16 %v253
    %v771 = vunpack.c.h.b16 %v253
    %v772 = vunpack.c.l.b16 %v254
    %v773 = vunpack.c.h.b16 %v254
    %v774 = vunpack.c.l.b16 %v255
    %v775 = vunpack.c.h.b16 %v255
    %v776 = vunpack.c.l.b16 %v256
    %v777 = vunpack.c.h.b16 %v256
    %v778 = vunpack.c.l.b16 %v257
    %v779 = vunpack.c.h.b16 %v257
    %v780 = vunpack.c.l.b16 %v258
    %v781 = vunpack.c.h.b16 %v258
    %v782 = vunpack.c.l.b16 %v259
    %v783 = vunpack.c.h.b16 %v259
    %v784 = vunpack.c.l.b16 %v260
    %v785 = vunpack.c.h.b16 %v260
    %v786 = vunpack.c.l.b16 %v261
    %v787 = vunpack.c.h.b16 %v261
    %v788 = vunpack.c.l.b16 %v262
    %v789 = vunpack.c.h.b16 %v262
    %v790 = vunpack.c.l.b16 %v263
    %v791 = vunpack.c.h.b16 %v263
    %v792 = vunpack.c.l.b16 %v264
    %v793 = vunpack.c.h.b16 %v264
    %v794 = vunpack.c.l.b16 %v265
    %v795 = vunpack.c.h.b16 %v265
    %v796 = vunpack.c.l.b16 %v266
    %v797 = vunpack.c.h.b16 %v266
    %v798 = vunpack.c.l.b16 %v267
    %v799 = vunpack.c.h.b16 %v267
    %v800 = vunpack.c.l.b16 %v268
    %v801 = vunpack.c.h.b16 %v268
    %v802 = vunpack.c.l.b16 %v269
    %v803 = vunpack.c.h.b16 %v269
    %v804 = vunpack.c.l.b16 %v270
    %v805 = vunpack.c.h.b16 %v270
    %v806 = vunpack.c.l.b16 %v271
    %v807 = vunpack.c.h.b16 %v271
    %v808 = vunpack.c.l.b16 %v272
    %v809 = vunpack.c.h.b16 %v272
    %v810 = vunpack.c.l.b16 %v273
    %v811 = vunpack.c.h.b16 %v273
    %v812 = vunpack.c.l.b16 %v274
    %v813 = vunpack.c.h.b16 %v274
    %v814 = vunpack.c.l.b16 %v275
    %v815 = vunpack.c.h.b16 %v275
    %v816 = vunpack.c.l.b16 %v276
    %v817 = vunpack.c.h.b16 %v276
    %v818 = vunpack.c.l.b16 %v277
    %v819 = vunpack.c.h.b16 %v277
    %v820 = vunpack.c.l.b16 %v278
    %v821 = vunpack.c.h.b16 %v278
    %v822 = vunpack.c.l.b16 %v279
    %v823 = vunpack.c.h.b16 %v279
    %v824 = vunpack.c.l.b16 %v280
    %v825 = vunpack.c.h.b16 %v280
    %v826 = vunpack.c.l.b16 %v281
    %v827 = vunpack.c.h.b16 %v281
    %v828 = vunpack.c.l.b16 %v282
    %v829 = vunpack.c.h.b16 %v282
    %v830 = vunpack.c.l.b16 %v283
    %v831 = vunpack.c.h.b16 %v283
    %v832 = vunpack.c.l.b16 %v284
    %v833 = vunpack.c.h.b16 %v284
    %v834 = vunpack.c.l.b16 %v285
    %v835 = vunpack.c.h.b16 %v285
    %v836 = vunpack.c.l.b16 %v286
    %v837 = vunpack.c.h.b16 %v286
    %v838 = vunpack.c.l.b16 %v287
    %v839 = vunpack.c.h.b16 %v287
    %v840 = vunpack.c.l.b16 %v288
    %v841 = vunpack.c.h.b16 %v288
    %v842 = vunpack.c.l.b16 %v289
    %v843 = vunpack.c.h.b16 %v289
    %v844 = vunpack.c.l.b16 %v290
    %v845 = vunpack.c.h.b16 %v290
    %v846 = vunpack.c.l.b16 %v291
    %v847 = vunpack.c.h.b16 %v291
    %v848 = vunpack.c.l.b16 %v292
    %v849 = vunpack.c.h.b16 %v292
    %v850 = vunpack.c.l.b16 %v293
    %v851 = vunpack.c.h.b16 %v293
    %v852 = vunpack.c.l.b16 %v294
    %v853 = vunpack.c.h.b16 %v294
    %v854 = vunpack.c.l.b16 %v295
    %v855 = vunpack.c.h.b16 %v295
    %v856 = vunpack.c.l.b16 %v296
    %v857 = vunpack.c.h.b16 %v296
    %v858 = vunpack.c.l.b16 %v297
    %v859 = vunpack.c.h.b16 %v297
    %v860 = vunpack.c.l.b16 %v298
    %v861 = vunpack.c.h.b16 %v298
    %v862 = vunpack.c.l.b16 %v299
    %v863 = vunpack.c.h.b16 %v299
    %v864 = vunpack.c.l.b16 %v300
    %v865 = vunpack.c.h.b16 %v300
    %v866 = vunpack.c.l.b16 %v301
    %v867 = vunpack.c.h.b16 %v301
    %v868 = vunpack.c.l.b16 %v302
    %v869 = vunpack.c.h.b16 %v302
    %v870 = vunpack.c.l.b16 %v303
    %v871 = vunpack.c.h.b16 %v303
    %v872 = vunpack.c.l.b16 %v304
    %v873 = vunpack.c.h.b16 %v304
    %v874 = vunpack.c.l.b16 %v305
    %v875 = vunpack.c.h.b16 %v305
    %v876 = vunpack.c.l.b16 %v306
    %v877 = vunpack.c.h.b16 %v306
    %v878 = vunpack.c.l.b16 %v307
    %v879 = vunpack.c.h.b16 %v307
    %v880 = vunpack.c.l.b16 %v308
    %v881 = vunpack.c.h.b16 %v308
    %v882 = vunpack.c.l.b16 %v309
    %v883 = vunpack.c.h.b16 %v309
    %v884 = vunpack.c.l.b16 %v310
    %v885 = vunpack.c.h.b16 %v310
    %v886 = vunpack.c.l.b16 %v311
    %v887 = vunpack.c.h.b16 %v311
    %v888 = vunpack.c.l.b16 %v312
    %v889 = vunpack.c.h.b16 %v312
    %v890 = vunpack.c.l.b16 %v313
    %v891 = vunpack.c.h.b16 %v313
    %v892 = vunpack.c.l.b16 %v314
    %v893 = vunpack.c.h.b16 %v314
    %v894 = vunpack.c.l.b16 %v315
    %v895 = vunpack.c.h.b16 %v315
    %v896 = vunpack.c.l.b16 %v316
    %v897 = vunpack.c.h.b16 %v316
    %v898 = vunpack.c.l.b16 %v317
    %v899 = vunpack.c.h.b16 %v317
    %v900 = vunpack.c.l.b16 %v318
    %v901 = vunpack.c.h.b16 %v318
    %v902 = vunpack.c.l.b16 %v319
    %v903 = vunpack.c.h.b16 %v319
    %v904 = vunpack.c.l.b16 %v320
    %v905 = vunpack.c.h.b16 %v320
    %v906 = vunpack.c.l.b16 %v321
    %v907 = vunpack.c.h.b16 %v321
    %v908 = vunpack.c.l.b16 %v322
    %v909 = vunpack.c.h.b16 %v322
    %v910 = vunpack.c.l.b16 %v323
    %v911 = vunpack.c.h.b16 %v323
    %v912 = vunpack.c.l.b16 %v324
    %v913 = vunpack.c.h.b16 %v324
    %v914 = vunpack.c.l.b16 %v325
    %v915 = vunpack.c.h.b16 %v325
    %v916 = vunpack.c.l.b16 %v326
    %v917 = vunpack.c.h.b16 %v326
    %v918 = vunpack.c.l.b16 %v327
    %v919 = vunpack.c.h.b16 %v327
    %v920 = vunpack.c.l.b16 %v328
    %v921 = vunpack.c.h.b16 %v328
    %v922 = vunpack.c.l.b16 %v329
    %v923 = vunpack.c.h.b16 %v329
    %v924 = vunpack.c.l.b16 %v330
    %v925 = vunpack.c.h.b16 %v330
    %v926 = vunpack.c.l.b16 %v331
    %v927 = vunpack.c.h.b16 %v331
    %v928 = vunpack.c.l.b16 %v332
    %v929 = vunpack.c.h.b16 %v332
    %v930 = vunpack.c.l.b16 %v333
    %v931 = vunpack.c.h.b16 %v333
    %v932 = vpack.c.b16 %v544, %v540
    %v933 = vpack.c.b16 %v545, %v541
    %v934 = vpack.c.b16 %v546, %v542
    %v935 = vpack.c.b16 %v547, %v543
    %v936 = vpack.c.b16 %v552, %v548
    %v937 = vpack.c.b16 %v553, %v549
    %v938 = vpack.c.b16 %v554, %v550
    %v939 = vpack.c.b16 %v555, %v551
    %v940 = vpack.c.b16 %v560, %v556
    %v941 = vpack.c.b16 %v561, %v557
    %v942 = vpack.c.b16 %v562, %v558
    %v943 = vpack.c.b16 %v563, %v559
    %v944 = vpack.c.b16 %v568, %v564
    %v945 = vpack.c.b16 %v569, %v565
    %v946 = vpack.c.b16 %v570, %v566
    %v947 = vpack.c.b16 %v571, %v567
    %v948 = vpack.c.b16 %v576, %v572
    %v949 = vpack.c.b16 %v577, %v573
    %v950 = vpack.c.b16 %v578, %v574
    %v951 = vpack.c.b16 %v579, %v575
    %v952 = vpack.c.b16 %v584, %v580
    %v953 = vpack.c.b16 %v585, %v581
    %v954 = vpack.c.b16 %v586, %v582
    %v955 = vpack.c.b16 %v587, %v583
    %v956 = vpack.c.b16 %v592, %v588
    %v957 = vpack.c.b16 %v593, %v589
    %v958 = vpack.c.b16 %v594, %v590
    %v959 = vpack.c.b16 %v595, %v591
    %v960 = vpack.c.b16 %v600, %v596
    %v961 = vpack.c.b16 %v601, %v597
    %v962 = vpack.c.b16 %v602, %v598
    %v963 = vpack.c.b16 %v603, %v599
    %v964 = vpack.c.b16 %v608, %v604
    %v965 = vpack.c.b16 %v609, %v605
    %v966 = vpack.c.b16 %v610, %v606
    %v967 = vpack.c.b16 %v611, %v607
    %v968 = vpack.c.b16 %v616, %v612
    %v969 = vpack.c.b16 %v617, %v613
    %v970 = vpack.c.b16 %v618, %v614
    %v971 = vpack.c.b16 %v619, %v615
    %v972 = vpack.c.b16 %v624, %v620
    %v973 = vpack.c.b16 %v625, %v621
    %v974 = vpack.c.b16 %v626, %v622
    %v975 = vpack.c.b16 %v627, %v623
    %v976 = vpack.c.b16 %v632, %v628
    %v977 = vpack.c.b16 %v633, %v629
    %v978 = vpack.c.b16 %v634, %v630
    %v979 = vpack.c.b16 %v635, %v631
    %v980 = vpack.c.b16 %v640, %v636
    %v981 = vpack.c.b16 %v641, %v637
    %v982 = vpack.c.b16 %v642, %v638
    %v983 = vpack.c.b16 %v643, %v639
    %v984 = vpack.c.b16 %v648, %v644
    %v985 = vpack.c.b16 %v649, %v645
    %v986 = vpack.c.b16 %v650, %v646
    %v987 = vpack.c.b16 %v651, %v647
    %v988 = vpack.c.b16 %v656, %v652
    %v989 = vpack.c.b16 %v657, %v653
    %v990 = vpack.c.b16 %v658, %v654
    %v991 = vpack.c.b16 %v659, %v655
    %v992 = vpack.c.b16 %v664, %v660
    %v993 = vpack.c.b16 %v665, %v661
    %v994 = vpack.c.b16 %v666, %v662
    %v995 = vpack.c.b16 %v667, %v663
    %v996 = vpack.c.b16 %v672, %v668
    %v997 = vpack.c.b16 %v673, %v669
    %v998 = vpack.c.b16 %v674, %v670
    %v999 = vpack.c.b16 %v675, %v671
    %v1000 = vpack.c.b16 %v680, %v676
    %v1001 = vpack.c.b16 %v681, %v677
    %v1002 = vpack.c.b16 %v682, %v678
    %v1003 = vpack.c.b16 %v683, %v679
    %v1004 = vpack.c.b16 %v688, %v684
    %v1005 = vpack.c.b16 %v689, %v685
    %v1006 = vpack.c.b16 %v690, %v686
    %v1007 = vpack.c.b16 %v691, %v687
    %v1008 = vpack.c.b16 %v696, %v692
    %v1009 = vpack.c.b16 %v697, %v693
    %v1010 = vpack.c.b16 %v698, %v694
    %v1011 = vpack.c.b16 %v699, %v695
    %v1012 = vpack.c.b16 %v704, %v700
    %v1013 = vpack.c.b16 %v705, %v701
    %v1014 = vpack.c.b16 %v706, %v702
    %v1015 = vpack.c.b16 %v707, %v703
    %v1016 = vpack.c.b16 %v712, %v708
    %v1017 = vpack.c.b16 %v713, %v709
    %v1018 = vpack.c.b16 %v714, %v710
    %v1019 = vpack.c.b16 %v715, %v711
    %v1020 = vpack.c.b16 %v720, %v716
    %v1021 = vpack.c.b16 %v721, %v717
    %v1022 = vpack.c.b16 %v722, %v718
    %v1023 = vpack.c.b16 %v723, %v719
    %v1024 = vpack.c.b16 %v728, %v724
    %v1025 = vpack.c.b16 %v729, %v725
    %v1026 = vpack.c.b16 %v730, %v726
    %v1027 = vpack.c.b16 %v731, %v727
    %v1028 = vpack.c.b16 %v736, %v732
    %v1029 = vpack.c.b16 %v737, %v733
    %v1030 = vpack.c.b16 %v738, %v734
    %v1031 = vpack.c.b16 %v739, %v735
    %v1032 = vpack.c.b16 %v744, %v740
    %v1033 = vpack.c.b16 %v745, %v741
    %v1034 = vpack.c.b16 %v746, %v742
    %v1035 = vpack.c.b16 %v747, %v743
    %v1036 = vpack.c.b16 %v752, %v748
    %v1037 = vpack.c.b16 %v753, %v749
    %v1038 = vpack.c.b16 %v754, %v750
    %v1039 = vpack.c.b16 %v755, %v751
    %v1040 = vpack.c.b16 %v760, %v756
    %v1041 = vpack.c.b16 %v761, %v757
    %v1042 = vpack.c.b16 %v762, %v758
    %v1043 = vpack.c.b16 %v763, %v759
    %v1044 = vpack.c.b16 %v768, %v764
    %v1045 = vpack.c.b16 %v769, %v765
    %v1046 = vpack.c.b16 %v770, %v766
    %v1047 = vpack.c.b16 %v771, %v767
    %v1048 = vpack.c.b16 %v776, %v772
    %v1049 = vpack.c.b16 %v777, %v773
    %v1050 = vpack.c.b16 %v778, %v774
    %v1051 = vpack.c.b16 %v779, %v775
    %v1052 = vpack.c.b16 %v784, %v780
    %v1053 = vpack.c.b16 %v785, %v781
    %v1054 = vpack.c.b16 %v786, %v782
    %v1055 = vpack.c.b16 %v787, %v783
    %v1056 = vpack.c.b16 %v792, %v788
    %v1057 = vpack.c.b16 %v793, %v789
    %v1058 = vpack.c.b16 %v794, %v790
    %v1059 = vpack.c.b16 %v795, %v791
    %v1060 = vpack.c.b16 %v800, %v796
    %v1061 = vpack.c.b16 %v801, %v797
    %v1062 = vpack.c.b16 %v802, %v798
    %v1063 = vpack.c.b16 %v803, %v799
    %v1064 = vpack.c.b16 %v808, %v804
    %v1065 = vpack.c.b16 %v809, %v805
    %v1066 = vpack.c.b16 %v810, %v806
    %v1067 = vpack.c.b16 %v811, %v807
    %v1068 = vpack.c.b16 %v816, %v812
    %v1069 = vpack.c.b16 %v817, %v813
    %v1070 = vpack.c.b16 %v818, %v814
    %v1071 = vpack.c.b16 %v819, %v815
    %v1072 = vpack.c.b16 %v824, %v820
    %v1073 = vpack.c.b16 %v825, %v821
    %v1074 = vpack.c.b16 %v826, %v822
    %v1075 = vpack.c.b16 %v827, %v823
    %v1076 = vpack.c.b16 %v832, %v828
    %v1077 = vpack.c.b16 %v833, %v829
    %v1078 = vpack.c.b16 %v834, %v830
    %v1079 = vpack.c.b16 %v835, %v831
    %v1080 = vpack.c.b16 %v840, %v836
    %v1081 = vpack.c.b16 %v841, %v837
    %v1082 = vpack.c.b16 %v842, %v838
    %v1083 = vpack.c.b16 %v843, %v839
    %v1084 = vpack.c.b16 %v848, %v844
    %v1085 = vpack.c.b16 %v849, %v845
    %v1086 = vpack.c.b16 %v850, %v846
    %v1087 = vpack.c.b16 %v851, %v847
    %v1088 = vpack.c.b16 %v856, %v852
    %v1089 = vpack.c.b16 %v857, %v853
    %v1090 = vpack.c.b16 %v858, %v854
    %v1091 = vpack.c.b16 %v859, %v855
    %v1092 = vpack.c.b16 %v864, %v860
    %v1093 = vpack.c.b16 %v865, %v861
    %v1094 = vpack.c.b16 %v866, %v862
    %v1095 = vpack.c.b16 %v867, %v863
    %v1096 = vpack.c.b16 %v872, %v868
    %v1097 = vpack.c.b16 %v873, %v869
    %v1098 = vpack.c.b16 %v874, %v870
    %v1099 = vpack.c.b16 %v875, %v871
    %v1100 = vpack.c.b16 %v880, %v876
    %v1101 = vpack.c.b16 %v881, %v877
    %v1102 = vpack.c.b16 %v882, %v878
    %v1103 = vpack.c.b16 %v883, %v879
    %v1104 = vpack.c.b16 %v888, %v884
    %v1105 = vpack.c.b16 %v889, %v885
    %v1106 = vpack.c.b16 %v890, %v886
    %v1107 = vpack.c.b16 %v891, %v887
    %v1108 = vpack.c.b16 %v896, %v892
    %v1109 = vpack.c.b16 %v897, %v893
    %v1110 = vpack.c.b16 %v898, %v894
    %v1111 = vpack.c.b16 %v899, %v895
    %v1112 = vpack.c.b16 %v904, %v900
    %v1113 = vpack.c.b16 %v905, %v901
    %v1114 = vpack.c.b16 %v906, %v902
    %v1115 = vpack.c.b16 %v907, %v903
    %v1116 = vpack.c.b16 %v912, %v908
    %v1117 = vpack.c.b16 %v913, %v909
    %v1118 = vpack.c.b16 %v914, %v910
    %v1119 = vpack.c.b16 %v915, %v911
    %v1120 = vpack.c.b16 %v920, %v916
    %v1121 = vpack.c.b16 %v921, %v917
    %v1122 = vpack.c.b16 %v922, %v918
    %v1123 = vpack.c.b16 %v923, %v919
    %v1124 = vpack.c.b16 %v928, %v924
    %v1125 = vpack.c.b16 %v929, %v925
    %v1126 = vpack.c.b16 %v930, %v926
    %v1127 = vpack.c.b16 %v931, %v927
    %vm1324 = vcmask 130048
    %v1326 = vsel %vm1324, %v137, 0
    %1328 = vmatpush.bf16.msra.mxu0 %v960
    %1329 = vmatpush.bf16.msra.mxu0 %v956
    %1330 = vmatpush.bf16.msra.mxu0 %v952
    %1331 = vmatpush.bf16.msra.mxu0 %v948
    %1332 = vmatpush.bf16.msra.mxu0 %v944
    %1333 = vmatpush.bf16.msra.mxu0 %v940
    %1334 = vmatpush.bf16.msra.mxu0 %v936
    %1335 = vmatpush.bf16.msra.mxu0 %v932
    %1336 = vmatmul.bf16.gmra.mxu0 %v131
    %v1337 = vpop.f32.mrf.mxu0
    %v1338 = vadd.f32 %v336, %v1337
    %v1339 = vpop.f32.mrf.mxu0
    %1340 = vdwg.mxu0
    %1341 = vmatpush.bf16.msra.mxu0 %v992
    %1342 = vmatpush.bf16.msra.mxu0 %v988
    %1343 = vmatpush.bf16.msra.mxu0 %v984
    %1344 = vmatpush.bf16.msra.mxu0 %v980
    %1345 = vmatpush.bf16.msra.mxu0 %v976
    %1346 = vmatpush.bf16.msra.mxu0 %v972
    %1347 = vmatpush.bf16.msra.mxu0 %v968
    %1348 = vmatpush.bf16.msra.mxu0 %v964
    %1349 = vmatmul.bf16.gmra.mxu0 %v132
    %v1350 = vpop.f32.mrf.mxu0
    %v1351 = vadd.f32 %v1338, %v1350
    %v1352 = vpop.f32.mrf.mxu0
    %1353 = vdwg.mxu0
    %1354 = vmatpush.bf16.msra.mxu0 %v1024
    %1355 = vmatpush.bf16.msra.mxu0 %v1020
    %1356 = vmatpush.bf16.msra.mxu0 %v1016
    %1357 = vmatpush.bf16.msra.mxu0 %v1012
    %1358 = vmatpush.bf16.msra.mxu0 %v1008
    %1359 = vmatpush.bf16.msra.mxu0 %v1004
    %1360 = vmatpush.bf16.msra.mxu0 %v1000
    %1361 = vmatpush.bf16.msra.mxu0 %v996
    %1362 = vmatmul.bf16.gmra.mxu0 %v133
    %v1363 = vpop.f32.mrf.mxu0
    %v1364 = vadd.f32 %v1351, %v1363
    %v1365 = vpop.f32.mrf.mxu0
    %1366 = vdwg.mxu0
    %1367 = vmatpush.bf16.msra.mxu0 %v1056
    %1368 = vmatpush.bf16.msra.mxu0 %v1052
    %1369 = vmatpush.bf16.msra.mxu0 %v1048
    %1370 = vmatpush.bf16.msra.mxu0 %v1044
    %1371 = vmatpush.bf16.msra.mxu0 %v1040
    %1372 = vmatpush.bf16.msra.mxu0 %v1036
    %1373 = vmatpush.bf16.msra.mxu0 %v1032
    %1374 = vmatpush.bf16.msra.mxu0 %v1028
    %1375 = vmatmul.bf16.gmra.mxu0 %v134
    %v1376 = vpop.f32.mrf.mxu0
    %v1377 = vadd.f32 %v1364, %v1376
    %v1378 = vpop.f32.mrf.mxu0
    %1379 = vdwg.mxu0
    %1380 = vmatpush.bf16.msra.mxu0 %v1088
    %1381 = vmatpush.bf16.msra.mxu0 %v1084
    %1382 = vmatpush.bf16.msra.mxu0 %v1080
    %1383 = vmatpush.bf16.msra.mxu0 %v1076
    %1384 = vmatpush.bf16.msra.mxu0 %v1072
    %1385 = vmatpush.bf16.msra.mxu0 %v1068
    %1386 = vmatpush.bf16.msra.mxu0 %v1064
    %1387 = vmatpush.bf16.msra.mxu0 %v1060
    %1388 = vmatmul.bf16.gmra.mxu0 %v135
    %v1389 = vpop.f32.mrf.mxu0
    %v1390 = vadd.f32 %v1377, %v1389
    %v1391 = vpop.f32.mrf.mxu0
    %1392 = vdwg.mxu0
    %1393 = vmatpush.bf16.msra.mxu0 %v1120
    %1394 = vmatpush.bf16.msra.mxu0 %v1116
    %1395 = vmatpush.bf16.msra.mxu0 %v1112
    %1396 = vmatpush.bf16.msra.mxu0 %v1108
    %1397 = vmatpush.bf16.msra.mxu0 %v1104
    %1398 = vmatpush.bf16.msra.mxu0 %v1100
    %1399 = vmatpush.bf16.msra.mxu0 %v1096
    %1400 = vmatpush.bf16.msra.mxu0 %v1092
    %1401 = vmatmul.bf16.gmra.mxu0 %v136
    %v1402 = vpop.f32.mrf.mxu0
    %v1403 = vadd.f32 %v1390, %v1402
    %v1404 = vpop.f32.mrf.mxu0
    %1405 = vdwg.mxu0
    %1406 = vmatpush.bf16.msra.mxu0 0
    %1407 = vmatpush.bf16.msra.mxu0 0
    %1408 = vmatpush.bf16.msra.mxu0 0
    %1409 = vmatpush.bf16.msra.mxu0 0
    %1410 = vmatpush.bf16.msra.mxu0 0
    %1411 = vmatpush.bf16.msra.mxu0 0
    %1412 = vmatpush.bf16.msra.mxu0 0
    %1413 = vmatpush.bf16.msra.mxu0 %v1124
    %1414 = vmatmul.bf16.gmra.mxu0 %v1326
    %v1415 = vpop.f32.mrf.mxu0
    %v1416 = vadd.f32 %v1403, %v1415
    %v1417 = vpop.f32.mrf.mxu0
    %1418 = vdwg.mxu0
    %1419 = vmatpush.bf16.msra.mxu0 %v961
    %1420 = vmatpush.bf16.msra.mxu0 %v957
    %1421 = vmatpush.bf16.msra.mxu0 %v953
    %1422 = vmatpush.bf16.msra.mxu0 %v949
    %1423 = vmatpush.bf16.msra.mxu0 %v945
    %1424 = vmatpush.bf16.msra.mxu0 %v941
    %1425 = vmatpush.bf16.msra.mxu0 %v937
    %1426 = vmatpush.bf16.msra.mxu0 %v933
    %1427 = vmatmul.bf16.gmra.mxu0 %v131
    %v1428 = vpop.f32.mrf.mxu0
    %v1429 = vadd.f32 %v337, %v1428
    %v1430 = vpop.f32.mrf.mxu0
    %1431 = vdwg.mxu0
    %1432 = vmatpush.bf16.msra.mxu0 %v993
    %1433 = vmatpush.bf16.msra.mxu0 %v989
    %1434 = vmatpush.bf16.msra.mxu0 %v985
    %1435 = vmatpush.bf16.msra.mxu0 %v981
    %1436 = vmatpush.bf16.msra.mxu0 %v977
    %1437 = vmatpush.bf16.msra.mxu0 %v973
    %1438 = vmatpush.bf16.msra.mxu0 %v969
    %1439 = vmatpush.bf16.msra.mxu0 %v965
    %1440 = vmatmul.bf16.gmra.mxu0 %v132
    %v1441 = vpop.f32.mrf.mxu0
    %v1442 = vadd.f32 %v1429, %v1441
    %v1443 = vpop.f32.mrf.mxu0
    %1444 = vdwg.mxu0
    %1445 = vmatpush.bf16.msra.mxu0 %v1025
    %1446 = vmatpush.bf16.msra.mxu0 %v1021
    %1447 = vmatpush.bf16.msra.mxu0 %v1017
    %1448 = vmatpush.bf16.msra.mxu0 %v1013
    %1449 = vmatpush.bf16.msra.mxu0 %v1009
    %1450 = vmatpush.bf16.msra.mxu0 %v1005
    %1451 = vmatpush.bf16.msra.mxu0 %v1001
    %1452 = vmatpush.bf16.msra.mxu0 %v997
    %1453 = vmatmul.bf16.gmra.mxu0 %v133
    %v1454 = vpop.f32.mrf.mxu0
    %v1455 = vadd.f32 %v1442, %v1454
    %v1456 = vpop.f32.mrf.mxu0
    %1457 = vdwg.mxu0
    %1458 = vmatpush.bf16.msra.mxu0 %v1057
    %1459 = vmatpush.bf16.msra.mxu0 %v1053
    %1460 = vmatpush.bf16.msra.mxu0 %v1049
    %1461 = vmatpush.bf16.msra.mxu0 %v1045
    %1462 = vmatpush.bf16.msra.mxu0 %v1041
    %1463 = vmatpush.bf16.msra.mxu0 %v1037
    %1464 = vmatpush.bf16.msra.mxu0 %v1033
    %1465 = vmatpush.bf16.msra.mxu0 %v1029
    %1466 = vmatmul.bf16.gmra.mxu0 %v134
    %v1467 = vpop.f32.mrf.mxu0
    %v1468 = vadd.f32 %v1455, %v1467
    %v1469 = vpop.f32.mrf.mxu0
    %1470 = vdwg.mxu0
    %1471 = vmatpush.bf16.msra.mxu0 %v1089
    %1472 = vmatpush.bf16.msra.mxu0 %v1085
    %1473 = vmatpush.bf16.msra.mxu0 %v1081
    %1474 = vmatpush.bf16.msra.mxu0 %v1077
    %1475 = vmatpush.bf16.msra.mxu0 %v1073
    %1476 = vmatpush.bf16.msra.mxu0 %v1069
    %1477 = vmatpush.bf16.msra.mxu0 %v1065
    %1478 = vmatpush.bf16.msra.mxu0 %v1061
    %1479 = vmatmul.bf16.gmra.mxu0 %v135
    %v1480 = vpop.f32.mrf.mxu0
    %v1481 = vadd.f32 %v1468, %v1480
    %v1482 = vpop.f32.mrf.mxu0
    %1483 = vdwg.mxu0
    %1484 = vmatpush.bf16.msra.mxu0 %v1121
    %1485 = vmatpush.bf16.msra.mxu0 %v1117
    %1486 = vmatpush.bf16.msra.mxu0 %v1113
    %1487 = vmatpush.bf16.msra.mxu0 %v1109
    %1488 = vmatpush.bf16.msra.mxu0 %v1105
    %1489 = vmatpush.bf16.msra.mxu0 %v1101
    %1490 = vmatpush.bf16.msra.mxu0 %v1097
    %1491 = vmatpush.bf16.msra.mxu0 %v1093
    %1492 = vmatmul.bf16.gmra.mxu0 %v136
    %v1493 = vpop.f32.mrf.mxu0
    %v1494 = vadd.f32 %v1481, %v1493
    %v1495 = vpop.f32.mrf.mxu0
    %1496 = vdwg.mxu0
    %1497 = vmatpush.bf16.msra.mxu0 0
    %1498 = vmatpush.bf16.msra.mxu0 0
    %1499 = vmatpush.bf16.msra.mxu0 0
    %1500 = vmatpush.bf16.msra.mxu0 0
    %1501 = vmatpush.bf16.msra.mxu0 0
    %1502 = vmatpush.bf16.msra.mxu0 0
    %1503 = vmatpush.bf16.msra.mxu0 0
    %1504 = vmatpush.bf16.msra.mxu0 %v1125
    %1505 = vmatmul.bf16.gmra.mxu0 %v1326
    %v1506 = vpop.f32.mrf.mxu0
    %v1507 = vadd.f32 %v1494, %v1506
    %v1508 = vpop.f32.mrf.mxu0
    %1509 = vdwg.mxu0
    %1510 = vmatpush.bf16.msra.mxu0 %v962
    %1511 = vmatpush.bf16.msra.mxu0 %v958
    %1512 = vmatpush.bf16.msra.mxu0 %v954
    %1513 = vmatpush.bf16.msra.mxu0 %v950
    %1514 = vmatpush.bf16.msra.mxu0 %v946
    %1515 = vmatpush.bf16.msra.mxu0 %v942
    %1516 = vmatpush.bf16.msra.mxu0 %v938
    %1517 = vmatpush.bf16.msra.mxu0 %v934
    %1518 = vmatmul.bf16.gmra.mxu0 %v131
    %v1519 = vpop.f32.mrf.mxu0
    %v1520 = vadd.f32 %v338, %v1519
    %v1521 = vpop.f32.mrf.mxu0
    %1522 = vdwg.mxu0
    %1523 = vmatpush.bf16.msra.mxu0 %v994
    %1524 = vmatpush.bf16.msra.mxu0 %v990
    %1525 = vmatpush.bf16.msra.mxu0 %v986
    %1526 = vmatpush.bf16.msra.mxu0 %v982
    %1527 = vmatpush.bf16.msra.mxu0 %v978
    %1528 = vmatpush.bf16.msra.mxu0 %v974
    %1529 = vmatpush.bf16.msra.mxu0 %v970
    %1530 = vmatpush.bf16.msra.mxu0 %v966
    %1531 = vmatmul.bf16.gmra.mxu0 %v132
    %v1532 = vpop.f32.mrf.mxu0
    %v1533 = vadd.f32 %v1520, %v1532
    %v1534 = vpop.f32.mrf.mxu0
    %1535 = vdwg.mxu0
    %1536 = vmatpush.bf16.msra.mxu0 %v1026
    %1537 = vmatpush.bf16.msra.mxu0 %v1022
    %1538 = vmatpush.bf16.msra.mxu0 %v1018
    %1539 = vmatpush.bf16.msra.mxu0 %v1014
    %1540 = vmatpush.bf16.msra.mxu0 %v1010
    %1541 = vmatpush.bf16.msra.mxu0 %v1006
    %1542 = vmatpush.bf16.msra.mxu0 %v1002
    %1543 = vmatpush.bf16.msra.mxu0 %v998
    %1544 = vmatmul.bf16.gmra.mxu0 %v133
    %v1545 = vpop.f32.mrf.mxu0
    %v1546 = vadd.f32 %v1533, %v1545
    %v1547 = vpop.f32.mrf.mxu0
    %1548 = vdwg.mxu0
    %1549 = vmatpush.bf16.msra.mxu0 %v1058
    %1550 = vmatpush.bf16.msra.mxu0 %v1054
    %1551 = vmatpush.bf16.msra.mxu0 %v1050
    %1552 = vmatpush.bf16.msra.mxu0 %v1046
    %1553 = vmatpush.bf16.msra.mxu0 %v1042
    %1554 = vmatpush.bf16.msra.mxu0 %v1038
    %1555 = vmatpush.bf16.msra.mxu0 %v1034
    %1556 = vmatpush.bf16.msra.mxu0 %v1030
    %1557 = vmatmul.bf16.gmra.mxu0 %v134
    %v1558 = vpop.f32.mrf.mxu0
    %v1559 = vadd.f32 %v1546, %v1558
    %v1560 = vpop.f32.mrf.mxu0
    %1561 = vdwg.mxu0
    %1562 = vmatpush.bf16.msra.mxu0 %v1090
    %1563 = vmatpush.bf16.msra.mxu0 %v1086
    %1564 = vmatpush.bf16.msra.mxu0 %v1082
    %1565 = vmatpush.bf16.msra.mxu0 %v1078
    %1566 = vmatpush.bf16.msra.mxu0 %v1074
    %1567 = vmatpush.bf16.msra.mxu0 %v1070
    %1568 = vmatpush.bf16.msra.mxu0 %v1066
    %1569 = vmatpush.bf16.msra.mxu0 %v1062
    %1570 = vmatmul.bf16.gmra.mxu0 %v135
    %v1571 = vpop.f32.mrf.mxu0
    %v1572 = vadd.f32 %v1559, %v1571
    %v1573 = vpop.f32.mrf.mxu0
    %1574 = vdwg.mxu0
    %1575 = vmatpush.bf16.msra.mxu0 %v1122
    %1576 = vmatpush.bf16.msra.mxu0 %v1118
    %1577 = vmatpush.bf16.msra.mxu0 %v1114
    %1578 = vmatpush.bf16.msra.mxu0 %v1110
    %1579 = vmatpush.bf16.msra.mxu0 %v1106
    %1580 = vmatpush.bf16.msra.mxu0 %v1102
    %1581 = vmatpush.bf16.msra.mxu0 %v1098
    %1582 = vmatpush.bf16.msra.mxu0 %v1094
    %1583 = vmatmul.bf16.gmra.mxu0 %v136
    %v1584 = vpop.f32.mrf.mxu0
    %v1585 = vadd.f32 %v1572, %v1584
    %v1586 = vpop.f32.mrf.mxu0
    %1587 = vdwg.mxu0
    %1588 = vmatpush.bf16.msra.mxu0 0
    %1589 = vmatpush.bf16.msra.mxu0 0
    %1590 = vmatpush.bf16.msra.mxu0 0
    %1591 = vmatpush.bf16.msra.mxu0 0
    %1592 = vmatpush.bf16.msra.mxu0 0
    %1593 = vmatpush.bf16.msra.mxu0 0
    %1594 = vmatpush.bf16.msra.mxu0 0
    %1595 = vmatpush.bf16.msra.mxu0 %v1126
    %1596 = vmatmul.bf16.gmra.mxu0 %v1326
    %v1597 = vpop.f32.mrf.mxu0
    %v1598 = vadd.f32 %v1585, %v1597
    %v1599 = vpop.f32.mrf.mxu0
    %1600 = vdwg.mxu0
    %1601 = vmatpush.bf16.msra.mxu0 %v963
    %1602 = vmatpush.bf16.msra.mxu0 %v959
    %1603 = vmatpush.bf16.msra.mxu0 %v955
    %1604 = vmatpush.bf16.msra.mxu0 %v951
    %1605 = vmatpush.bf16.msra.mxu0 %v947
    %1606 = vmatpush.bf16.msra.mxu0 %v943
    %1607 = vmatpush.bf16.msra.mxu0 %v939
    %1608 = vmatpush.bf16.msra.mxu0 %v935
    %1609 = vmatmul.bf16.gmra.mxu0 %v131
    %v1610 = vpop.f32.mrf.mxu0
    %v1611 = vadd.f32 %v339, %v1610
    %v1612 = vpop.f32.mrf.mxu0
    %1613 = vdwg.mxu0
    %1614 = vmatpush.bf16.msra.mxu0 %v995
    %1615 = vmatpush.bf16.msra.mxu0 %v991
    %1616 = vmatpush.bf16.msra.mxu0 %v987
    %1617 = vmatpush.bf16.msra.mxu0 %v983
    %1618 = vmatpush.bf16.msra.mxu0 %v979
    %1619 = vmatpush.bf16.msra.mxu0 %v975
    %1620 = vmatpush.bf16.msra.mxu0 %v971
    %1621 = vmatpush.bf16.msra.mxu0 %v967
    %1622 = vmatmul.bf16.gmra.mxu0 %v132
    %v1623 = vpop.f32.mrf.mxu0
    %v1624 = vadd.f32 %v1611, %v1623
    %v1625 = vpop.f32.mrf.mxu0
    %1626 = vdwg.mxu0
    %1627 = vmatpush.bf16.msra.mxu0 %v1027
    %1628 = vmatpush.bf16.msra.mxu0 %v1023
    %1629 = vmatpush.bf16.msra.mxu0 %v1019
    %1630 = vmatpush.bf16.msra.mxu0 %v1015
    %1631 = vmatpush.bf16.msra.mxu0 %v1011
    %1632 = vmatpush.bf16.msra.mxu0 %v1007
    %1633 = vmatpush.bf16.msra.mxu0 %v1003
    %1634 = vmatpush.bf16.msra.mxu0 %v999
    %1635 = vmatmul.bf16.gmra.mxu0 %v133
    %v1636 = vpop.f32.mrf.mxu0
    %v1637 = vadd.f32 %v1624, %v1636
    %v1638 = vpop.f32.mrf.mxu0
    %1639 = vdwg.mxu0
    %1640 = vmatpush.bf16.msra.mxu0 %v1059
    %1641 = vmatpush.bf16.msra.mxu0 %v1055
    %1642 = vmatpush.bf16.msra.mxu0 %v1051
    %1643 = vmatpush.bf16.msra.mxu0 %v1047
    %1644 = vmatpush.bf16.msra.mxu0 %v1043
    %1645 = vmatpush.bf16.msra.mxu0 %v1039
    %1646 = vmatpush.bf16.msra.mxu0 %v1035
    %1647 = vmatpush.bf16.msra.mxu0 %v1031
    %1648 = vmatmul.bf16.gmra.mxu0 %v134
    %v1649 = vpop.f32.mrf.mxu0
    %v1650 = vadd.f32 %v1637, %v1649
    %v1651 = vpop.f32.mrf.mxu0
    %1652 = vdwg.mxu0
    %1653 = vmatpush.bf16.msra.mxu0 %v1091
    %1654 = vmatpush.bf16.msra.mxu0 %v1087
    %1655 = vmatpush.bf16.msra.mxu0 %v1083
    %1656 = vmatpush.bf16.msra.mxu0 %v1079
    %1657 = vmatpush.bf16.msra.mxu0 %v1075
    %1658 = vmatpush.bf16.msra.mxu0 %v1071
    %1659 = vmatpush.bf16.msra.mxu0 %v1067
    %1660 = vmatpush.bf16.msra.mxu0 %v1063
    %1661 = vmatmul.bf16.gmra.mxu0 %v135
    %v1662 = vpop.f32.mrf.mxu0
    %v1663 = vadd.f32 %v1650, %v1662
    %v1664 = vpop.f32.mrf.mxu0
    %1665 = vdwg.mxu0
    %1666 = vmatpush.bf16.msra.mxu0 %v1123
    %1667 = vmatpush.bf16.msra.mxu0 %v1119
    %1668 = vmatpush.bf16.msra.mxu0 %v1115
    %1669 = vmatpush.bf16.msra.mxu0 %v1111
    %1670 = vmatpush.bf16.msra.mxu0 %v1107
    %1671 = vmatpush.bf16.msra.mxu0 %v1103
    %1672 = vmatpush.bf16.msra.mxu0 %v1099
    %1673 = vmatpush.bf16.msra.mxu0 %v1095
    %1674 = vmatmul.bf16.gmra.mxu0 %v136
    %v1675 = vpop.f32.mrf.mxu0
    %v1676 = vadd.f32 %v1663, %v1675
    %v1677 = vpop.f32.mrf.mxu0
    %1678 = vdwg.mxu0
    %1679 = vmatpush.bf16.msra.mxu0 0
    %1680 = vmatpush.bf16.msra.mxu0 0
    %1681 = vmatpush.bf16.msra.mxu0 0
    %1682 = vmatpush.bf16.msra.mxu0 0
    %1683 = vmatpush.bf16.msra.mxu0 0
    %1684 = vmatpush.bf16.msra.mxu0 0
    %1685 = vmatpush.bf16.msra.mxu0 0
    %1686 = vmatpush.bf16.msra.mxu0 %v1127
    %1687 = vmatmul.bf16.gmra.mxu0 %v1326
    %v1688 = vpop.f32.mrf.mxu0
    %v1689 = vadd.f32 %v1676, %v1688
    %v1690 = vpop.f32.mrf.mxu0
    %1691 = vdwg.mxu0
    %v1692 = vmax.f32 %v1416, 0.0
    %v1693 = vmax.f32 %v1507, 0.0
    %v1694 = vmax.f32 %v1598, 0.0
    %v1695 = vmax.f32 %v1689, 0.0
    %v1696 = vpack.c.bf16 %v1692, %v1692
    %v1697 = vpack.c.bf16 %v1693, %v1693
    %v1698 = vpack.c.bf16 %v1694, %v1694
    %v1699 = vpack.c.bf16 %v1695, %v1695
    %v1700 = vld [vmem:[#allocation8] sm:$0xff]
    %v1701 = vld [vmem:[#allocation8 + $0x8] sm:$0xff]
    %v1702 = vld [vmem:[#allocation8 + $0x10] sm:$0xff]
    %v1703 = vld [vmem:[#allocation8 + $0x18] sm:$0xff]
    %v1704 = vld [vmem:[#allocation8 + $0x20] sm:$0xff]
    %v1705 = vld [vmem:[#allocation8 + $0x28] sm:$0xff]
    %v1706 = vld [vmem:[#allocation8 + $0x30] sm:$0xff]
    %v1707 = vld [vmem:[#allocation8 + $0x38] sm:$0xff]
    %v1708 = vld [vmem:[#allocation8 + $0x40] sm:$0xff]
    %v1709 = vld [vmem:[#allocation8 + $0x48] sm:$0xff]
    %v1710 = vld [vmem:[#allocation8 + $0x50] sm:$0xff]
    %v1711 = vld [vmem:[#allocation8 + $0x58] sm:$0xff]
    %v1712 = vld [vmem:[#allocation8 + $0x60] sm:$0xff]
    %v1713 = vld [vmem:[#allocation8 + $0x68] sm:$0xff]
    %v1714 = vld [vmem:[#allocation8 + $0x70] sm:$0xff]
    %v1715 = vld [vmem:[#allocation8 + $0x78] sm:$0xff]
    %v1716 = vld [vmem:[#allocation8 + $0x80] sm:$0xff]
    %v1717 = vld [vmem:[#allocation8 + $0x88] sm:$0xff]
    %v1718 = vld [vmem:[#allocation8 + $0x90] sm:$0xff]
    %v1719 = vld [vmem:[#allocation8 + $0x98] sm:$0xff]
    %v1720 = vld [vmem:[#allocation8 + $0xa0] sm:$0xff]
    %v1721 = vld [vmem:[#allocation8 + $0xa8] sm:$0xff]
    %v1722 = vld [vmem:[#allocation8 + $0xb0] sm:$0xff]
    %v1723 = vld [vmem:[#allocation8 + $0xb8] sm:$0xff]
    %v1724 = vld [vmem:[#allocation8 + $0xc0] sm:$0xff]
    %v1725 = vld [vmem:[#allocation8 + $0xc8] sm:$0xff]
    %v1726 = vld [vmem:[#allocation8 + $0xd0] sm:$0xff]
    %v1727 = vld [vmem:[#allocation8 + $0xd8] sm:$0xff]
    %v1728 = vld [vmem:[#allocation8 + $0xe0] sm:$0xff]
    %v1729 = vld [vmem:[#allocation8 + $0xe8] sm:$0xff]
    %v1730 = vld [vmem:[#allocation8 + $0xf0] sm:$0xff]
    %v1731 = vld [vmem:[#allocation8 + $0xf8] sm:$0xff]
    %v1732 = vld [vmem:[#allocation8 + $0x100] sm:$0xff]
    %v1733 = vld [vmem:[#allocation8 + $0x108] sm:$0xff]
    %v1734 = vld [vmem:[#allocation8 + $0x110] sm:$0xff]
    %v1735 = vld [vmem:[#allocation8 + $0x118] sm:$0xff]
    %v1736 = vld [vmem:[#allocation8 + $0x120] sm:$0xff]
    %v1737 = vld [vmem:[#allocation8 + $0x128] sm:$0xff]
    %v1738 = vld [vmem:[#allocation8 + $0x130] sm:$0xff]
    %v1739 = vld [vmem:[#allocation8 + $0x138] sm:$0xff]
    %v1740 = vld [vmem:[#allocation8 + $0x140] sm:$0xff]
    %v1741 = vld [vmem:[#allocation8 + $0x148] sm:$0xff]
    %v1742 = vld [vmem:[#allocation8 + $0x150] sm:$0xff]
    %v1743 = vld [vmem:[#allocation8 + $0x158] sm:$0xff]
    %v1744 = vld [vmem:[#allocation8 + $0x160] sm:$0xff]
    %v1745 = vld [vmem:[#allocation8 + $0x168] sm:$0xff]
    %v1746 = vld [vmem:[#allocation8 + $0x170] sm:$0xff]
    %v1747 = vld [vmem:[#allocation8 + $0x178] sm:$0xff]
    %v1748 = vld [vmem:[#allocation8 + $0x180] sm:$0xff]
    %v1749 = vld [vmem:[#allocation8 + $0x188] sm:$0xff]
    %v1750 = vld [vmem:[#allocation8 + $0x190] sm:$0xff]
    %v1751 = vld [vmem:[#allocation8 + $0x198] sm:$0xff]
    %v1752 = vld [vmem:[#allocation8 + $0x1a0] sm:$0xff]
    %v1753 = vld [vmem:[#allocation8 + $0x1a8] sm:$0xff]
    %v1754 = vld [vmem:[#allocation8 + $0x1b0] sm:$0xff]
    %v1755 = vld [vmem:[#allocation8 + $0x1b8] sm:$0xff]
    %v1756 = vld [vmem:[#allocation8 + $0x1c0] sm:$0xff]
    %v1757 = vld [vmem:[#allocation8 + $0x1c8] sm:$0xff]
    %v1758 = vld [vmem:[#allocation8 + $0x1d0] sm:$0xff]
    %v1759 = vld [vmem:[#allocation8 + $0x1d8] sm:$0xff]
    %v1760 = vld [vmem:[#allocation8 + $0x1e0] sm:$0xff]
    %v1761 = vld [vmem:[#allocation8 + $0x1e8] sm:$0xff]
    %v1762 = vld [vmem:[#allocation8 + $0x1f0] sm:$0xff]
    %v1763 = vld [vmem:[#allocation8 + $0x1f8] sm:$0xff]
    %v1764 = vld [vmem:[%s4] sm:$0x3]
    %v1766 = vperm.slane %v1764, 0
    %v1767 = vperm.slane %v1764, 1
    %v1834 = vunpack.c.l.b16 %v1700
    %v1835 = vunpack.c.h.b16 %v1700
    %v1836 = vunpack.c.l.b16 %v1701
    %v1837 = vunpack.c.h.b16 %v1701
    %v1838 = vunpack.c.l.b16 %v1702
    %v1839 = vunpack.c.h.b16 %v1702
    %v1840 = vunpack.c.l.b16 %v1703
    %v1841 = vunpack.c.h.b16 %v1703
    %v1842 = vunpack.c.l.b16 %v1704
    %v1843 = vunpack.c.h.b16 %v1704
    %v1844 = vunpack.c.l.b16 %v1705
    %v1845 = vunpack.c.h.b16 %v1705
    %v1846 = vunpack.c.l.b16 %v1706
    %v1847 = vunpack.c.h.b16 %v1706
    %v1848 = vunpack.c.l.b16 %v1707
    %v1849 = vunpack.c.h.b16 %v1707
    %v1850 = vunpack.c.l.b16 %v1708
    %v1851 = vunpack.c.h.b16 %v1708
    %v1852 = vunpack.c.l.b16 %v1709
    %v1853 = vunpack.c.h.b16 %v1709
    %v1854 = vunpack.c.l.b16 %v1710
    %v1855 = vunpack.c.h.b16 %v1710
    %v1856 = vunpack.c.l.b16 %v1711
    %v1857 = vunpack.c.h.b16 %v1711
    %v1858 = vunpack.c.l.b16 %v1712
    %v1859 = vunpack.c.h.b16 %v1712
    %v1860 = vunpack.c.l.b16 %v1713
    %v1861 = vunpack.c.h.b16 %v1713
    %v1862 = vunpack.c.l.b16 %v1714
    %v1863 = vunpack.c.h.b16 %v1714
    %v1864 = vunpack.c.l.b16 %v1715
    %v1865 = vunpack.c.h.b16 %v1715
    %v1866 = vunpack.c.l.b16 %v1716
    %v1867 = vunpack.c.h.b16 %v1716
    %v1868 = vunpack.c.l.b16 %v1717
    %v1869 = vunpack.c.h.b16 %v1717
    %v1870 = vunpack.c.l.b16 %v1718
    %v1871 = vunpack.c.h.b16 %v1718
    %v1872 = vunpack.c.l.b16 %v1719
    %v1873 = vunpack.c.h.b16 %v1719
    %v1874 = vunpack.c.l.b16 %v1720
    %v1875 = vunpack.c.h.b16 %v1720
    %v1876 = vunpack.c.l.b16 %v1721
    %v1877 = vunpack.c.h.b16 %v1721
    %v1878 = vunpack.c.l.b16 %v1722
    %v1879 = vunpack.c.h.b16 %v1722
    %v1880 = vunpack.c.l.b16 %v1723
    %v1881 = vunpack.c.h.b16 %v1723
    %v1882 = vunpack.c.l.b16 %v1724
    %v1883 = vunpack.c.h.b16 %v1724
    %v1884 = vunpack.c.l.b16 %v1725
    %v1885 = vunpack.c.h.b16 %v1725
    %v1886 = vunpack.c.l.b16 %v1726
    %v1887 = vunpack.c.h.b16 %v1726
    %v1888 = vunpack.c.l.b16 %v1727
    %v1889 = vunpack.c.h.b16 %v1727
    %v1890 = vunpack.c.l.b16 %v1728
    %v1891 = vunpack.c.h.b16 %v1728
    %v1892 = vunpack.c.l.b16 %v1729
    %v1893 = vunpack.c.h.b16 %v1729
    %v1894 = vunpack.c.l.b16 %v1730
    %v1895 = vunpack.c.h.b16 %v1730
    %v1896 = vunpack.c.l.b16 %v1731
    %v1897 = vunpack.c.h.b16 %v1731
    %v1898 = vunpack.c.l.b16 %v1732
    %v1899 = vunpack.c.h.b16 %v1732
    %v1900 = vunpack.c.l.b16 %v1733
    %v1901 = vunpack.c.h.b16 %v1733
    %v1902 = vunpack.c.l.b16 %v1734
    %v1903 = vunpack.c.h.b16 %v1734
    %v1904 = vunpack.c.l.b16 %v1735
    %v1905 = vunpack.c.h.b16 %v1735
    %v1906 = vunpack.c.l.b16 %v1736
    %v1907 = vunpack.c.h.b16 %v1736
    %v1908 = vunpack.c.l.b16 %v1737
    %v1909 = vunpack.c.h.b16 %v1737
    %v1910 = vunpack.c.l.b16 %v1738
    %v1911 = vunpack.c.h.b16 %v1738
    %v1912 = vunpack.c.l.b16 %v1739
    %v1913 = vunpack.c.h.b16 %v1739
    %v1914 = vunpack.c.l.b16 %v1740
    %v1915 = vunpack.c.h.b16 %v1740
    %v1916 = vunpack.c.l.b16 %v1741
    %v1917 = vunpack.c.h.b16 %v1741
    %v1918 = vunpack.c.l.b16 %v1742
    %v1919 = vunpack.c.h.b16 %v1742
    %v1920 = vunpack.c.l.b16 %v1743
    %v1921 = vunpack.c.h.b16 %v1743
    %v1922 = vunpack.c.l.b16 %v1744
    %v1923 = vunpack.c.h.b16 %v1744
    %v1924 = vunpack.c.l.b16 %v1745
    %v1925 = vunpack.c.h.b16 %v1745
    %v1926 = vunpack.c.l.b16 %v1746
    %v1927 = vunpack.c.h.b16 %v1746
    %v1928 = vunpack.c.l.b16 %v1747
    %v1929 = vunpack.c.h.b16 %v1747
    %v1930 = vunpack.c.l.b16 %v1748
    %v1931 = vunpack.c.h.b16 %v1748
    %v1932 = vunpack.c.l.b16 %v1749
    %v1933 = vunpack.c.h.b16 %v1749
    %v1934 = vunpack.c.l.b16 %v1750
    %v1935 = vunpack.c.h.b16 %v1750
    %v1936 = vunpack.c.l.b16 %v1751
    %v1937 = vunpack.c.h.b16 %v1751
    %v1938 = vunpack.c.l.b16 %v1752
    %v1939 = vunpack.c.h.b16 %v1752
    %v1940 = vunpack.c.l.b16 %v1753
    %v1941 = vunpack.c.h.b16 %v1753
    %v1942 = vunpack.c.l.b16 %v1754
    %v1943 = vunpack.c.h.b16 %v1754
    %v1944 = vunpack.c.l.b16 %v1755
    %v1945 = vunpack.c.h.b16 %v1755
    %v1946 = vunpack.c.l.b16 %v1756
    %v1947 = vunpack.c.h.b16 %v1756
    %v1948 = vunpack.c.l.b16 %v1757
    %v1949 = vunpack.c.h.b16 %v1757
    %v1950 = vunpack.c.l.b16 %v1758
    %v1951 = vunpack.c.h.b16 %v1758
    %v1952 = vunpack.c.l.b16 %v1759
    %v1953 = vunpack.c.h.b16 %v1759
    %v1954 = vunpack.c.l.b16 %v1760
    %v1955 = vunpack.c.h.b16 %v1760
    %v1956 = vunpack.c.l.b16 %v1761
    %v1957 = vunpack.c.h.b16 %v1761
    %v1958 = vunpack.c.l.b16 %v1762
    %v1959 = vunpack.c.h.b16 %v1762
    %v1960 = vunpack.c.l.b16 %v1763
    %v1961 = vunpack.c.h.b16 %v1763
    %v1962 = vpack.c.b16 %v1836, %v1834
    %v1963 = vpack.c.b16 %v1837, %v1835
    %v1964 = vpack.c.b16 %v1840, %v1838
    %v1965 = vpack.c.b16 %v1841, %v1839
    %v1966 = vpack.c.b16 %v1844, %v1842
    %v1967 = vpack.c.b16 %v1845, %v1843
    %v1968 = vpack.c.b16 %v1848, %v1846
    %v1969 = vpack.c.b16 %v1849, %v1847
    %v1970 = vpack.c.b16 %v1852, %v1850
    %v1971 = vpack.c.b16 %v1853, %v1851
    %v1972 = vpack.c.b16 %v1856, %v1854
    %v1973 = vpack.c.b16 %v1857, %v1855
    %v1974 = vpack.c.b16 %v1860, %v1858
    %v1975 = vpack.c.b16 %v1861, %v1859
    %v1976 = vpack.c.b16 %v1864, %v1862
    %v1977 = vpack.c.b16 %v1865, %v1863
    %v1978 = vpack.c.b16 %v1868, %v1866
    %v1979 = vpack.c.b16 %v1869, %v1867
    %v1980 = vpack.c.b16 %v1872, %v1870
    %v1981 = vpack.c.b16 %v1873, %v1871
    %v1982 = vpack.c.b16 %v1876, %v1874
    %v1983 = vpack.c.b16 %v1877, %v1875
    %v1984 = vpack.c.b16 %v1880, %v1878
    %v1985 = vpack.c.b16 %v1881, %v1879
    %v1986 = vpack.c.b16 %v1884, %v1882
    %v1987 = vpack.c.b16 %v1885, %v1883
    %v1988 = vpack.c.b16 %v1888, %v1886
    %v1989 = vpack.c.b16 %v1889, %v1887
    %v1990 = vpack.c.b16 %v1892, %v1890
    %v1991 = vpack.c.b16 %v1893, %v1891
    %v1992 = vpack.c.b16 %v1896, %v1894
    %v1993 = vpack.c.b16 %v1897, %v1895
    %v1994 = vpack.c.b16 %v1900, %v1898
    %v1995 = vpack.c.b16 %v1901, %v1899
    %v1996 = vpack.c.b16 %v1904, %v1902
    %v1997 = vpack.c.b16 %v1905, %v1903
    %v1998 = vpack.c.b16 %v1908, %v1906
    %v1999 = vpack.c.b16 %v1909, %v1907
    %v2000 = vpack.c.b16 %v1912, %v1910
    %v2001 = vpack.c.b16 %v1913, %v1911
    %v2002 = vpack.c.b16 %v1916, %v1914
    %v2003 = vpack.c.b16 %v1917, %v1915
    %v2004 = vpack.c.b16 %v1920, %v1918
    %v2005 = vpack.c.b16 %v1921, %v1919
    %v2006 = vpack.c.b16 %v1924, %v1922
    %v2007 = vpack.c.b16 %v1925, %v1923
    %v2008 = vpack.c.b16 %v1928, %v1926
    %v2009 = vpack.c.b16 %v1929, %v1927
    %v2010 = vpack.c.b16 %v1932, %v1930
    %v2011 = vpack.c.b16 %v1933, %v1931
    %v2012 = vpack.c.b16 %v1936, %v1934
    %v2013 = vpack.c.b16 %v1937, %v1935
    %v2014 = vpack.c.b16 %v1940, %v1938
    %v2015 = vpack.c.b16 %v1941, %v1939
    %v2016 = vpack.c.b16 %v1944, %v1942
    %v2017 = vpack.c.b16 %v1945, %v1943
    %v2018 = vpack.c.b16 %v1948, %v1946
    %v2019 = vpack.c.b16 %v1949, %v1947
    %v2020 = vpack.c.b16 %v1952, %v1950
    %v2021 = vpack.c.b16 %v1953, %v1951
    %v2022 = vpack.c.b16 %v1956, %v1954
    %v2023 = vpack.c.b16 %v1957, %v1955
    %v2024 = vpack.c.b16 %v1960, %v1958
    %v2025 = vpack.c.b16 %v1961, %v1959
    %2090 = vmatpush.bf16.msra.mxu0 %v1976
    %2091 = vmatpush.bf16.msra.mxu0 %v1974
    %2092 = vmatpush.bf16.msra.mxu0 %v1972
    %2093 = vmatpush.bf16.msra.mxu0 %v1970
    %2094 = vmatpush.bf16.msra.mxu0 %v1968
    %2095 = vmatpush.bf16.msra.mxu0 %v1966
    %2096 = vmatpush.bf16.msra.mxu0 %v1964
    %2097 = vmatpush.bf16.msra.mxu0 %v1962
    %2098 = vmatmul.bf16.gmra.mxu0 %v1696
    %v2099 = vpop.f32.mrf.mxu0
    %v2100 = vadd.f32 %v1766, %v2099
    %v2101 = vpop.f32.mrf.mxu0
    %2102 = vdwg.mxu0
    %2103 = vmatpush.bf16.msra.mxu0 %v1992
    %2104 = vmatpush.bf16.msra.mxu0 %v1990
    %2105 = vmatpush.bf16.msra.mxu0 %v1988
    %2106 = vmatpush.bf16.msra.mxu0 %v1986
    %2107 = vmatpush.bf16.msra.mxu0 %v1984
    %2108 = vmatpush.bf16.msra.mxu0 %v1982
    %2109 = vmatpush.bf16.msra.mxu0 %v1980
    %2110 = vmatpush.bf16.msra.mxu0 %v1978
    %2111 = vmatmul.bf16.gmra.mxu0 %v1697
    %v2112 = vpop.f32.mrf.mxu0
    %v2113 = vadd.f32 %v2100, %v2112
    %v2114 = vpop.f32.mrf.mxu0
    %2115 = vdwg.mxu0
    %2116 = vmatpush.bf16.msra.mxu0 %v2008
    %2117 = vmatpush.bf16.msra.mxu0 %v2006
    %2118 = vmatpush.bf16.msra.mxu0 %v2004
    %2119 = vmatpush.bf16.msra.mxu0 %v2002
    %2120 = vmatpush.bf16.msra.mxu0 %v2000
    %2121 = vmatpush.bf16.msra.mxu0 %v1998
    %2122 = vmatpush.bf16.msra.mxu0 %v1996
    %2123 = vmatpush.bf16.msra.mxu0 %v1994
    %2124 = vmatmul.bf16.gmra.mxu0 %v1698
    %v2125 = vpop.f32.mrf.mxu0
    %v2126 = vadd.f32 %v2113, %v2125
    %v2127 = vpop.f32.mrf.mxu0
    %2128 = vdwg.mxu0
    %2129 = vmatpush.bf16.msra.mxu0 %v2024
    %2130 = vmatpush.bf16.msra.mxu0 %v2022
    %2131 = vmatpush.bf16.msra.mxu0 %v2020
    %2132 = vmatpush.bf16.msra.mxu0 %v2018
    %2133 = vmatpush.bf16.msra.mxu0 %v2016
    %2134 = vmatpush.bf16.msra.mxu0 %v2014
    %2135 = vmatpush.bf16.msra.mxu0 %v2012
    %2136 = vmatpush.bf16.msra.mxu0 %v2010
    %2137 = vmatmul.bf16.gmra.mxu0 %v1699
    %v2138 = vpop.f32.mrf.mxu0
    %v2139 = vadd.f32 %v2126, %v2138
    %v2140 = vpop.f32.mrf.mxu0
    %2141 = vdwg.mxu0
    %2142 = vmatpush.bf16.msra.mxu0 %v1977
    %2143 = vmatpush.bf16.msra.mxu0 %v1975
    %2144 = vmatpush.bf16.msra.mxu0 %v1973
    %2145 = vmatpush.bf16.msra.mxu0 %v1971
    %2146 = vmatpush.bf16.msra.mxu0 %v1969
    %2147 = vmatpush.bf16.msra.mxu0 %v1967
    %2148 = vmatpush.bf16.msra.mxu0 %v1965
    %2149 = vmatpush.bf16.msra.mxu0 %v1963
    %2150 = vmatmul.bf16.gmra.mxu0 %v1696
    %v2151 = vpop.f32.mrf.mxu0
    %v2152 = vadd.f32 %v1767, %v2151
    %v2153 = vpop.f32.mrf.mxu0
    %2154 = vdwg.mxu0
    %2155 = vmatpush.bf16.msra.mxu0 %v1993
    %2156 = vmatpush.bf16.msra.mxu0 %v1991
    %2157 = vmatpush.bf16.msra.mxu0 %v1989
    %2158 = vmatpush.bf16.msra.mxu0 %v1987
    %2159 = vmatpush.bf16.msra.mxu0 %v1985
    %2160 = vmatpush.bf16.msra.mxu0 %v1983
    %2161 = vmatpush.bf16.msra.mxu0 %v1981
    %2162 = vmatpush.bf16.msra.mxu0 %v1979
    %2163 = vmatmul.bf16.gmra.mxu0 %v1697
    %v2164 = vpop.f32.mrf.mxu0
    %v2165 = vadd.f32 %v2152, %v2164
    %v2166 = vpop.f32.mrf.mxu0
    %2167 = vdwg.mxu0
    %2168 = vmatpush.bf16.msra.mxu0 %v2009
    %2169 = vmatpush.bf16.msra.mxu0 %v2007
    %2170 = vmatpush.bf16.msra.mxu0 %v2005
    %2171 = vmatpush.bf16.msra.mxu0 %v2003
    %2172 = vmatpush.bf16.msra.mxu0 %v2001
    %2173 = vmatpush.bf16.msra.mxu0 %v1999
    %2174 = vmatpush.bf16.msra.mxu0 %v1997
    %2175 = vmatpush.bf16.msra.mxu0 %v1995
    %2176 = vmatmul.bf16.gmra.mxu0 %v1698
    %v2177 = vpop.f32.mrf.mxu0
    %v2178 = vadd.f32 %v2165, %v2177
    %v2179 = vpop.f32.mrf.mxu0
    %2180 = vdwg.mxu0
    %2181 = vmatpush.bf16.msra.mxu0 %v2025
    %2182 = vmatpush.bf16.msra.mxu0 %v2023
    %2183 = vmatpush.bf16.msra.mxu0 %v2021
    %2184 = vmatpush.bf16.msra.mxu0 %v2019
    %2185 = vmatpush.bf16.msra.mxu0 %v2017
    %2186 = vmatpush.bf16.msra.mxu0 %v2015
    %2187 = vmatpush.bf16.msra.mxu0 %v2013
    %2188 = vmatpush.bf16.msra.mxu0 %v2011
    %2189 = vmatmul.bf16.gmra.mxu0 %v1699
    %v2190 = vpop.f32.mrf.mxu0
    %v2191 = vadd.f32 %v2178, %v2190
    %v2192 = vpop.f32.mrf.mxu0
    %2193 = vdwg.mxu0
    %v2194 = vmax.f32 %v2139, 0.0
    %v2195 = vmax.f32 %v2191, 0.0
    %v2196 = vpack.c.bf16 %v2194, %v2194
    %v2197 = vpack.c.bf16 %v2195, %v2195
    %v2198 = vld [vmem:[#allocation10] sm:$0xf]
    %v2199 = vld [vmem:[#allocation10 + $0x4] sm:$0xf]
    %v2200 = vld [vmem:[#allocation10 + $0x8] sm:$0xf]
    %v2201 = vld [vmem:[#allocation10 + $0xc] sm:$0xf]
    %v2202 = vld [vmem:[#allocation10 + $0x10] sm:$0xf]
    %v2203 = vld [vmem:[#allocation10 + $0x14] sm:$0xf]
    %v2204 = vld [vmem:[#allocation10 + $0x18] sm:$0xf]
    %v2205 = vld [vmem:[#allocation10 + $0x1c] sm:$0xf]
    %v2206 = vld [vmem:[#allocation10 + $0x20] sm:$0xf]
    %v2207 = vld [vmem:[#allocation10 + $0x24] sm:$0xf]
    %v2208 = vld [vmem:[#allocation10 + $0x28] sm:$0xf]
    %v2209 = vld [vmem:[#allocation10 + $0x2c] sm:$0xf]
    %v2210 = vld [vmem:[#allocation10 + $0x30] sm:$0xf]
    %v2211 = vld [vmem:[#allocation10 + $0x34] sm:$0xf]
    %v2212 = vld [vmem:[#allocation10 + $0x38] sm:$0xf]
    %v2213 = vld [vmem:[#allocation10 + $0x3c] sm:$0xf]
    %v2214 = vld [vmem:[#allocation10 + $0x40] sm:$0xf]
    %v2215 = vld [vmem:[#allocation10 + $0x44] sm:$0xf]
    %v2216 = vld [vmem:[#allocation10 + $0x48] sm:$0xf]
    %v2217 = vld [vmem:[#allocation10 + $0x4c] sm:$0xf]
    %v2218 = vld [vmem:[#allocation10 + $0x50] sm:$0xf]
    %v2219 = vld [vmem:[#allocation10 + $0x54] sm:$0xf]
    %v2220 = vld [vmem:[#allocation10 + $0x58] sm:$0xf]
    %v2221 = vld [vmem:[#allocation10 + $0x5c] sm:$0xf]
    %v2222 = vld [vmem:[#allocation10 + $0x60] sm:$0xf]
    %v2223 = vld [vmem:[#allocation10 + $0x64] sm:$0xf]
    %v2224 = vld [vmem:[#allocation10 + $0x68] sm:$0xf]
    %v2225 = vld [vmem:[#allocation10 + $0x6c] sm:$0xf]
    %v2226 = vld [vmem:[#allocation10 + $0x70] sm:$0xf]
    %v2227 = vld [vmem:[#allocation10 + $0x74] sm:$0xf]
    %v2228 = vld [vmem:[#allocation10 + $0x78] sm:$0xf]
    %v2229 = vld [vmem:[#allocation10 + $0x7c] sm:$0xf]
    %v2230 = vld [vmem:[%s6] sm:$0x1]
    %v2232 = vperm.slane %v2230, 0
    %v2266 = vunpack.c.l.b16 %v2198
    %v2267 = vunpack.c.l.b16 %v2199
    %v2268 = vunpack.c.l.b16 %v2200
    %v2269 = vunpack.c.l.b16 %v2201
    %v2270 = vunpack.c.l.b16 %v2202
    %v2271 = vunpack.c.l.b16 %v2203
    %v2272 = vunpack.c.l.b16 %v2204
    %v2273 = vunpack.c.l.b16 %v2205
    %v2274 = vunpack.c.l.b16 %v2206
    %v2275 = vunpack.c.l.b16 %v2207
    %v2276 = vunpack.c.l.b16 %v2208
    %v2277 = vunpack.c.l.b16 %v2209
    %v2278 = vunpack.c.l.b16 %v2210
    %v2279 = vunpack.c.l.b16 %v2211
    %v2280 = vunpack.c.l.b16 %v2212
    %v2281 = vunpack.c.l.b16 %v2213
    %v2282 = vunpack.c.l.b16 %v2214
    %v2283 = vunpack.c.l.b16 %v2215
    %v2284 = vunpack.c.l.b16 %v2216
    %v2285 = vunpack.c.l.b16 %v2217
    %v2286 = vunpack.c.l.b16 %v2218
    %v2287 = vunpack.c.l.b16 %v2219
    %v2288 = vunpack.c.l.b16 %v2220
    %v2289 = vunpack.c.l.b16 %v2221
    %v2290 = vunpack.c.l.b16 %v2222
    %v2291 = vunpack.c.l.b16 %v2223
    %v2292 = vunpack.c.l.b16 %v2224
    %v2293 = vunpack.c.l.b16 %v2225
    %v2294 = vunpack.c.l.b16 %v2226
    %v2295 = vunpack.c.l.b16 %v2227
    %v2296 = vunpack.c.l.b16 %v2228
    %v2297 = vunpack.c.l.b16 %v2229
    %v2298 = vpack.c.b16 %v2267, %v2266
    %v2299 = vpack.c.b16 %v2269, %v2268
    %v2300 = vpack.c.b16 %v2271, %v2270
    %v2301 = vpack.c.b16 %v2273, %v2272
    %v2302 = vpack.c.b16 %v2275, %v2274
    %v2303 = vpack.c.b16 %v2277, %v2276
    %v2304 = vpack.c.b16 %v2279, %v2278
    %v2305 = vpack.c.b16 %v2281, %v2280
    %v2306 = vpack.c.b16 %v2283, %v2282
    %v2307 = vpack.c.b16 %v2285, %v2284
    %v2308 = vpack.c.b16 %v2287, %v2286
    %v2309 = vpack.c.b16 %v2289, %v2288
    %v2310 = vpack.c.b16 %v2291, %v2290
    %v2311 = vpack.c.b16 %v2293, %v2292
    %v2312 = vpack.c.b16 %v2295, %v2294
    %v2313 = vpack.c.b16 %v2297, %v2296
    %2330 = vmatpush.bf16.msra.mxu0 %v2305
    %2331 = vmatpush.bf16.msra.mxu0 %v2304
    %2332 = vmatpush.bf16.msra.mxu0 %v2303
    %2333 = vmatpush.bf16.msra.mxu0 %v2302
    %2334 = vmatpush.bf16.msra.mxu0 %v2301
    %2335 = vmatpush.bf16.msra.mxu0 %v2300
    %2336 = vmatpush.bf16.msra.mxu0 %v2299
    %2337 = vmatpush.bf16.msra.mxu0 %v2298
    %2338 = vmatmul.bf16.gmra.mxu0 %v2196
    %v2339 = vpop.f32.mrf.mxu0
    %v2340 = vadd.f32 %v2232, %v2339
    %v2341 = vpop.f32.mrf.mxu0
    %2342 = vdwg.mxu0
    %2343 = vmatpush.bf16.msra.mxu0 %v2313
    %2344 = vmatpush.bf16.msra.mxu0 %v2312
    %2345 = vmatpush.bf16.msra.mxu0 %v2311
    %2346 = vmatpush.bf16.msra.mxu0 %v2310
    %2347 = vmatpush.bf16.msra.mxu0 %v2309
    %2348 = vmatpush.bf16.msra.mxu0 %v2308
    %2349 = vmatpush.bf16.msra.mxu0 %v2307
    %2350 = vmatpush.bf16.msra.mxu0 %v2306
    %2351 = vmatmul.bf16.gmra.mxu0 %v2197
    %v2352 = vpop.f32.mrf.mxu0
    %v2353 = vadd.f32 %v2340, %v2352
    %v2354 = vpop.f32.mrf.mxu0
    %2355 = vdwg.mxu0
    %v2356 = vmax.f32 %v2353, 0.0
    %v2357 = vpack.c.bf16 %v2356, %v2356
    %v2358 = vld [vmem:[#allocation11] sm:$0xf]
    %v2359 = vld [vmem:[#allocation11 + $0x4] sm:$0xf]
    %v2360 = vld [vmem:[#allocation11 + $0x8] sm:$0xf]
    %v2361 = vld [vmem:[#allocation11 + $0xc] sm:$0xf]
    %v2362 = vld [vmem:[#allocation11 + $0x10] sm:$0xf]
    %v2363 = vld [vmem:[#allocation11 + $0x14] sm:$0xf]
    %v2364 = vld [vmem:[#allocation11 + $0x18] sm:$0xf]
    %v2365 = vld [vmem:[#allocation11 + $0x1c] sm:$0xf]
    %v2366 = vld [vmem:[#allocation11 + $0x20] sm:$0xf]
    %v2367 = vld [vmem:[#allocation11 + $0x24] sm:$0xf]
    %v2368 = vld [vmem:[#allocation11 + $0x28] sm:$0xf]
    %v2369 = vld [vmem:[#allocation11 + $0x2c] sm:$0xf]
    %v2370 = vld [vmem:[#allocation11 + $0x30] sm:$0xf]
    %v2371 = vld [vmem:[#allocation11 + $0x34] sm:$0xf]
    %v2372 = vld [vmem:[#allocation11 + $0x38] sm:$0xf]
    %v2373 = vld [vmem:[#allocation11 + $0x3c] sm:$0xf]
    %v2374 = vld [vmem:[%s8] sm:$0x1]
    %v2376 = vperm.slane %v2374, 0
    %v2394 = vunpack.c.l.b16 %v2358
    %v2395 = vunpack.c.l.b16 %v2359
    %v2396 = vunpack.c.l.b16 %v2360
    %v2397 = vunpack.c.l.b16 %v2361
    %v2398 = vunpack.c.l.b16 %v2362
    %v2399 = vunpack.c.l.b16 %v2363
    %v2400 = vunpack.c.l.b16 %v2364
    %v2401 = vunpack.c.l.b16 %v2365
    %v2402 = vunpack.c.l.b16 %v2366
    %v2403 = vunpack.c.l.b16 %v2367
    %v2404 = vunpack.c.l.b16 %v2368
    %v2405 = vunpack.c.l.b16 %v2369
    %v2406 = vunpack.c.l.b16 %v2370
    %v2407 = vunpack.c.l.b16 %v2371
    %v2408 = vunpack.c.l.b16 %v2372
    %v2409 = vunpack.c.l.b16 %v2373
    %v2410 = vpack.c.b16 %v2395, %v2394
    %v2411 = vpack.c.b16 %v2397, %v2396
    %v2412 = vpack.c.b16 %v2399, %v2398
    %v2413 = vpack.c.b16 %v2401, %v2400
    %v2414 = vpack.c.b16 %v2403, %v2402
    %v2415 = vpack.c.b16 %v2405, %v2404
    %v2416 = vpack.c.b16 %v2407, %v2406
    %v2417 = vpack.c.b16 %v2409, %v2408
    %2426 = vmatpush.bf16.msra.mxu0 %v2417
    %2427 = vmatpush.bf16.msra.mxu0 %v2416
    %2428 = vmatpush.bf16.msra.mxu0 %v2415
    %2429 = vmatpush.bf16.msra.mxu0 %v2414
    %2430 = vmatpush.bf16.msra.mxu0 %v2413
    %2431 = vmatpush.bf16.msra.mxu0 %v2412
    %2432 = vmatpush.bf16.msra.mxu0 %v2411
    %2433 = vmatpush.bf16.msra.mxu0 %v2410
    %2434 = vmatmul.bf16.gmra.mxu0 %v2357
    %v2435 = vpop.f32.mrf.mxu0
    %v2436 = vadd.f32 %v2376, %v2435
    %v2437 = vpop.f32.mrf.mxu0
    %2438 = vdwg.mxu0
    %v2439 = vpack.c.bf16 %v2436, %v2436
    %2440 = vst [vmem:[#allocation13] sm:$0xf] %v2439
    // Predicated region
    $region62: #{tpu_custom_call.1} parent=1 // pred_check
      _
    $region63: #{tpu_custom_call.1} parent=1 // pred_check_branch
      %2442 = sbr.rel (0) target = $region65
    $region64: #{tpu_custom_call.1} parent=1 // pred_region
      %2444 = vsyncadd [#allocation4], 0
      %s2446 = sshll.u32 [#allocation13], 4
      %s2447 = int_to_ptr.vmem [resolvable:$true] %s2446
      %s2448 = sshll.u32 %s9, 4
      %s2449 = int_to_ptr.hbm [resolvable:$true] %s2448
      %2451 = dma.vmem_to_hbm [thread:$0]  %s2447, 64, %s2449, [#allocation4]
    $region65: #{tpu_custom_call.1} parent=1 // pred_fallthru
      _
    // Predicated region
    $region66: #{tpu_custom_call.1} parent=1 // pred_check
      _
    $region67: #{tpu_custom_call.1} parent=1 // pred_check_branch
      %2453 = sbr.rel (0) target = $region69
    $region68: #{tpu_custom_call.1} parent=1 // pred_region
      %2455 = dma.done [#allocation4], 64
    $region69: #{tpu_custom_call.1} parent=1 // pred_fallthru
      _
    %2456 = vsyncpa [#allocation3], 1
    %2457 = vsyncpa [#allocation6], 1
    %2458 = vsyncpa [#allocation9], 1
    %2459 = vsyncpa [#allocation12], 1
    %2460 = vsyncpa [#allocation4], 1

// kernel: tpu_custom_call.1
$region0: #{tpu_custom_call.1}
  #allocation0 [shape = 'u32[]', space=smem, size = 0x4, offset = 0x4, fixed_abs, tag = 'smem constant byte address 0x4 - core index']
  #allocation1 [shape = 'u32[72,128]{1,0:T(1,128)}', space=vmem, size = 0x9000, scoped, tag = 'internal scratch']
  %s0 = inlined_call_operand.hbm [shape: f32[8,784], index: 0, kind: input, shape index: {}]
  %s1 = inlined_call_operand.hbm [shape: bf16[784,512], index: 1, kind: input, shape index: {}]
  %s2 = inlined_call_operand.hbm [shape: f32[1,512], index: 2, kind: input, shape index: {}]
  %s3 = inlined_call_operand.hbm [shape: bf16[512,256], index: 3, kind: input, shape index: {}]
  %s4 = inlined_call_operand.vmem [shape: f32[1,256], index: 4, kind: input, shape index: {}]
  %s5 = inlined_call_operand.hbm [shape: bf16[256,128], index: 5, kind: input, shape index: {}]
  %s6 = inlined_call_operand.vmem [shape: f32[1,128], index: 6, kind: input, shape index: {}]
  %s7 = inlined_call_operand.hbm [shape: bf16[128,128], index: 7, kind: input, shape index: {}]
  %s8 = inlined_call_operand.vmem [shape: f32[1,128], index: 8, kind: input, shape index: {}]
  %s9 = inlined_call_operand.hbm [shape: bf16[8,128], index: 9, kind: output, shape index: {}]
  %s10 = sld [smem:[#allocation0]]
  $region70: #{tpu_custom_call.1} parent=0
    _
  %s12 = ssub.s32 1, %s10
  %s13 = scalar_select 0, %s12, %s10
  $region1: #{tpu_custom_call.1} parent=0
    #allocation2 [shape = 'u8[28672]{0}', space=vmem, size = 0x7000, scoped, tag = 'input window, operand 0, single buffered']
    #allocation3 [shape = 's32[1]{0}', space=sflag, size = 0x4, scoped, tag = 'scoped memory for tpu_custom_call.1']
    #allocation4 [shape = 's32[1]{0}', space=sflag, size = 0x4, scoped, tag = 'scoped memory for tpu_custom_call.1']
    #allocation5 [shape = 'u8[802816]{0}', space=vmem, size = 0xc4000, scoped, tag = 'input window, operand 1, single buffered']
    #allocation6 [shape = 's32[1]{0}', space=sflag, size = 0x4, scoped, tag = 'scoped memory for tpu_custom_call.1']
    #allocation7 [shape = 'u8[2048]{0}', space=vmem, size = 0x800, scoped, tag = 'input window, operand 2, single buffered']
    #allocation8 [shape = 'u8[262144]{0}', space=vmem, size = 0x40000, scoped, tag = 'input window, operand 3, single buffered']
    #allocation9 [shape = 's32[1]{0}', space=sflag, size = 0x4, scoped, tag = 'scoped memory for tpu_custom_call.1']
    #allocation10 [shape = 'u8[65536]{0}', space=vmem, size = 0x10000, scoped, tag = 'input window, operand 5, single buffered']
    #allocation11 [shape = 'u8[32768]{0}', space=vmem, size = 0x8000, scoped, tag = 'input window, operand 7, single buffered']
    #allocation12 [shape = 's32[1]{0}', space=sflag, size = 0x4, scoped, tag = 'scoped memory for tpu_custom_call.1']
    #allocation13 [shape = 'u8[2048]{0}', space=vmem, size = 0x800, scoped, tag = 'output window, operand 0, single buffered']
    %14 = vsyncpa [#allocation3], 0
    %15 = vsyncpa [#allocation6], 0
    %16 = vsyncpa [#allocation9], 0
    %17 = vsyncpa [#allocation12], 0
    %18 = vsyncpa [#allocation4], 0
    // Predicated region
    $region2: #{tpu_custom_call.1} parent=1 // pred_check
      _
    $region3: #{tpu_custom_call.1} parent=1 // pred_check_branch
      %20 = sbr.rel (0) target = $region5
    $region4: #{tpu_custom_call.1} parent=1 // pred_region
      %22 = vsyncadd [#allocation3], 0
      %s24 = sshll.u32 %s0, 4
      %s25 = int_to_ptr.hbm [resolvable:$true] %s24
      %s26 = sshll.u32 [#allocation2], 4
      %s27 = int_to_ptr.vmem [resolvable:$true] %s26
      %29 = dma.hbm_to_vmem [thread:$0]  %s25, 896, %s27, [#allocation3]
    $region5: #{tpu_custom_call.1} parent=1 // pred_fallthru
      _
    // Predicated region
    $region6: #{tpu_custom_call.1} parent=1 // pred_check
      _
    $region7: #{tpu_custom_call.1} parent=1 // pred_check_branch
      %31 = sbr.rel (0) target = $region9
    $region8: #{tpu_custom_call.1} parent=1 // pred_region
      %33 = vsyncadd [#allocation6], 0
      %s34 = sshll.u32 %s1, 4
      %s35 = int_to_ptr.hbm [resolvable:$true] %s34
      %s36 = sshll.u32 [#allocation5], 4
      %s37 = int_to_ptr.vmem [resolvable:$true] %s36
      %42 = dma.hbm_to_vmem [thread:$0]  %s35, 25088, %s37, [#allocation6], 256, 256, 16
    $region9: #{tpu_custom_call.1} parent=1 // pred_fallthru
      _
    // Predicated region
    $region10: #{tpu_custom_call.1} parent=1 // pred_check
      _
    $region11: #{tpu_custom_call.1} parent=1 // pred_check_branch
      %44 = sbr.rel (0) target = $region13
    $region12: #{tpu_custom_call.1} parent=1 // pred_region
      %46 = vsyncadd [#allocation6], 0
      %s48 = sshll.u32 %s2, 4
      %s49 = int_to_ptr.hbm [resolvable:$true] %s48
      %s50 = sshll.u32 [#allocation7], 4
      %s51 = int_to_ptr.vmem [resolvable:$true] %s50
      %53 = dma.hbm_to_vmem [thread:$0]  %s49, 64, %s51, [#allocation6]
    $region13: #{tpu_custom_call.1} parent=1 // pred_fallthru
      _
    // Predicated region
    $region14: #{tpu_custom_call.1} parent=1 // pred_check
      _
    $region15: #{tpu_custom_call.1} parent=1 // pred_check_branch
      %55 = sbr.rel (0) target = $region17
    $region16: #{tpu_custom_call.1} parent=1 // pred_region
      %57 = vsyncadd [#allocation9], 0
      %s58 = sshll.u32 %s3, 4
      %s59 = int_to_ptr.hbm [resolvable:$true] %s58
      %s60 = sshll.u32 [#allocation8], 4
      %s61 = int_to_ptr.vmem [resolvable:$true] %s60
      %66 = dma.hbm_to_vmem [thread:$0]  %s59, 8192, %s61, [#allocation9], 128, 128, 8
    $region17: #{tpu_custom_call.1} parent=1 // pred_fallthru
      _
    // Predicated region
    $region18: #{tpu_custom_call.1} parent=1 // pred_check
      _
    $region19: #{tpu_custom_call.1} parent=1 // pred_check_branch
      %68 = sbr.rel (0) target = $region21
    $region20: #{tpu_custom_call.1} parent=1 // pred_region
      _
    $region21: #{tpu_custom_call.1} parent=1 // pred_fallthru
      _
    // Predicated region
    $region22: #{tpu_custom_call.1} parent=1 // pred_check
      _
    $region23: #{tpu_custom_call.1} parent=1 // pred_check_branch
      %70 = sbr.rel (0) target = $region25
    $region24: #{tpu_custom_call.1} parent=1 // pred_region
      %72 = vsyncadd [#allocation9], 0
      %s73 = sshll.u32 %s5, 4
      %s74 = int_to_ptr.hbm [resolvable:$true] %s73
      %s75 = sshll.u32 [#allocation10], 4
      %s76 = int_to_ptr.vmem [resolvable:$true] %s75
      %81 = dma.hbm_to_vmem [thread:$0]  %s74, 2048, %s76, [#allocation9], 64, 64, 4
    $region25: #{tpu_custom_call.1} parent=1 // pred_fallthru
      _
    // Predicated region
    $region26: #{tpu_custom_call.1} parent=1 // pred_check
      _
    $region27: #{tpu_custom_call.1} parent=1 // pred_check_branch
      %83 = sbr.rel (0) target = $region29
    $region28: #{tpu_custom_call.1} parent=1 // pred_region
      _
    $region29: #{tpu_custom_call.1} parent=1 // pred_fallthru
      _
    // Predicated region
    $region30: #{tpu_custom_call.1} parent=1 // pred_check
      _
    $region31: #{tpu_custom_call.1} parent=1 // pred_check_branch
      %85 = sbr.rel (0) target = $region33
    $region32: #{tpu_custom_call.1} parent=1 // pred_region
      %87 = vsyncadd [#allocation12], 0
      %s88 = sshll.u32 %s7, 4
      %s89 = int_to_ptr.hbm [resolvable:$true] %s88
      %s90 = sshll.u32 [#allocation11], 4
      %s91 = int_to_ptr.vmem [resolvable:$true] %s90
      %96 = dma.hbm_to_vmem [thread:$0]  %s89, 1024, %s91, [#allocation12], 64, 64, 4
    $region33: #{tpu_custom_call.1} parent=1 // pred_fallthru
      _
    // Predicated region
    $region34: #{tpu_custom_call.1} parent=1 // pred_check
      _
    $region35: #{tpu_custom_call.1} parent=1 // pred_check_branch
      %98 = sbr.rel (0) target = $region37
    $region36: #{tpu_custom_call.1} parent=1 // pred_region
      _
    $region37: #{tpu_custom_call.1} parent=1 // pred_fallthru
      _
    // Predicated region
    $region38: #{tpu_custom_call.1} parent=1 // pred_check
      _
    $region39: #{tpu_custom_call.1} parent=1 // pred_check_branch
      %100 = sbr.rel (0) target = $region41
    $region40: #{tpu_custom_call.1} parent=1 // pred_region
      %102 = dma.done [#allocation3], 896
    $region41: #{tpu_custom_call.1} parent=1 // pred_fallthru
      _
    // Predicated region
    $region42: #{tpu_custom_call.1} parent=1 // pred_check
      _
    $region43: #{tpu_custom_call.1} parent=1 // pred_check_branch
      %104 = sbr.rel (0) target = $region45
    $region44: #{tpu_custom_call.1} parent=1 // pred_region
      %106 = dma.done [#allocation6], 25088
    $region45: #{tpu_custom_call.1} parent=1 // pred_fallthru
      _
    // Predicated region
    $region46: #{tpu_custom_call.1} parent=1 // pred_check
      _
    $region47: #{tpu_custom_call.1} parent=1 // pred_check_branch
      %108 = sbr.rel (0) target = $region49
    $region48: #{tpu_custom_call.1} parent=1 // pred_region
      %110 = dma.done [#allocation6], 64
    $region49: #{tpu_custom_call.1} parent=1 // pred_fallthru
      _
    // Predicated region
    $region50: #{tpu_custom_call.1} parent=1 // pred_check
      _
    $region51: #{tpu_custom_call.1} parent=1 // pred_check_branch
      %112 = sbr.rel (0) target = $region53
    $region52: #{tpu_custom_call.1} parent=1 // pred_region
      %114 = dma.done [#allocation9], 8192
    $region53: #{tpu_custom_call.1} parent=1 // pred_fallthru
      _
    // Predicated region
    $region54: #{tpu_custom_call.1} parent=1 // pred_check
      _
    $region55: #{tpu_custom_call.1} parent=1 // pred_check_branch
      %116 = sbr.rel (0) target = $region57
    $region56: #{tpu_custom_call.1} parent=1 // pred_region
      %118 = dma.done [#allocation9], 2048
    $region57: #{tpu_custom_call.1} parent=1 // pred_fallthru
      _
    // Predicated region
    $region58: #{tpu_custom_call.1} parent=1 // pred_check
      _
    $region59: #{tpu_custom_call.1} parent=1 // pred_check_branch
      %120 = sbr.rel (0) target = $region61
    $region60: #{tpu_custom_call.1} parent=1 // pred_region
      %122 = dma.done [#allocation12], 1024
    $region61: #{tpu_custom_call.1} parent=1 // pred_fallthru
      _
    %v124 = vld [vmem:[#allocation2] sm:$0xff]
    %v125 = vld [vmem:[#allocation2 + $0x8] sm:$0xff]
    %v126 = vld [vmem:[#allocation2 + $0x10] sm:$0xff]
    %v127 = vld [vmem:[#allocation2 + $0x18] sm:$0xff]
    %v128 = vld [vmem:[#allocation2 + $0x20] sm:$0xff]
    %v129 = vld [vmem:[#allocation2 + $0x28] sm:$0xff]
    %v130 = vld [vmem:[#allocation2 + $0x30] sm:$0xff]
    %v131 = vpack.c.bf16 %v124, %v124
    %v132 = vpack.c.bf16 %v125, %v125
    %v133 = vpack.c.bf16 %v126, %v126
    %v134 = vpack.c.bf16 %v127, %v127
    %v135 = vpack.c.bf16 %v128, %v128
    %v136 = vpack.c.bf16 %v129, %v129
    %v137 = vpack.c.bf16 %v130, %v130
    %v138 = vld [vmem:[#allocation5] sm:$0xff]
    %v139 = vld [vmem:[#allocation5 + $0x8] sm:$0xff]
    %v140 = vld [vmem:[#allocation5 + $0x10] sm:$0xff]
    %v141 = vld [vmem:[#allocation5 + $0x18] sm:$0xff]
    %v142 = vld [vmem:[#allocation5 + $0x20] sm:$0xff]
    %v143 = vld [vmem:[#allocation5 + $0x28] sm:$0xff]
    %v144 = vld [vmem:[#allocation5 + $0x30] sm:$0xff]
    %v145 = vld [vmem:[#allocation5 + $0x38] sm:$0xff]
    %v146 = vld [vmem:[#allocation5 + $0x40] sm:$0xff]
    %v147 = vld [vmem:[#allocation5 + $0x48] sm:$0xff]
    %v148 = vld [vmem:[#allocation5 + $0x50] sm:$0xff]
    %v149 = vld [vmem:[#allocation5 + $0x58] sm:$0xff]
    %v150 = vld [vmem:[#allocation5 + $0x60] sm:$0xff]
    %v151 = vld [vmem:[#allocation5 + $0x68] sm:$0xff]
    %v152 = vld [vmem:[#allocation5 + $0x70] sm:$0xff]
    %v153 = vld [vmem:[#allocation5 + $0x78] sm:$0xff]
    %v154 = vld [vmem:[#allocation5 + $0x80] sm:$0xff]
    %v155 = vld [vmem:[#allocation5 + $0x88] sm:$0xff]
    %v156 = vld [vmem:[#allocation5 + $0x90] sm:$0xff]
    %v157 = vld [vmem:[#allocation5 + $0x98] sm:$0xff]
    %v158 = vld [vmem:[#allocation5 + $0xa0] sm:$0xff]
    %v159 = vld [vmem:[#allocation5 + $0xa8] sm:$0xff]
    %v160 = vld [vmem:[#allocation5 + $0xb0] sm:$0xff]
    %v161 = vld [vmem:[#allocation5 + $0xb8] sm:$0xff]
    %v162 = vld [vmem:[#allocation5 + $0xc0] sm:$0xff]
    %v163 = vld [vmem:[#allocation5 + $0xc8] sm:$0xff]
    %v164 = vld [vmem:[#allocation5 + $0xd0] sm:$0xff]
    %v165 = vld [vmem:[#allocation5 + $0xd8] sm:$0xff]
    %v166 = vld [vmem:[#allocation5 + $0xe0] sm:$0xff]
    %v167 = vld [vmem:[#allocation5 + $0xe8] sm:$0xff]
    %v168 = vld [vmem:[#allocation5 + $0xf0] sm:$0xff]
    %v169 = vld [vmem:[#allocation5 + $0xf8] sm:$0xff]
    %v170 = vld [vmem:[#allocation5 + $0x100] sm:$0xff]
    %v171 = vld [vmem:[#allocation5 + $0x108] sm:$0xff]
    %v172 = vld [vmem:[#allocation5 + $0x110] sm:$0xff]
    %v173 = vld [vmem:[#allocation5 + $0x118] sm:$0xff]
    %v174 = vld [vmem:[#allocation5 + $0x120] sm:$0xff]
    %v175 = vld [vmem:[#allocation5 + $0x128] sm:$0xff]
    %v176 = vld [vmem:[#allocation5 + $0x130] sm:$0xff]
    %v177 = vld [vmem:[#allocation5 + $0x138] sm:$0xff]
    %v178 = vld [vmem:[#allocation5 + $0x140] sm:$0xff]
    %v179 = vld [vmem:[#allocation5 + $0x148] sm:$0xff]
    %v180 = vld [vmem:[#allocation5 + $0x150] sm:$0xff]
    %v181 = vld [vmem:[#allocation5 + $0x158] sm:$0xff]
    %v182 = vld [vmem:[#allocation5 + $0x160] sm:$0xff]
    %v183 = vld [vmem:[#allocation5 + $0x168] sm:$0xff]
    %v184 = vld [vmem:[#allocation5 + $0x170] sm:$0xff]
    %v185 = vld [vmem:[#allocation5 + $0x178] sm:$0xff]
    %v186 = vld [vmem:[#allocation5 + $0x180] sm:$0xff]
    %v187 = vld [vmem:[#allocation5 + $0x188] sm:$0xff]
    %v188 = vld [vmem:[#allocation5 + $0x190] sm:$0xff]
    %v189 = vld [vmem:[#allocation5 + $0x198] sm:$0xff]
    %v190 = vld [vmem:[#allocation5 + $0x1a0] sm:$0xff]
    %v191 = vld [vmem:[#allocation5 + $0x1a8] sm:$0xff]
    %v192 = vld [vmem:[#allocation5 + $0x1b0] sm:$0xff]
    %v193 = vld [vmem:[#allocation5 + $0x1b8] sm:$0xff]
    %v194 = vld [vmem:[#allocation5 + $0x1c0] sm:$0xff]
    %v195 = vld [vmem:[#allocation5 + $0x1c8] sm:$0xff]
    %v196 = vld [vmem:[#allocation5 + $0x1d0] sm:$0xff]
    %v197 = vld [vmem:[#allocation5 + $0x1d8] sm:$0xff]
    %v198 = vld [vmem:[#allocation5 + $0x1e0] sm:$0xff]
    %v199 = vld [vmem:[#allocation5 + $0x1e8] sm:$0xff]
    %v200 = vld [vmem:[#allocation5 + $0x1f0] sm:$0xff]
    %v201 = vld [vmem:[#allocation5 + $0x1f8] sm:$0xff]
    %v202 = vld [vmem:[#allocation5 + $0x200] sm:$0xff]
    %v203 = vld [vmem:[#allocation5 + $0x208] sm:$0xff]
    %v204 = vld [vmem:[#allocation5 + $0x210] sm:$0xff]
    %v205 = vld [vmem:[#allocation5 + $0x218] sm:$0xff]
    %v206 = vld [vmem:[#allocation5 + $0x220] sm:$0xff]
    %v207 = vld [vmem:[#allocation5 + $0x228] sm:$0xff]
    %v208 = vld [vmem:[#allocation5 + $0x230] sm:$0xff]
    %v209 = vld [vmem:[#allocation5 + $0x238] sm:$0xff]
    %v210 = vld [vmem:[#allocation5 + $0x240] sm:$0xff]
    %v211 = vld [vmem:[#allocation5 + $0x248] sm:$0xff]
    %v212 = vld [vmem:[#allocation5 + $0x250] sm:$0xff]
    %v213 = vld [vmem:[#allocation5 + $0x258] sm:$0xff]
    %v214 = vld [vmem:[#allocation5 + $0x260] sm:$0xff]
    %v215 = vld [vmem:[#allocation5 + $0x268] sm:$0xff]
    %v216 = vld [vmem:[#allocation5 + $0x270] sm:$0xff]
    %v217 = vld [vmem:[#allocation5 + $0x278] sm:$0xff]
    %v218 = vld [vmem:[#allocation5 + $0x280] sm:$0xff]
    %v219 = vld [vmem:[#allocation5 + $0x288] sm:$0xff]
    %v220 = vld [vmem:[#allocation5 + $0x290] sm:$0xff]
    %v221 = vld [vmem:[#allocation5 + $0x298] sm:$0xff]
    %v222 = vld [vmem:[#allocation5 + $0x2a0] sm:$0xff]
    %v223 = vld [vmem:[#allocation5 + $0x2a8] sm:$0xff]
    %v224 = vld [vmem:[#allocation5 + $0x2b0] sm:$0xff]
    %v225 = vld [vmem:[#allocation5 + $0x2b8] sm:$0xff]
    %v226 = vld [vmem:[#allocation5 + $0x2c0] sm:$0xff]
    %v227 = vld [vmem:[#allocation5 + $0x2c8] sm:$0xff]
    %v228 = vld [vmem:[#allocation5 + $0x2d0] sm:$0xff]
    %v229 = vld [vmem:[#allocation5 + $0x2d8] sm:$0xff]
    %v230 = vld [vmem:[#allocation5 + $0x2e0] sm:$0xff]
    %v231 = vld [vmem:[#allocation5 + $0x2e8] sm:$0xff]
    %v232 = vld [vmem:[#allocation5 + $0x2f0] sm:$0xff]
    %v233 = vld [vmem:[#allocation5 + $0x2f8] sm:$0xff]
    %v234 = vld [vmem:[#allocation5 + $0x300] sm:$0xff]
    %v235 = vld [vmem:[#allocation5 + $0x308] sm:$0xff]
    %v236 = vld [vmem:[#allocation5 + $0x310] sm:$0xff]
    %v237 = vld [vmem:[#allocation5 + $0x318] sm:$0xff]
    %v238 = vld [vmem:[#allocation5 + $0x320] sm:$0xff]
    %v239 = vld [vmem:[#allocation5 + $0x328] sm:$0xff]
    %v240 = vld [vmem:[#allocation5 + $0x330] sm:$0xff]
    %v241 = vld [vmem:[#allocation5 + $0x338] sm:$0xff]
    %v242 = vld [vmem:[#allocation5 + $0x340] sm:$0xff]
    %v243 = vld [vmem:[#allocation5 + $0x348] sm:$0xff]
    %v244 = vld [vmem:[#allocation5 + $0x350] sm:$0xff]
    %v245 = vld [vmem:[#allocation5 + $0x358] sm:$0xff]
    %v246 = vld [vmem:[#allocation5 + $0x360] sm:$0xff]
    %v247 = vld [vmem:[#allocation5 + $0x368] sm:$0xff]
    %v248 = vld [vmem:[#allocation5 + $0x370] sm:$0xff]
    %v249 = vld [vmem:[#allocation5 + $0x378] sm:$0xff]
    %v250 = vld [vmem:[#allocation5 + $0x380] sm:$0xff]
    %v251 = vld [vmem:[#allocation5 + $0x388] sm:$0xff]
    %v252 = vld [vmem:[#allocation5 + $0x390] sm:$0xff]
    %v253 = vld [vmem:[#allocation5 + $0x398] sm:$0xff]
    %v254 = vld [vmem:[#allocation5 + $0x3a0] sm:$0xff]
    %v255 = vld [vmem:[#allocation5 + $0x3a8] sm:$0xff]
    %v256 = vld [vmem:[#allocation5 + $0x3b0] sm:$0xff]
    %v257 = vld [vmem:[#allocation5 + $0x3b8] sm:$0xff]
    %v258 = vld [vmem:[#allocation5 + $0x3c0] sm:$0xff]
    %v259 = vld [vmem:[#allocation5 + $0x3c8] sm:$0xff]
    %v260 = vld [vmem:[#allocation5 + $0x3d0] sm:$0xff]
    %v261 = vld [vmem:[#allocation5 + $0x3d8] sm:$0xff]
    %v262 = vld [vmem:[#allocation5 + $0x3e0] sm:$0xff]
    %v263 = vld [vmem:[#allocation5 + $0x3e8] sm:$0xff]
    %v264 = vld [vmem:[#allocation5 + $0x3f0] sm:$0xff]
    %v265 = vld [vmem:[#allocation5 + $0x3f8] sm:$0xff]
    %v266 = vld [vmem:[#allocation5 + $0x400] sm:$0xff]
    %v267 = vld [vmem:[#allocation5 + $0x408] sm:$0xff]
    %v268 = vld [vmem:[#allocation5 + $0x410] sm:$0xff]
    %v269 = vld [vmem:[#allocation5 + $0x418] sm:$0xff]
    %v270 = vld [vmem:[#allocation5 + $0x420] sm:$0xff]
    %v271 = vld [vmem:[#allocation5 + $0x428] sm:$0xff]
    %v272 = vld [vmem:[#allocation5 + $0x430] sm:$0xff]
    %v273 = vld [vmem:[#allocation5 + $0x438] sm:$0xff]
    %v274 = vld [vmem:[#allocation5 + $0x440] sm:$0xff]
    %v275 = vld [vmem:[#allocation5 + $0x448] sm:$0xff]
    %v276 = vld [vmem:[#allocation5 + $0x450] sm:$0xff]
    %v277 = vld [vmem:[#allocation5 + $0x458] sm:$0xff]
    %v278 = vld [vmem:[#allocation5 + $0x460] sm:$0xff]
    %v279 = vld [vmem:[#allocation5 + $0x468] sm:$0xff]
    %v280 = vld [vmem:[#allocation5 + $0x470] sm:$0xff]
    %v281 = vld [vmem:[#allocation5 + $0x478] sm:$0xff]
    %v282 = vld [vmem:[#allocation5 + $0x480] sm:$0xff]
    %v283 = vld [vmem:[#allocation5 + $0x488] sm:$0xff]
    %v284 = vld [vmem:[#allocation5 + $0x490] sm:$0xff]
    %v285 = vld [vmem:[#allocation5 + $0x498] sm:$0xff]
    %v286 = vld [vmem:[#allocation5 + $0x4a0] sm:$0xff]
    %v287 = vld [vmem:[#allocation5 + $0x4a8] sm:$0xff]
    %v288 = vld [vmem:[#allocation5 + $0x4b0] sm:$0xff]
    %v289 = vld [vmem:[#allocation5 + $0x4b8] sm:$0xff]
    %v290 = vld [vmem:[#allocation5 + $0x4c0] sm:$0xff]
    %v291 = vld [vmem:[#allocation5 + $0x4c8] sm:$0xff]
    %v292 = vld [vmem:[#allocation5 + $0x4d0] sm:$0xff]
    %v293 = vld [vmem:[#allocation5 + $0x4d8] sm:$0xff]
    %v294 = vld [vmem:[#allocation5 + $0x4e0] sm:$0xff]
    %v295 = vld [vmem:[#allocation5 + $0x4e8] sm:$0xff]
    %v296 = vld [vmem:[#allocation5 + $0x4f0] sm:$0xff]
    %v297 = vld [vmem:[#allocation5 + $0x4f8] sm:$0xff]
    %v298 = vld [vmem:[#allocation5 + $0x500] sm:$0xff]
    %v299 = vld [vmem:[#allocation5 + $0x508] sm:$0xff]
    %v300 = vld [vmem:[#allocation5 + $0x510] sm:$0xff]
    %v301 = vld [vmem:[#allocation5 + $0x518] sm:$0xff]
    %v302 = vld [vmem:[#allocation5 + $0x520] sm:$0xff]
    %v303 = vld [vmem:[#allocation5 + $0x528] sm:$0xff]
    %v304 = vld [vmem:[#allocation5 + $0x530] sm:$0xff]
    %v305 = vld [vmem:[#allocation5 + $0x538] sm:$0xff]
    %v306 = vld [vmem:[#allocation5 + $0x540] sm:$0xff]
    %v307 = vld [vmem:[#allocation5 + $0x548] sm:$0xff]
    %v308 = vld [vmem:[#allocation5 + $0x550] sm:$0xff]
    %v309 = vld [vmem:[#allocation5 + $0x558] sm:$0xff]
    %v310 = vld [vmem:[#allocation5 + $0x560] sm:$0xff]
    %v311 = vld [vmem:[#allocation5 + $0x568] sm:$0xff]
    %v312 = vld [vmem:[#allocation5 + $0x570] sm:$0xff]
    %v313 = vld [vmem:[#allocation5 + $0x578] sm:$0xff]
    %v314 = vld [vmem:[#allocation5 + $0x580] sm:$0xff]
    %v315 = vld [vmem:[#allocation5 + $0x588] sm:$0xff]
    %v316 = vld [vmem:[#allocation5 + $0x590] sm:$0xff]
    %v317 = vld [vmem:[#allocation5 + $0x598] sm:$0xff]
    %v318 = vld [vmem:[#allocation5 + $0x5a0] sm:$0xff]
    %v319 = vld [vmem:[#allocation5 + $0x5a8] sm:$0xff]
    %v320 = vld [vmem:[#allocation5 + $0x5b0] sm:$0xff]
    %v321 = vld [vmem:[#allocation5 + $0x5b8] sm:$0xff]
    %v322 = vld [vmem:[#allocation5 + $0x5c0] sm:$0xff]
    %v323 = vld [vmem:[#allocation5 + $0x5c8] sm:$0xff]
    %v324 = vld [vmem:[#allocation5 + $0x5d0] sm:$0xff]
    %v325 = vld [vmem:[#allocation5 + $0x5d8] sm:$0xff]
    %v326 = vld [vmem:[#allocation5 + $0x5e0] sm:$0xff]
    %v327 = vld [vmem:[#allocation5 + $0x5e8] sm:$0xff]
    %v328 = vld [vmem:[#allocation5 + $0x5f0] sm:$0xff]
    %v329 = vld [vmem:[#allocation5 + $0x5f8] sm:$0xff]
    %v330 = vld [vmem:[#allocation5 + $0x600] sm:$0xff]
    %v331 = vld [vmem:[#allocation5 + $0x608] sm:$0xff]
    %v332 = vld [vmem:[#allocation5 + $0x610] sm:$0xff]
    %v333 = vld [vmem:[#allocation5 + $0x618] sm:$0xff]
    %v334 = vld [vmem:[#allocation7] sm:$0xf]
    %v336 = vperm.slane %v334, 0
    %v337 = vperm.slane %v334, 1
    %v338 = vperm.slane %v334, 2
    %v339 = vperm.slane %v334, 3
    %v540 = vunpack.c.l.b16 %v138
    %v541 = vunpack.c.h.b16 %v138
    %v542 = vunpack.c.l.b16 %v139
    %v543 = vunpack.c.h.b16 %v139
    %v544 = vunpack.c.l.b16 %v140
    %v545 = vunpack.c.h.b16 %v140
    %v546 = vunpack.c.l.b16 %v141
    %v547 = vunpack.c.h.b16 %v141
    %v548 = vunpack.c.l.b16 %v142
    %v549 = vunpack.c.h.b16 %v142
    %v550 = vunpack.c.l.b16 %v143
    %v551 = vunpack.c.h.b16 %v143
    %v552 = vunpack.c.l.b16 %v144
    %v553 = vunpack.c.h.b16 %v144
    %v554 = vunpack.c.l.b16 %v145
    %v555 = vunpack.c.h.b16 %v145
    %v556 = vunpack.c.l.b16 %v146
    %v557 = vunpack.c.h.b16 %v146
    %v558 = vunpack.c.l.b16 %v147
    %v559 = vunpack.c.h.b16 %v147
    %v560 = vunpack.c.l.b16 %v148
    %v561 = vunpack.c.h.b16 %v148
    %v562 = vunpack.c.l.b16 %v149
    %v563 = vunpack.c.h.b16 %v149
    %v564 = vunpack.c.l.b16 %v150
    %v565 = vunpack.c.h.b16 %v150
    %v566 = vunpack.c.l.b16 %v151
    %v567 = vunpack.c.h.b16 %v151
    %v568 = vunpack.c.l.b16 %v152
    %v569 = vunpack.c.h.b16 %v152
    %v570 = vunpack.c.l.b16 %v153
    %v571 = vunpack.c.h.b16 %v153
    %v572 = vunpack.c.l.b16 %v154
    %v573 = vunpack.c.h.b16 %v154
    %v574 = vunpack.c.l.b16 %v155
    %v575 = vunpack.c.h.b16 %v155
    %v576 = vunpack.c.l.b16 %v156
    %v577 = vunpack.c.h.b16 %v156
    %v578 = vunpack.c.l.b16 %v157
    %v579 = vunpack.c.h.b16 %v157
    %v580 = vunpack.c.l.b16 %v158
    %v581 = vunpack.c.h.b16 %v158
    %v582 = vunpack.c.l.b16 %v159
    %v583 = vunpack.c.h.b16 %v159
    %v584 = vunpack.c.l.b16 %v160
    %v585 = vunpack.c.h.b16 %v160
    %v586 = vunpack.c.l.b16 %v161
    %v587 = vunpack.c.h.b16 %v161
    %v588 = vunpack.c.l.b16 %v162
    %v589 = vunpack.c.h.b16 %v162
    %v590 = vunpack.c.l.b16 %v163
    %v591 = vunpack.c.h.b16 %v163
    %v592 = vunpack.c.l.b16 %v164
    %v593 = vunpack.c.h.b16 %v164
    %v594 = vunpack.c.l.b16 %v165
    %v595 = vunpack.c.h.b16 %v165
    %v596 = vunpack.c.l.b16 %v166
    %v597 = vunpack.c.h.b16 %v166
    %v598 = vunpack.c.l.b16 %v167
    %v599 = vunpack.c.h.b16 %v167
    %v600 = vunpack.c.l.b16 %v168
    %v601 = vunpack.c.h.b16 %v168
    %v602 = vunpack.c.l.b16 %v169
    %v603 = vunpack.c.h.b16 %v169
    %v604 = vunpack.c.l.b16 %v170
    %v605 = vunpack.c.h.b16 %v170
    %v606 = vunpack.c.l.b16 %v171
    %v607 = vunpack.c.h.b16 %v171
    %v608 = vunpack.c.l.b16 %v172
    %v609 = vunpack.c.h.b16 %v172
    %v610 = vunpack.c.l.b16 %v173
    %v611 = vunpack.c.h.b16 %v173
    %v612 = vunpack.c.l.b16 %v174
    %v613 = vunpack.c.h.b16 %v174
    %v614 = vunpack.c.l.b16 %v175
    %v615 = vunpack.c.h.b16 %v175
    %v616 = vunpack.c.l.b16 %v176
    %v617 = vunpack.c.h.b16 %v176
    %v618 = vunpack.c.l.b16 %v177
    %v619 = vunpack.c.h.b16 %v177
    %v620 = vunpack.c.l.b16 %v178
    %v621 = vunpack.c.h.b16 %v178
    %v622 = vunpack.c.l.b16 %v179
    %v623 = vunpack.c.h.b16 %v179
    %v624 = vunpack.c.l.b16 %v180
    %v625 = vunpack.c.h.b16 %v180
    %v626 = vunpack.c.l.b16 %v181
    %v627 = vunpack.c.h.b16 %v181
    %v628 = vunpack.c.l.b16 %v182
    %v629 = vunpack.c.h.b16 %v182
    %v630 = vunpack.c.l.b16 %v183
    %v631 = vunpack.c.h.b16 %v183
    %v632 = vunpack.c.l.b16 %v184
    %v633 = vunpack.c.h.b16 %v184
    %v634 = vunpack.c.l.b16 %v185
    %v635 = vunpack.c.h.b16 %v185
    %v636 = vunpack.c.l.b16 %v186
    %v637 = vunpack.c.h.b16 %v186
    %v638 = vunpack.c.l.b16 %v187
    %v639 = vunpack.c.h.b16 %v187
    %v640 = vunpack.c.l.b16 %v188
    %v641 = vunpack.c.h.b16 %v188
    %v642 = vunpack.c.l.b16 %v189
    %v643 = vunpack.c.h.b16 %v189
    %v644 = vunpack.c.l.b16 %v190
    %v645 = vunpack.c.h.b16 %v190
    %v646 = vunpack.c.l.b16 %v191
    %v647 = vunpack.c.h.b16 %v191
    %v648 = vunpack.c.l.b16 %v192
    %v649 = vunpack.c.h.b16 %v192
    %v650 = vunpack.c.l.b16 %v193
    %v651 = vunpack.c.h.b16 %v193
    %v652 = vunpack.c.l.b16 %v194
    %v653 = vunpack.c.h.b16 %v194
    %v654 = vunpack.c.l.b16 %v195
    %v655 = vunpack.c.h.b16 %v195
    %v656 = vunpack.c.l.b16 %v196
    %v657 = vunpack.c.h.b16 %v196
    %v658 = vunpack.c.l.b16 %v197
    %v659 = vunpack.c.h.b16 %v197
    %v660 = vunpack.c.l.b16 %v198
    %v661 = vunpack.c.h.b16 %v198
    %v662 = vunpack.c.l.b16 %v199
    %v663 = vunpack.c.h.b16 %v199
    %v664 = vunpack.c.l.b16 %v200
    %v665 = vunpack.c.h.b16 %v200
    %v666 = vunpack.c.l.b16 %v201
    %v667 = vunpack.c.h.b16 %v201
    %v668 = vunpack.c.l.b16 %v202
    %v669 = vunpack.c.h.b16 %v202
    %v670 = vunpack.c.l.b16 %v203
    %v671 = vunpack.c.h.b16 %v203
    %v672 = vunpack.c.l.b16 %v204
    %v673 = vunpack.c.h.b16 %v204
    %v674 = vunpack.c.l.b16 %v205
    %v675 = vunpack.c.h.b16 %v205
    %v676 = vunpack.c.l.b16 %v206
    %v677 = vunpack.c.h.b16 %v206
    %v678 = vunpack.c.l.b16 %v207
    %v679 = vunpack.c.h.b16 %v207
    %v680 = vunpack.c.l.b16 %v208
    %v681 = vunpack.c.h.b16 %v208
    %v682 = vunpack.c.l.b16 %v209
    %v683 = vunpack.c.h.b16 %v209
    %v684 = vunpack.c.l.b16 %v210
    %v685 = vunpack.c.h.b16 %v210
    %v686 = vunpack.c.l.b16 %v211
    %v687 = vunpack.c.h.b16 %v211
    %v688 = vunpack.c.l.b16 %v212
    %v689 = vunpack.c.h.b16 %v212
    %v690 = vunpack.c.l.b16 %v213
    %v691 = vunpack.c.h.b16 %v213
    %v692 = vunpack.c.l.b16 %v214
    %v693 = vunpack.c.h.b16 %v214
    %v694 = vunpack.c.l.b16 %v215
    %v695 = vunpack.c.h.b16 %v215
    %v696 = vunpack.c.l.b16 %v216
    %v697 = vunpack.c.h.b16 %v216
    %v698 = vunpack.c.l.b16 %v217
    %v699 = vunpack.c.h.b16 %v217
    %v700 = vunpack.c.l.b16 %v218
    %v701 = vunpack.c.h.b16 %v218
    %v702 = vunpack.c.l.b16 %v219
    %v703 = vunpack.c.h.b16 %v219
    %v704 = vunpack.c.l.b16 %v220
    %v705 = vunpack.c.h.b16 %v220
    %v706 = vunpack.c.l.b16 %v221
    %v707 = vunpack.c.h.b16 %v221
    %v708 = vunpack.c.l.b16 %v222
    %v709 = vunpack.c.h.b16 %v222
    %v710 = vunpack.c.l.b16 %v223
    %v711 = vunpack.c.h.b16 %v223
    %v712 = vunpack.c.l.b16 %v224
    %v713 = vunpack.c.h.b16 %v224
    %v714 = vunpack.c.l.b16 %v225
    %v715 = vunpack.c.h.b16 %v225
    %v716 = vunpack.c.l.b16 %v226
    %v717 = vunpack.c.h.b16 %v226
    %v718 = vunpack.c.l.b16 %v227
    %v719 = vunpack.c.h.b16 %v227
    %v720 = vunpack.c.l.b16 %v228
    %v721 = vunpack.c.h.b16 %v228
    %v722 = vunpack.c.l.b16 %v229
    %v723 = vunpack.c.h.b16 %v229
    %v724 = vunpack.c.l.b16 %v230
    %v725 = vunpack.c.h.b16 %v230
    %v726 = vunpack.c.l.b16 %v231
    %v727 = vunpack.c.h.b16 %v231
    %v728 = vunpack.c.l.b16 %v232
    %v729 = vunpack.c.h.b16 %v232
    %v730 = vunpack.c.l.b16 %v233
    %v731 = vunpack.c.h.b16 %v233
    %v732 = vunpack.c.l.b16 %v234
    %v733 = vunpack.c.h.b16 %v234
    %v734 = vunpack.c.l.b16 %v235
    %v735 = vunpack.c.h.b16 %v235
    %v736 = vunpack.c.l.b16 %v236
    %v737 = vunpack.c.h.b16 %v236
    %v738 = vunpack.c.l.b16 %v237
    %v739 = vunpack.c.h.b16 %v237
    %v740 = vunpack.c.l.b16 %v238
    %v741 = vunpack.c.h.b16 %v238
    %v742 = vunpack.c.l.b16 %v239
    %v743 = vunpack.c.h.b16 %v239
    %v744 = vunpack.c.l.b16 %v240
    %v745 = vunpack.c.h.b16 %v240
    %v746 = vunpack.c.l.b16 %v241
    %v747 = vunpack.c.h.b16 %v241
    %v748 = vunpack.c.l.b16 %v242
    %v749 = vunpack.c.h.b16 %v242
    %v750 = vunpack.c.l.b16 %v243
    %v751 = vunpack.c.h.b16 %v243
    %v752 = vunpack.c.l.b16 %v244
    %v753 = vunpack.c.h.b16 %v244
    %v754 = vunpack.c.l.b16 %v245
    %v755 = vunpack.c.h.b16 %v245
    %v756 = vunpack.c.l.b16 %v246
    %v757 = vunpack.c.h.b16 %v246
    %v758 = vunpack.c.l.b16 %v247
    %v759 = vunpack.c.h.b16 %v247
    %v760 = vunpack.c.l.b16 %v248
    %v761 = vunpack.c.h.b16 %v248
    %v762 = vunpack.c.l.b16 %v249
    %v763 = vunpack.c.h.b16 %v249
    %v764 = vunpack.c.l.b16 %v250
    %v765 = vunpack.c.h.b16 %v250
    %v766 = vunpack.c.l.b16 %v251
    %v767 = vunpack.c.h.b16 %v251
    %v768 = vunpack.c.l.b16 %v252
    %v769 = vunpack.c.h.b16 %v252
    %v770 = vunpack.c.l.b16 %v253
    %v771 = vunpack.c.h.b16 %v253
    %v772 = vunpack.c.l.b16 %v254
    %v773 = vunpack.c.h.b16 %v254
    %v774 = vunpack.c.l.b16 %v255
    %v775 = vunpack.c.h.b16 %v255
    %v776 = vunpack.c.l.b16 %v256
    %v777 = vunpack.c.h.b16 %v256
    %v778 = vunpack.c.l.b16 %v257
    %v779 = vunpack.c.h.b16 %v257
    %v780 = vunpack.c.l.b16 %v258
    %v781 = vunpack.c.h.b16 %v258
    %v782 = vunpack.c.l.b16 %v259
    %v783 = vunpack.c.h.b16 %v259
    %v784 = vunpack.c.l.b16 %v260
    %v785 = vunpack.c.h.b16 %v260
    %v786 = vunpack.c.l.b16 %v261
    %v787 = vunpack.c.h.b16 %v261
    %v788 = vunpack.c.l.b16 %v262
    %v789 = vunpack.c.h.b16 %v262
    %v790 = vunpack.c.l.b16 %v263
    %v791 = vunpack.c.h.b16 %v263
    %v792 = vunpack.c.l.b16 %v264
    %v793 = vunpack.c.h.b16 %v264
    %v794 = vunpack.c.l.b16 %v265
    %v795 = vunpack.c.h.b16 %v265
    %v796 = vunpack.c.l.b16 %v266
    %v797 = vunpack.c.h.b16 %v266
    %v798 = vunpack.c.l.b16 %v267
    %v799 = vunpack.c.h.b16 %v267
    %v800 = vunpack.c.l.b16 %v268
    %v801 = vunpack.c.h.b16 %v268
    %v802 = vunpack.c.l.b16 %v269
    %v803 = vunpack.c.h.b16 %v269
    %v804 = vunpack.c.l.b16 %v270
    %v805 = vunpack.c.h.b16 %v270
    %v806 = vunpack.c.l.b16 %v271
    %v807 = vunpack.c.h.b16 %v271
    %v808 = vunpack.c.l.b16 %v272
    %v809 = vunpack.c.h.b16 %v272
    %v810 = vunpack.c.l.b16 %v273
    %v811 = vunpack.c.h.b16 %v273
    %v812 = vunpack.c.l.b16 %v274
    %v813 = vunpack.c.h.b16 %v274
    %v814 = vunpack.c.l.b16 %v275
    %v815 = vunpack.c.h.b16 %v275
    %v816 = vunpack.c.l.b16 %v276
    %v817 = vunpack.c.h.b16 %v276
    %v818 = vunpack.c.l.b16 %v277
    %v819 = vunpack.c.h.b16 %v277
    %v820 = vunpack.c.l.b16 %v278
    %v821 = vunpack.c.h.b16 %v278
    %v822 = vunpack.c.l.b16 %v279
    %v823 = vunpack.c.h.b16 %v279
    %v824 = vunpack.c.l.b16 %v280
    %v825 = vunpack.c.h.b16 %v280
    %v826 = vunpack.c.l.b16 %v281
    %v827 = vunpack.c.h.b16 %v281
    %v828 = vunpack.c.l.b16 %v282
    %v829 = vunpack.c.h.b16 %v282
    %v830 = vunpack.c.l.b16 %v283
    %v831 = vunpack.c.h.b16 %v283
    %v832 = vunpack.c.l.b16 %v284
    %v833 = vunpack.c.h.b16 %v284
    %v834 = vunpack.c.l.b16 %v285
    %v835 = vunpack.c.h.b16 %v285
    %v836 = vunpack.c.l.b16 %v286
    %v837 = vunpack.c.h.b16 %v286
    %v838 = vunpack.c.l.b16 %v287
    %v839 = vunpack.c.h.b16 %v287
    %v840 = vunpack.c.l.b16 %v288
    %v841 = vunpack.c.h.b16 %v288
    %v842 = vunpack.c.l.b16 %v289
    %v843 = vunpack.c.h.b16 %v289
    %v844 = vunpack.c.l.b16 %v290
    %v845 = vunpack.c.h.b16 %v290
    %v846 = vunpack.c.l.b16 %v291
    %v847 = vunpack.c.h.b16 %v291
    %v848 = vunpack.c.l.b16 %v292
    %v849 = vunpack.c.h.b16 %v292
    %v850 = vunpack.c.l.b16 %v293
    %v851 = vunpack.c.h.b16 %v293
    %v852 = vunpack.c.l.b16 %v294
    %v853 = vunpack.c.h.b16 %v294
    %v854 = vunpack.c.l.b16 %v295
    %v855 = vunpack.c.h.b16 %v295
    %v856 = vunpack.c.l.b16 %v296
    %v857 = vunpack.c.h.b16 %v296
    %v858 = vunpack.c.l.b16 %v297
    %v859 = vunpack.c.h.b16 %v297
    %v860 = vunpack.c.l.b16 %v298
    %v861 = vunpack.c.h.b16 %v298
    %v862 = vunpack.c.l.b16 %v299
    %v863 = vunpack.c.h.b16 %v299
    %v864 = vunpack.c.l.b16 %v300
    %v865 = vunpack.c.h.b16 %v300
    %v866 = vunpack.c.l.b16 %v301
    %v867 = vunpack.c.h.b16 %v301
    %v868 = vunpack.c.l.b16 %v302
    %v869 = vunpack.c.h.b16 %v302
    %v870 = vunpack.c.l.b16 %v303
    %v871 = vunpack.c.h.b16 %v303
    %v872 = vunpack.c.l.b16 %v304
    %v873 = vunpack.c.h.b16 %v304
    %v874 = vunpack.c.l.b16 %v305
    %v875 = vunpack.c.h.b16 %v305
    %v876 = vunpack.c.l.b16 %v306
    %v877 = vunpack.c.h.b16 %v306
    %v878 = vunpack.c.l.b16 %v307
    %v879 = vunpack.c.h.b16 %v307
    %v880 = vunpack.c.l.b16 %v308
    %v881 = vunpack.c.h.b16 %v308
    %v882 = vunpack.c.l.b16 %v309
    %v883 = vunpack.c.h.b16 %v309
    %v884 = vunpack.c.l.b16 %v310
    %v885 = vunpack.c.h.b16 %v310
    %v886 = vunpack.c.l.b16 %v311
    %v887 = vunpack.c.h.b16 %v311
    %v888 = vunpack.c.l.b16 %v312
    %v889 = vunpack.c.h.b16 %v312
    %v890 = vunpack.c.l.b16 %v313
    %v891 = vunpack.c.h.b16 %v313
    %v892 = vunpack.c.l.b16 %v314
    %v893 = vunpack.c.h.b16 %v314
    %v894 = vunpack.c.l.b16 %v315
    %v895 = vunpack.c.h.b16 %v315
    %v896 = vunpack.c.l.b16 %v316
    %v897 = vunpack.c.h.b16 %v316
    %v898 = vunpack.c.l.b16 %v317
    %v899 = vunpack.c.h.b16 %v317
    %v900 = vunpack.c.l.b16 %v318
    %v901 = vunpack.c.h.b16 %v318
    %v902 = vunpack.c.l.b16 %v319
    %v903 = vunpack.c.h.b16 %v319
    %v904 = vunpack.c.l.b16 %v320
    %v905 = vunpack.c.h.b16 %v320
    %v906 = vunpack.c.l.b16 %v321
    %v907 = vunpack.c.h.b16 %v321
    %v908 = vunpack.c.l.b16 %v322
    %v909 = vunpack.c.h.b16 %v322
    %v910 = vunpack.c.l.b16 %v323
    %v911 = vunpack.c.h.b16 %v323
    %v912 = vunpack.c.l.b16 %v324
    %v913 = vunpack.c.h.b16 %v324
    %v914 = vunpack.c.l.b16 %v325
    %v915 = vunpack.c.h.b16 %v325
    %v916 = vunpack.c.l.b16 %v326
    %v917 = vunpack.c.h.b16 %v326
    %v918 = vunpack.c.l.b16 %v327
    %v919 = vunpack.c.h.b16 %v327
    %v920 = vunpack.c.l.b16 %v328
    %v921 = vunpack.c.h.b16 %v328
    %v922 = vunpack.c.l.b16 %v329
    %v923 = vunpack.c.h.b16 %v329
    %v924 = vunpack.c.l.b16 %v330
    %v925 = vunpack.c.h.b16 %v330
    %v926 = vunpack.c.l.b16 %v331
    %v927 = vunpack.c.h.b16 %v331
    %v928 = vunpack.c.l.b16 %v332
    %v929 = vunpack.c.h.b16 %v332
    %v930 = vunpack.c.l.b16 %v333
    %v931 = vunpack.c.h.b16 %v333
    %v932 = vpack.c.b16 %v544, %v540
    %v933 = vpack.c.b16 %v545, %v541
    %v934 = vpack.c.b16 %v546, %v542
    %v935 = vpack.c.b16 %v547, %v543
    %v936 = vpack.c.b16 %v552, %v548
    %v937 = vpack.c.b16 %v553, %v549
    %v938 = vpack.c.b16 %v554, %v550
    %v939 = vpack.c.b16 %v555, %v551
    %v940 = vpack.c.b16 %v560, %v556
    %v941 = vpack.c.b16 %v561, %v557
    %v942 = vpack.c.b16 %v562, %v558
    %v943 = vpack.c.b16 %v563, %v559
    %v944 = vpack.c.b16 %v568, %v564
    %v945 = vpack.c.b16 %v569, %v565
    %v946 = vpack.c.b16 %v570, %v566
    %v947 = vpack.c.b16 %v571, %v567
    %v948 = vpack.c.b16 %v576, %v572
    %v949 = vpack.c.b16 %v577, %v573
    %v950 = vpack.c.b16 %v578, %v574
    %v951 = vpack.c.b16 %v579, %v575
    %v952 = vpack.c.b16 %v584, %v580
    %v953 = vpack.c.b16 %v585, %v581
    %v954 = vpack.c.b16 %v586, %v582
    %v955 = vpack.c.b16 %v587, %v583
    %v956 = vpack.c.b16 %v592, %v588
    %v957 = vpack.c.b16 %v593, %v589
    %v958 = vpack.c.b16 %v594, %v590
    %v959 = vpack.c.b16 %v595, %v591
    %v960 = vpack.c.b16 %v600, %v596
    %v961 = vpack.c.b16 %v601, %v597
    %v962 = vpack.c.b16 %v602, %v598
    %v963 = vpack.c.b16 %v603, %v599
    %v964 = vpack.c.b16 %v608, %v604
    %v965 = vpack.c.b16 %v609, %v605
    %v966 = vpack.c.b16 %v610, %v606
    %v967 = vpack.c.b16 %v611, %v607
    %v968 = vpack.c.b16 %v616, %v612
    %v969 = vpack.c.b16 %v617, %v613
    %v970 = vpack.c.b16 %v618, %v614
    %v971 = vpack.c.b16 %v619, %v615
    %v972 = vpack.c.b16 %v624, %v620
    %v973 = vpack.c.b16 %v625, %v621
    %v974 = vpack.c.b16 %v626, %v622
    %v975 = vpack.c.b16 %v627, %v623
    %v976 = vpack.c.b16 %v632, %v628
    %v977 = vpack.c.b16 %v633, %v629
    %v978 = vpack.c.b16 %v634, %v630
    %v979 = vpack.c.b16 %v635, %v631
    %v980 = vpack.c.b16 %v640, %v636
    %v981 = vpack.c.b16 %v641, %v637
    %v982 = vpack.c.b16 %v642, %v638
    %v983 = vpack.c.b16 %v643, %v639
    %v984 = vpack.c.b16 %v648, %v644
    %v985 = vpack.c.b16 %v649, %v645
    %v986 = vpack.c.b16 %v650, %v646
    %v987 = vpack.c.b16 %v651, %v647
    %v988 = vpack.c.b16 %v656, %v652
    %v989 = vpack.c.b16 %v657, %v653
    %v990 = vpack.c.b16 %v658, %v654
    %v991 = vpack.c.b16 %v659, %v655
    %v992 = vpack.c.b16 %v664, %v660
    %v993 = vpack.c.b16 %v665, %v661
    %v994 = vpack.c.b16 %v666, %v662
    %v995 = vpack.c.b16 %v667, %v663
    %v996 = vpack.c.b16 %v672, %v668
    %v997 = vpack.c.b16 %v673, %v669
    %v998 = vpack.c.b16 %v674, %v670
    %v999 = vpack.c.b16 %v675, %v671
    %v1000 = vpack.c.b16 %v680, %v676
    %v1001 = vpack.c.b16 %v681, %v677
    %v1002 = vpack.c.b16 %v682, %v678
    %v1003 = vpack.c.b16 %v683, %v679
    %v1004 = vpack.c.b16 %v688, %v684
    %v1005 = vpack.c.b16 %v689, %v685
    %v1006 = vpack.c.b16 %v690, %v686
    %v1007 = vpack.c.b16 %v691, %v687
    %v1008 = vpack.c.b16 %v696, %v692
    %v1009 = vpack.c.b16 %v697, %v693
    %v1010 = vpack.c.b16 %v698, %v694
    %v1011 = vpack.c.b16 %v699, %v695
    %v1012 = vpack.c.b16 %v704, %v700
    %v1013 = vpack.c.b16 %v705, %v701
    %v1014 = vpack.c.b16 %v706, %v702
    %v1015 = vpack.c.b16 %v707, %v703
    %v1016 = vpack.c.b16 %v712, %v708
    %v1017 = vpack.c.b16 %v713, %v709
    %v1018 = vpack.c.b16 %v714, %v710
    %v1019 = vpack.c.b16 %v715, %v711
    %v1020 = vpack.c.b16 %v720, %v716
    %v1021 = vpack.c.b16 %v721, %v717
    %v1022 = vpack.c.b16 %v722, %v718
    %v1023 = vpack.c.b16 %v723, %v719
    %v1024 = vpack.c.b16 %v728, %v724
    %v1025 = vpack.c.b16 %v729, %v725
    %v1026 = vpack.c.b16 %v730, %v726
    %v1027 = vpack.c.b16 %v731, %v727
    %v1028 = vpack.c.b16 %v736, %v732
    %v1029 = vpack.c.b16 %v737, %v733
    %v1030 = vpack.c.b16 %v738, %v734
    %v1031 = vpack.c.b16 %v739, %v735
    %v1032 = vpack.c.b16 %v744, %v740
    %v1033 = vpack.c.b16 %v745, %v741
    %v1034 = vpack.c.b16 %v746, %v742
    %v1035 = vpack.c.b16 %v747, %v743
    %v1036 = vpack.c.b16 %v752, %v748
    %v1037 = vpack.c.b16 %v753, %v749
    %v1038 = vpack.c.b16 %v754, %v750
    %v1039 = vpack.c.b16 %v755, %v751
    %v1040 = vpack.c.b16 %v760, %v756
    %v1041 = vpack.c.b16 %v761, %v757
    %v1042 = vpack.c.b16 %v762, %v758
    %v1043 = vpack.c.b16 %v763, %v759
    %v1044 = vpack.c.b16 %v768, %v764
    %v1045 = vpack.c.b16 %v769, %v765
    %v1046 = vpack.c.b16 %v770, %v766
    %v1047 = vpack.c.b16 %v771, %v767
    %v1048 = vpack.c.b16 %v776, %v772
    %v1049 = vpack.c.b16 %v777, %v773
    %v1050 = vpack.c.b16 %v778, %v774
    %v1051 = vpack.c.b16 %v779, %v775
    %v1052 = vpack.c.b16 %v784, %v780
    %v1053 = vpack.c.b16 %v785, %v781
    %v1054 = vpack.c.b16 %v786, %v782
    %v1055 = vpack.c.b16 %v787, %v783
    %v1056 = vpack.c.b16 %v792, %v788
    %v1057 = vpack.c.b16 %v793, %v789
    %v1058 = vpack.c.b16 %v794, %v790
    %v1059 = vpack.c.b16 %v795, %v791
    %v1060 = vpack.c.b16 %v800, %v796
    %v1061 = vpack.c.b16 %v801, %v797
    %v1062 = vpack.c.b16 %v802, %v798
    %v1063 = vpack.c.b16 %v803, %v799
    %v1064 = vpack.c.b16 %v808, %v804
    %v1065 = vpack.c.b16 %v809, %v805
    %v1066 = vpack.c.b16 %v810, %v806
    %v1067 = vpack.c.b16 %v811, %v807
    %v1068 = vpack.c.b16 %v816, %v812
    %v1069 = vpack.c.b16 %v817, %v813
    %v1070 = vpack.c.b16 %v818, %v814
    %v1071 = vpack.c.b16 %v819, %v815
    %v1072 = vpack.c.b16 %v824, %v820
    %v1073 = vpack.c.b16 %v825, %v821
    %v1074 = vpack.c.b16 %v826, %v822
    %v1075 = vpack.c.b16 %v827, %v823
    %v1076 = vpack.c.b16 %v832, %v828
    %v1077 = vpack.c.b16 %v833, %v829
    %v1078 = vpack.c.b16 %v834, %v830
    %v1079 = vpack.c.b16 %v835, %v831
    %v1080 = vpack.c.b16 %v840, %v836
    %v1081 = vpack.c.b16 %v841, %v837
    %v1082 = vpack.c.b16 %v842, %v838
    %v1083 = vpack.c.b16 %v843, %v839
    %v1084 = vpack.c.b16 %v848, %v844
    %v1085 = vpack.c.b16 %v849, %v845
    %v1086 = vpack.c.b16 %v850, %v846
    %v1087 = vpack.c.b16 %v851, %v847
    %v1088 = vpack.c.b16 %v856, %v852
    %v1089 = vpack.c.b16 %v857, %v853
    %v1090 = vpack.c.b16 %v858, %v854
    %v1091 = vpack.c.b16 %v859, %v855
    %v1092 = vpack.c.b16 %v864, %v860
    %v1093 = vpack.c.b16 %v865, %v861
    %v1094 = vpack.c.b16 %v866, %v862
    %v1095 = vpack.c.b16 %v867, %v863
    %v1096 = vpack.c.b16 %v872, %v868
    %v1097 = vpack.c.b16 %v873, %v869
    %v1098 = vpack.c.b16 %v874, %v870
    %v1099 = vpack.c.b16 %v875, %v871
    %v1100 = vpack.c.b16 %v880, %v876
    %v1101 = vpack.c.b16 %v881, %v877
    %v1102 = vpack.c.b16 %v882, %v878
    %v1103 = vpack.c.b16 %v883, %v879
    %v1104 = vpack.c.b16 %v888, %v884
    %v1105 = vpack.c.b16 %v889, %v885
    %v1106 = vpack.c.b16 %v890, %v886
    %v1107 = vpack.c.b16 %v891, %v887
    %v1108 = vpack.c.b16 %v896, %v892
    %v1109 = vpack.c.b16 %v897, %v893
    %v1110 = vpack.c.b16 %v898, %v894
    %v1111 = vpack.c.b16 %v899, %v895
    %v1112 = vpack.c.b16 %v904, %v900
    %v1113 = vpack.c.b16 %v905, %v901
    %v1114 = vpack.c.b16 %v906, %v902
    %v1115 = vpack.c.b16 %v907, %v903
    %v1116 = vpack.c.b16 %v912, %v908
    %v1117 = vpack.c.b16 %v913, %v909
    %v1118 = vpack.c.b16 %v914, %v910
    %v1119 = vpack.c.b16 %v915, %v911
    %v1120 = vpack.c.b16 %v920, %v916
    %v1121 = vpack.c.b16 %v921, %v917
    %v1122 = vpack.c.b16 %v922, %v918
    %v1123 = vpack.c.b16 %v923, %v919
    %v1124 = vpack.c.b16 %v928, %v924
    %v1125 = vpack.c.b16 %v929, %v925
    %v1126 = vpack.c.b16 %v930, %v926
    %v1127 = vpack.c.b16 %v931, %v927
    %vm1324 = vcmask 130048
    %v1326 = vsel %vm1324, %v137, 0
    %1328 = vmatpush.bf16.msra.mxu0 %v960
    %1329 = vmatpush.bf16.msra.mxu0 %v956
    %1330 = vmatpush.bf16.msra.mxu0 %v952
    %1331 = vmatpush.bf16.msra.mxu0 %v948
    %1332 = vmatpush.bf16.msra.mxu0 %v944
    %1333 = vmatpush.bf16.msra.mxu0 %v940
    %1334 = vmatpush.bf16.msra.mxu0 %v936
    %1335 = vmatpush.bf16.msra.mxu0 %v932
    %1336 = vmatmul.bf16.gmra.mxu0 %v131
    %v1337 = vpop.f32.mrf.mxu0
    %v1338 = vadd.f32 %v336, %v1337
    %v1339 = vpop.f32.mrf.mxu0
    %1340 = vdwg.mxu0
    %1341 = vmatpush.bf16.msra.mxu0 %v992
    %1342 = vmatpush.bf16.msra.mxu0 %v988
    %1343 = vmatpush.bf16.msra.mxu0 %v984
    %1344 = vmatpush.bf16.msra.mxu0 %v980
    %1345 = vmatpush.bf16.msra.mxu0 %v976
    %1346 = vmatpush.bf16.msra.mxu0 %v972
    %1347 = vmatpush.bf16.msra.mxu0 %v968
    %1348 = vmatpush.bf16.msra.mxu0 %v964
    %1349 = vmatmul.bf16.gmra.mxu0 %v132
    %v1350 = vpop.f32.mrf.mxu0
    %v1351 = vadd.f32 %v1338, %v1350
    %v1352 = vpop.f32.mrf.mxu0
    %1353 = vdwg.mxu0
    %1354 = vmatpush.bf16.msra.mxu0 %v1024
    %1355 = vmatpush.bf16.msra.mxu0 %v1020
    %1356 = vmatpush.bf16.msra.mxu0 %v1016
    %1357 = vmatpush.bf16.msra.mxu0 %v1012
    %1358 = vmatpush.bf16.msra.mxu0 %v1008
    %1359 = vmatpush.bf16.msra.mxu0 %v1004
    %1360 = vmatpush.bf16.msra.mxu0 %v1000
    %1361 = vmatpush.bf16.msra.mxu0 %v996
    %1362 = vmatmul.bf16.gmra.mxu0 %v133
    %v1363 = vpop.f32.mrf.mxu0
    %v1364 = vadd.f32 %v1351, %v1363
    %v1365 = vpop.f32.mrf.mxu0
    %1366 = vdwg.mxu0
    %1367 = vmatpush.bf16.msra.mxu0 %v1056
    %1368 = vmatpush.bf16.msra.mxu0 %v1052
    %1369 = vmatpush.bf16.msra.mxu0 %v1048
    %1370 = vmatpush.bf16.msra.mxu0 %v1044
    %1371 = vmatpush.bf16.msra.mxu0 %v1040
    %1372 = vmatpush.bf16.msra.mxu0 %v1036
    %1373 = vmatpush.bf16.msra.mxu0 %v1032
    %1374 = vmatpush.bf16.msra.mxu0 %v1028
    %1375 = vmatmul.bf16.gmra.mxu0 %v134
    %v1376 = vpop.f32.mrf.mxu0
    %v1377 = vadd.f32 %v1364, %v1376
    %v1378 = vpop.f32.mrf.mxu0
    %1379 = vdwg.mxu0
    %1380 = vmatpush.bf16.msra.mxu0 %v1088
    %1381 = vmatpush.bf16.msra.mxu0 %v1084
    %1382 = vmatpush.bf16.msra.mxu0 %v1080
    %1383 = vmatpush.bf16.msra.mxu0 %v1076
    %1384 = vmatpush.bf16.msra.mxu0 %v1072
    %1385 = vmatpush.bf16.msra.mxu0 %v1068
    %1386 = vmatpush.bf16.msra.mxu0 %v1064
    %1387 = vmatpush.bf16.msra.mxu0 %v1060
    %1388 = vmatmul.bf16.gmra.mxu0 %v135
    %v1389 = vpop.f32.mrf.mxu0
    %v1390 = vadd.f32 %v1377, %v1389
    %v1391 = vpop.f32.mrf.mxu0
    %1392 = vdwg.mxu0
    %1393 = vmatpush.bf16.msra.mxu0 %v1120
    %1394 = vmatpush.bf16.msra.mxu0 %v1116
    %1395 = vmatpush.bf16.msra.mxu0 %v1112
    %1396 = vmatpush.bf16.msra.mxu0 %v1108
    %1397 = vmatpush.bf16.msra.mxu0 %v1104
    %1398 = vmatpush.bf16.msra.mxu0 %v1100
    %1399 = vmatpush.bf16.msra.mxu0 %v1096
    %1400 = vmatpush.bf16.msra.mxu0 %v1092
    %1401 = vmatmul.bf16.gmra.mxu0 %v136
    %v1402 = vpop.f32.mrf.mxu0
    %v1403 = vadd.f32 %v1390, %v1402
    %v1404 = vpop.f32.mrf.mxu0
    %1405 = vdwg.mxu0
    %1406 = vmatpush.bf16.msra.mxu0 0
    %1407 = vmatpush.bf16.msra.mxu0 0
    %1408 = vmatpush.bf16.msra.mxu0 0
    %1409 = vmatpush.bf16.msra.mxu0 0
    %1410 = vmatpush.bf16.msra.mxu0 0
    %1411 = vmatpush.bf16.msra.mxu0 0
    %1412 = vmatpush.bf16.msra.mxu0 0
    %1413 = vmatpush.bf16.msra.mxu0 %v1124
    %1414 = vmatmul.bf16.gmra.mxu0 %v1326
    %v1415 = vpop.f32.mrf.mxu0
    %v1416 = vadd.f32 %v1403, %v1415
    %v1417 = vpop.f32.mrf.mxu0
    %1418 = vdwg.mxu0
    %1419 = vmatpush.bf16.msra.mxu0 %v961
    %1420 = vmatpush.bf16.msra.mxu0 %v957
    %1421 = vmatpush.bf16.msra.mxu0 %v953
    %1422 = vmatpush.bf16.msra.mxu0 %v949
    %1423 = vmatpush.bf16.msra.mxu0 %v945
    %1424 = vmatpush.bf16.msra.mxu0 %v941
    %1425 = vmatpush.bf16.msra.mxu0 %v937
    %1426 = vmatpush.bf16.msra.mxu0 %v933
    %1427 = vmatmul.bf16.gmra.mxu0 %v131
    %v1428 = vpop.f32.mrf.mxu0
    %v1429 = vadd.f32 %v337, %v1428
    %v1430 = vpop.f32.mrf.mxu0
    %1431 = vdwg.mxu0
    %1432 = vmatpush.bf16.msra.mxu0 %v993
    %1433 = vmatpush.bf16.msra.mxu0 %v989
    %1434 = vmatpush.bf16.msra.mxu0 %v985
    %1435 = vmatpush.bf16.msra.mxu0 %v981
    %1436 = vmatpush.bf16.msra.mxu0 %v977
    %1437 = vmatpush.bf16.msra.mxu0 %v973
    %1438 = vmatpush.bf16.msra.mxu0 %v969
    %1439 = vmatpush.bf16.msra.mxu0 %v965
    %1440 = vmatmul.bf16.gmra.mxu0 %v132
    %v1441 = vpop.f32.mrf.mxu0
    %v1442 = vadd.f32 %v1429, %v1441
    %v1443 = vpop.f32.mrf.mxu0
    %1444 = vdwg.mxu0
    %1445 = vmatpush.bf16.msra.mxu0 %v1025
    %1446 = vmatpush.bf16.msra.mxu0 %v1021
    %1447 = vmatpush.bf16.msra.mxu0 %v1017
    %1448 = vmatpush.bf16.msra.mxu0 %v1013
    %1449 = vmatpush.bf16.msra.mxu0 %v1009
    %1450 = vmatpush.bf16.msra.mxu0 %v1005
    %1451 = vmatpush.bf16.msra.mxu0 %v1001
    %1452 = vmatpush.bf16.msra.mxu0 %v997
    %1453 = vmatmul.bf16.gmra.mxu0 %v133
    %v1454 = vpop.f32.mrf.mxu0
    %v1455 = vadd.f32 %v1442, %v1454
    %v1456 = vpop.f32.mrf.mxu0
    %1457 = vdwg.mxu0
    %1458 = vmatpush.bf16.msra.mxu0 %v1057
    %1459 = vmatpush.bf16.msra.mxu0 %v1053
    %1460 = vmatpush.bf16.msra.mxu0 %v1049
    %1461 = vmatpush.bf16.msra.mxu0 %v1045
    %1462 = vmatpush.bf16.msra.mxu0 %v1041
    %1463 = vmatpush.bf16.msra.mxu0 %v1037
    %1464 = vmatpush.bf16.msra.mxu0 %v1033
    %1465 = vmatpush.bf16.msra.mxu0 %v1029
    %1466 = vmatmul.bf16.gmra.mxu0 %v134
    %v1467 = vpop.f32.mrf.mxu0
    %v1468 = vadd.f32 %v1455, %v1467
    %v1469 = vpop.f32.mrf.mxu0
    %1470 = vdwg.mxu0
    %1471 = vmatpush.bf16.msra.mxu0 %v1089
    %1472 = vmatpush.bf16.msra.mxu0 %v1085
    %1473 = vmatpush.bf16.msra.mxu0 %v1081
    %1474 = vmatpush.bf16.msra.mxu0 %v1077
    %1475 = vmatpush.bf16.msra.mxu0 %v1073
    %1476 = vmatpush.bf16.msra.mxu0 %v1069
    %1477 = vmatpush.bf16.msra.mxu0 %v1065
    %1478 = vmatpush.bf16.msra.mxu0 %v1061
    %1479 = vmatmul.bf16.gmra.mxu0 %v135
    %v1480 = vpop.f32.mrf.mxu0
    %v1481 = vadd.f32 %v1468, %v1480
    %v1482 = vpop.f32.mrf.mxu0
    %1483 = vdwg.mxu0
    %1484 = vmatpush.bf16.msra.mxu0 %v1121
    %1485 = vmatpush.bf16.msra.mxu0 %v1117
    %1486 = vmatpush.bf16.msra.mxu0 %v1113
    %1487 = vmatpush.bf16.msra.mxu0 %v1109
    %1488 = vmatpush.bf16.msra.mxu0 %v1105
    %1489 = vmatpush.bf16.msra.mxu0 %v1101
    %1490 = vmatpush.bf16.msra.mxu0 %v1097
    %1491 = vmatpush.bf16.msra.mxu0 %v1093
    %1492 = vmatmul.bf16.gmra.mxu0 %v136
    %v1493 = vpop.f32.mrf.mxu0
    %v1494 = vadd.f32 %v1481, %v1493
    %v1495 = vpop.f32.mrf.mxu0
    %1496 = vdwg.mxu0
    %1497 = vmatpush.bf16.msra.mxu0 0
    %1498 = vmatpush.bf16.msra.mxu0 0
    %1499 = vmatpush.bf16.msra.mxu0 0
    %1500 = vmatpush.bf16.msra.mxu0 0
    %1501 = vmatpush.bf16.msra.mxu0 0
    %1502 = vmatpush.bf16.msra.mxu0 0
    %1503 = vmatpush.bf16.msra.mxu0 0
    %1504 = vmatpush.bf16.msra.mxu0 %v1125
    %1505 = vmatmul.bf16.gmra.mxu0 %v1326
    %v1506 = vpop.f32.mrf.mxu0
    %v1507 = vadd.f32 %v1494, %v1506
    %v1508 = vpop.f32.mrf.mxu0
    %1509 = vdwg.mxu0
    %1510 = vmatpush.bf16.msra.mxu0 %v962
    %1511 = vmatpush.bf16.msra.mxu0 %v958
    %1512 = vmatpush.bf16.msra.mxu0 %v954
    %1513 = vmatpush.bf16.msra.mxu0 %v950
    %1514 = vmatpush.bf16.msra.mxu0 %v946
    %1515 = vmatpush.bf16.msra.mxu0 %v942
    %1516 = vmatpush.bf16.msra.mxu0 %v938
    %1517 = vmatpush.bf16.msra.mxu0 %v934
    %1518 = vmatmul.bf16.gmra.mxu0 %v131
    %v1519 = vpop.f32.mrf.mxu0
    %v1520 = vadd.f32 %v338, %v1519
    %v1521 = vpop.f32.mrf.mxu0
    %1522 = vdwg.mxu0
    %1523 = vmatpush.bf16.msra.mxu0 %v994
    %1524 = vmatpush.bf16.msra.mxu0 %v990
    %1525 = vmatpush.bf16.msra.mxu0 %v986
    %1526 = vmatpush.bf16.msra.mxu0 %v982
    %1527 = vmatpush.bf16.msra.mxu0 %v978
    %1528 = vmatpush.bf16.msra.mxu0 %v974
    %1529 = vmatpush.bf16.msra.mxu0 %v970
    %1530 = vmatpush.bf16.msra.mxu0 %v966
    %1531 = vmatmul.bf16.gmra.mxu0 %v132
    %v1532 = vpop.f32.mrf.mxu0
    %v1533 = vadd.f32 %v1520, %v1532
    %v1534 = vpop.f32.mrf.mxu0
    %1535 = vdwg.mxu0
    %1536 = vmatpush.bf16.msra.mxu0 %v1026
    %1537 = vmatpush.bf16.msra.mxu0 %v1022
    %1538 = vmatpush.bf16.msra.mxu0 %v1018
    %1539 = vmatpush.bf16.msra.mxu0 %v1014
    %1540 = vmatpush.bf16.msra.mxu0 %v1010
    %1541 = vmatpush.bf16.msra.mxu0 %v1006
    %1542 = vmatpush.bf16.msra.mxu0 %v1002
    %1543 = vmatpush.bf16.msra.mxu0 %v998
    %1544 = vmatmul.bf16.gmra.mxu0 %v133
    %v1545 = vpop.f32.mrf.mxu0
    %v1546 = vadd.f32 %v1533, %v1545
    %v1547 = vpop.f32.mrf.mxu0
    %1548 = vdwg.mxu0
    %1549 = vmatpush.bf16.msra.mxu0 %v1058
    %1550 = vmatpush.bf16.msra.mxu0 %v1054
    %1551 = vmatpush.bf16.msra.mxu0 %v1050
    %1552 = vmatpush.bf16.msra.mxu0 %v1046
    %1553 = vmatpush.bf16.msra.mxu0 %v1042
    %1554 = vmatpush.bf16.msra.mxu0 %v1038
    %1555 = vmatpush.bf16.msra.mxu0 %v1034
    %1556 = vmatpush.bf16.msra.mxu0 %v1030
    %1557 = vmatmul.bf16.gmra.mxu0 %v134
    %v1558 = vpop.f32.mrf.mxu0
    %v1559 = vadd.f32 %v1546, %v1558
    %v1560 = vpop.f32.mrf.mxu0
    %1561 = vdwg.mxu0
    %1562 = vmatpush.bf16.msra.mxu0 %v1090
    %1563 = vmatpush.bf16.msra.mxu0 %v1086
    %1564 = vmatpush.bf16.msra.mxu0 %v1082
    %1565 = vmatpush.bf16.msra.mxu0 %v1078
    %1566 = vmatpush.bf16.msra.mxu0 %v1074
    %1567 = vmatpush.bf16.msra.mxu0 %v1070
    %1568 = vmatpush.bf16.msra.mxu0 %v1066
    %1569 = vmatpush.bf16.msra.mxu0 %v1062
    %1570 = vmatmul.bf16.gmra.mxu0 %v135
    %v1571 = vpop.f32.mrf.mxu0
    %v1572 = vadd.f32 %v1559, %v1571
    %v1573 = vpop.f32.mrf.mxu0
    %1574 = vdwg.mxu0
    %1575 = vmatpush.bf16.msra.mxu0 %v1122
    %1576 = vmatpush.bf16.msra.mxu0 %v1118
    %1577 = vmatpush.bf16.msra.mxu0 %v1114
    %1578 = vmatpush.bf16.msra.mxu0 %v1110
    %1579 = vmatpush.bf16.msra.mxu0 %v1106
    %1580 = vmatpush.bf16.msra.mxu0 %v1102
    %1581 = vmatpush.bf16.msra.mxu0 %v1098
    %1582 = vmatpush.bf16.msra.mxu0 %v1094
    %1583 = vmatmul.bf16.gmra.mxu0 %v136
    %v1584 = vpop.f32.mrf.mxu0
    %v1585 = vadd.f32 %v1572, %v1584
    %v1586 = vpop.f32.mrf.mxu0
    %1587 = vdwg.mxu0
    %1588 = vmatpush.bf16.msra.mxu0 0
    %1589 = vmatpush.bf16.msra.mxu0 0
    %1590 = vmatpush.bf16.msra.mxu0 0
    %1591 = vmatpush.bf16.msra.mxu0 0
    %1592 = vmatpush.bf16.msra.mxu0 0
    %1593 = vmatpush.bf16.msra.mxu0 0
    %1594 = vmatpush.bf16.msra.mxu0 0
    %1595 = vmatpush.bf16.msra.mxu0 %v1126
    %1596 = vmatmul.bf16.gmra.mxu0 %v1326
    %v1597 = vpop.f32.mrf.mxu0
    %v1598 = vadd.f32 %v1585, %v1597
    %v1599 = vpop.f32.mrf.mxu0
    %1600 = vdwg.mxu0
    %1601 = vmatpush.bf16.msra.mxu0 %v963
    %1602 = vmatpush.bf16.msra.mxu0 %v959
    %1603 = vmatpush.bf16.msra.mxu0 %v955
    %1604 = vmatpush.bf16.msra.mxu0 %v951
    %1605 = vmatpush.bf16.msra.mxu0 %v947
    %1606 = vmatpush.bf16.msra.mxu0 %v943
    %1607 = vmatpush.bf16.msra.mxu0 %v939
    %1608 = vmatpush.bf16.msra.mxu0 %v935
    %1609 = vmatmul.bf16.gmra.mxu0 %v131
    %v1610 = vpop.f32.mrf.mxu0
    %v1611 = vadd.f32 %v339, %v1610
    %v1612 = vpop.f32.mrf.mxu0
    %1613 = vdwg.mxu0
    %1614 = vmatpush.bf16.msra.mxu0 %v995
    %1615 = vmatpush.bf16.msra.mxu0 %v991
    %1616 = vmatpush.bf16.msra.mxu0 %v987
    %1617 = vmatpush.bf16.msra.mxu0 %v983
    %1618 = vmatpush.bf16.msra.mxu0 %v979
    %1619 = vmatpush.bf16.msra.mxu0 %v975
    %1620 = vmatpush.bf16.msra.mxu0 %v971
    %1621 = vmatpush.bf16.msra.mxu0 %v967
    %1622 = vmatmul.bf16.gmra.mxu0 %v132
    %v1623 = vpop.f32.mrf.mxu0
    %v1624 = vadd.f32 %v1611, %v1623
    %v1625 = vpop.f32.mrf.mxu0
    %1626 = vdwg.mxu0
    %1627 = vmatpush.bf16.msra.mxu0 %v1027
    %1628 = vmatpush.bf16.msra.mxu0 %v1023
    %1629 = vmatpush.bf16.msra.mxu0 %v1019
    %1630 = vmatpush.bf16.msra.mxu0 %v1015
    %1631 = vmatpush.bf16.msra.mxu0 %v1011
    %1632 = vmatpush.bf16.msra.mxu0 %v1007
    %1633 = vmatpush.bf16.msra.mxu0 %v1003
    %1634 = vmatpush.bf16.msra.mxu0 %v999
    %1635 = vmatmul.bf16.gmra.mxu0 %v133
    %v1636 = vpop.f32.mrf.mxu0
    %v1637 = vadd.f32 %v1624, %v1636
    %v1638 = vpop.f32.mrf.mxu0
    %1639 = vdwg.mxu0
    %1640 = vmatpush.bf16.msra.mxu0 %v1059
    %1641 = vmatpush.bf16.msra.mxu0 %v1055
    %1642 = vmatpush.bf16.msra.mxu0 %v1051
    %1643 = vmatpush.bf16.msra.mxu0 %v1047
    %1644 = vmatpush.bf16.msra.mxu0 %v1043
    %1645 = vmatpush.bf16.msra.mxu0 %v1039
    %1646 = vmatpush.bf16.msra.mxu0 %v1035
    %1647 = vmatpush.bf16.msra.mxu0 %v1031
    %1648 = vmatmul.bf16.gmra.mxu0 %v134
    %v1649 = vpop.f32.mrf.mxu0
    %v1650 = vadd.f32 %v1637, %v1649
    %v1651 = vpop.f32.mrf.mxu0
    %1652 = vdwg.mxu0
    %1653 = vmatpush.bf16.msra.mxu0 %v1091
    %1654 = vmatpush.bf16.msra.mxu0 %v1087
    %1655 = vmatpush.bf16.msra.mxu0 %v1083
    %1656 = vmatpush.bf16.msra.mxu0 %v1079
    %1657 = vmatpush.bf16.msra.mxu0 %v1075
    %1658 = vmatpush.bf16.msra.mxu0 %v1071
    %1659 = vmatpush.bf16.msra.mxu0 %v1067
    %1660 = vmatpush.bf16.msra.mxu0 %v1063
    %1661 = vmatmul.bf16.gmra.mxu0 %v135
    %v1662 = vpop.f32.mrf.mxu0
    %v1663 = vadd.f32 %v1650, %v1662
    %v1664 = vpop.f32.mrf.mxu0
    %1665 = vdwg.mxu0
    %1666 = vmatpush.bf16.msra.mxu0 %v1123
    %1667 = vmatpush.bf16.msra.mxu0 %v1119
    %1668 = vmatpush.bf16.msra.mxu0 %v1115
    %1669 = vmatpush.bf16.msra.mxu0 %v1111
    %1670 = vmatpush.bf16.msra.mxu0 %v1107
    %1671 = vmatpush.bf16.msra.mxu0 %v1103
    %1672 = vmatpush.bf16.msra.mxu0 %v1099
    %1673 = vmatpush.bf16.msra.mxu0 %v1095
    %1674 = vmatmul.bf16.gmra.mxu0 %v136
    %v1675 = vpop.f32.mrf.mxu0
    %v1676 = vadd.f32 %v1663, %v1675
    %v1677 = vpop.f32.mrf.mxu0
    %1678 = vdwg.mxu0
    %1679 = vmatpush.bf16.msra.mxu0 0
    %1680 = vmatpush.bf16.msra.mxu0 0
    %1681 = vmatpush.bf16.msra.mxu0 0
    %1682 = vmatpush.bf16.msra.mxu0 0
    %1683 = vmatpush.bf16.msra.mxu0 0
    %1684 = vmatpush.bf16.msra.mxu0 0
    %1685 = vmatpush.bf16.msra.mxu0 0
    %1686 = vmatpush.bf16.msra.mxu0 %v1127
    %1687 = vmatmul.bf16.gmra.mxu0 %v1326
    %v1688 = vpop.f32.mrf.mxu0
    %v1689 = vadd.f32 %v1676, %v1688
    %v1690 = vpop.f32.mrf.mxu0
    %1691 = vdwg.mxu0
    %v1692 = vmax.f32 %v1416, 0.0
    %v1693 = vmax.f32 %v1507, 0.0
    %v1694 = vmax.f32 %v1598, 0.0
    %v1695 = vmax.f32 %v1689, 0.0
    %v1696 = vpack.c.bf16 %v1692, %v1692
    %v1697 = vpack.c.bf16 %v1693, %v1693
    %v1698 = vpack.c.bf16 %v1694, %v1694
    %v1699 = vpack.c.bf16 %v1695, %v1695
    %v1700 = vld [vmem:[#allocation8] sm:$0xff]
    %v1701 = vld [vmem:[#allocation8 + $0x8] sm:$0xff]
    %v1702 = vld [vmem:[#allocation8 + $0x10] sm:$0xff]
    %v1703 = vld [vmem:[#allocation8 + $0x18] sm:$0xff]
    %v1704 = vld [vmem:[#allocation8 + $0x20] sm:$0xff]
    %v1705 = vld [vmem:[#allocation8 + $0x28] sm:$0xff]
    %v1706 = vld [vmem:[#allocation8 + $0x30] sm:$0xff]
    %v1707 = vld [vmem:[#allocation8 + $0x38] sm:$0xff]
    %v1708 = vld [vmem:[#allocation8 + $0x40] sm:$0xff]
    %v1709 = vld [vmem:[#allocation8 + $0x48] sm:$0xff]
    %v1710 = vld [vmem:[#allocation8 + $0x50] sm:$0xff]
    %v1711 = vld [vmem:[#allocation8 + $0x58] sm:$0xff]
    %v1712 = vld [vmem:[#allocation8 + $0x60] sm:$0xff]
    %v1713 = vld [vmem:[#allocation8 + $0x68] sm:$0xff]
    %v1714 = vld [vmem:[#allocation8 + $0x70] sm:$0xff]
    %v1715 = vld [vmem:[#allocation8 + $0x78] sm:$0xff]
    %v1716 = vld [vmem:[#allocation8 + $0x80] sm:$0xff]
    %v1717 = vld [vmem:[#allocation8 + $0x88] sm:$0xff]
    %v1718 = vld [vmem:[#allocation8 + $0x90] sm:$0xff]
    %v1719 = vld [vmem:[#allocation8 + $0x98] sm:$0xff]
    %v1720 = vld [vmem:[#allocation8 + $0xa0] sm:$0xff]
    %v1721 = vld [vmem:[#allocation8 + $0xa8] sm:$0xff]
    %v1722 = vld [vmem:[#allocation8 + $0xb0] sm:$0xff]
    %v1723 = vld [vmem:[#allocation8 + $0xb8] sm:$0xff]
    %v1724 = vld [vmem:[#allocation8 + $0xc0] sm:$0xff]
    %v1725 = vld [vmem:[#allocation8 + $0xc8] sm:$0xff]
    %v1726 = vld [vmem:[#allocation8 + $0xd0] sm:$0xff]
    %v1727 = vld [vmem:[#allocation8 + $0xd8] sm:$0xff]
    %v1728 = vld [vmem:[#allocation8 + $0xe0] sm:$0xff]
    %v1729 = vld [vmem:[#allocation8 + $0xe8] sm:$0xff]
    %v1730 = vld [vmem:[#allocation8 + $0xf0] sm:$0xff]
    %v1731 = vld [vmem:[#allocation8 + $0xf8] sm:$0xff]
    %v1732 = vld [vmem:[#allocation8 + $0x100] sm:$0xff]
    %v1733 = vld [vmem:[#allocation8 + $0x108] sm:$0xff]
    %v1734 = vld [vmem:[#allocation8 + $0x110] sm:$0xff]
    %v1735 = vld [vmem:[#allocation8 + $0x118] sm:$0xff]
    %v1736 = vld [vmem:[#allocation8 + $0x120] sm:$0xff]
    %v1737 = vld [vmem:[#allocation8 + $0x128] sm:$0xff]
    %v1738 = vld [vmem:[#allocation8 + $0x130] sm:$0xff]
    %v1739 = vld [vmem:[#allocation8 + $0x138] sm:$0xff]
    %v1740 = vld [vmem:[#allocation8 + $0x140] sm:$0xff]
    %v1741 = vld [vmem:[#allocation8 + $0x148] sm:$0xff]
    %v1742 = vld [vmem:[#allocation8 + $0x150] sm:$0xff]
    %v1743 = vld [vmem:[#allocation8 + $0x158] sm:$0xff]
    %v1744 = vld [vmem:[#allocation8 + $0x160] sm:$0xff]
    %v1745 = vld [vmem:[#allocation8 + $0x168] sm:$0xff]
    %v1746 = vld [vmem:[#allocation8 + $0x170] sm:$0xff]
    %v1747 = vld [vmem:[#allocation8 + $0x178] sm:$0xff]
    %v1748 = vld [vmem:[#allocation8 + $0x180] sm:$0xff]
    %v1749 = vld [vmem:[#allocation8 + $0x188] sm:$0xff]
    %v1750 = vld [vmem:[#allocation8 + $0x190] sm:$0xff]
    %v1751 = vld [vmem:[#allocation8 + $0x198] sm:$0xff]
    %v1752 = vld [vmem:[#allocation8 + $0x1a0] sm:$0xff]
    %v1753 = vld [vmem:[#allocation8 + $0x1a8] sm:$0xff]
    %v1754 = vld [vmem:[#allocation8 + $0x1b0] sm:$0xff]
    %v1755 = vld [vmem:[#allocation8 + $0x1b8] sm:$0xff]
    %v1756 = vld [vmem:[#allocation8 + $0x1c0] sm:$0xff]
    %v1757 = vld [vmem:[#allocation8 + $0x1c8] sm:$0xff]
    %v1758 = vld [vmem:[#allocation8 + $0x1d0] sm:$0xff]
    %v1759 = vld [vmem:[#allocation8 + $0x1d8] sm:$0xff]
    %v1760 = vld [vmem:[#allocation8 + $0x1e0] sm:$0xff]
    %v1761 = vld [vmem:[#allocation8 + $0x1e8] sm:$0xff]
    %v1762 = vld [vmem:[#allocation8 + $0x1f0] sm:$0xff]
    %v1763 = vld [vmem:[#allocation8 + $0x1f8] sm:$0xff]
    %v1764 = vld [vmem:[%s4] sm:$0x3]
    %v1766 = vperm.slane %v1764, 0
    %v1767 = vperm.slane %v1764, 1
    %v1834 = vunpack.c.l.b16 %v1700
    %v1835 = vunpack.c.h.b16 %v1700
    %v1836 = vunpack.c.l.b16 %v1701
    %v1837 = vunpack.c.h.b16 %v1701
    %v1838 = vunpack.c.l.b16 %v1702
    %v1839 = vunpack.c.h.b16 %v1702
    %v1840 = vunpack.c.l.b16 %v1703
    %v1841 = vunpack.c.h.b16 %v1703
    %v1842 = vunpack.c.l.b16 %v1704
    %v1843 = vunpack.c.h.b16 %v1704
    %v1844 = vunpack.c.l.b16 %v1705
    %v1845 = vunpack.c.h.b16 %v1705
    %v1846 = vunpack.c.l.b16 %v1706
    %v1847 = vunpack.c.h.b16 %v1706
    %v1848 = vunpack.c.l.b16 %v1707
    %v1849 = vunpack.c.h.b16 %v1707
    %v1850 = vunpack.c.l.b16 %v1708
    %v1851 = vunpack.c.h.b16 %v1708
    %v1852 = vunpack.c.l.b16 %v1709
    %v1853 = vunpack.c.h.b16 %v1709
    %v1854 = vunpack.c.l.b16 %v1710
    %v1855 = vunpack.c.h.b16 %v1710
    %v1856 = vunpack.c.l.b16 %v1711
    %v1857 = vunpack.c.h.b16 %v1711
    %v1858 = vunpack.c.l.b16 %v1712
    %v1859 = vunpack.c.h.b16 %v1712
    %v1860 = vunpack.c.l.b16 %v1713
    %v1861 = vunpack.c.h.b16 %v1713
    %v1862 = vunpack.c.l.b16 %v1714
    %v1863 = vunpack.c.h.b16 %v1714
    %v1864 = vunpack.c.l.b16 %v1715
    %v1865 = vunpack.c.h.b16 %v1715
    %v1866 = vunpack.c.l.b16 %v1716
    %v1867 = vunpack.c.h.b16 %v1716
    %v1868 = vunpack.c.l.b16 %v1717
    %v1869 = vunpack.c.h.b16 %v1717
    %v1870 = vunpack.c.l.b16 %v1718
    %v1871 = vunpack.c.h.b16 %v1718
    %v1872 = vunpack.c.l.b16 %v1719
    %v1873 = vunpack.c.h.b16 %v1719
    %v1874 = vunpack.c.l.b16 %v1720
    %v1875 = vunpack.c.h.b16 %v1720
    %v1876 = vunpack.c.l.b16 %v1721
    %v1877 = vunpack.c.h.b16 %v1721
    %v1878 = vunpack.c.l.b16 %v1722
    %v1879 = vunpack.c.h.b16 %v1722
    %v1880 = vunpack.c.l.b16 %v1723
    %v1881 = vunpack.c.h.b16 %v1723
    %v1882 = vunpack.c.l.b16 %v1724
    %v1883 = vunpack.c.h.b16 %v1724
    %v1884 = vunpack.c.l.b16 %v1725
    %v1885 = vunpack.c.h.b16 %v1725
    %v1886 = vunpack.c.l.b16 %v1726
    %v1887 = vunpack.c.h.b16 %v1726
    %v1888 = vunpack.c.l.b16 %v1727
    %v1889 = vunpack.c.h.b16 %v1727
    %v1890 = vunpack.c.l.b16 %v1728
    %v1891 = vunpack.c.h.b16 %v1728
    %v1892 = vunpack.c.l.b16 %v1729
    %v1893 = vunpack.c.h.b16 %v1729
    %v1894 = vunpack.c.l.b16 %v1730
    %v1895 = vunpack.c.h.b16 %v1730
    %v1896 = vunpack.c.l.b16 %v1731
    %v1897 = vunpack.c.h.b16 %v1731
    %v1898 = vunpack.c.l.b16 %v1732
    %v1899 = vunpack.c.h.b16 %v1732
    %v1900 = vunpack.c.l.b16 %v1733
    %v1901 = vunpack.c.h.b16 %v1733
    %v1902 = vunpack.c.l.b16 %v1734
    %v1903 = vunpack.c.h.b16 %v1734
    %v1904 = vunpack.c.l.b16 %v1735
    %v1905 = vunpack.c.h.b16 %v1735
    %v1906 = vunpack.c.l.b16 %v1736
    %v1907 = vunpack.c.h.b16 %v1736
    %v1908 = vunpack.c.l.b16 %v1737
    %v1909 = vunpack.c.h.b16 %v1737
    %v1910 = vunpack.c.l.b16 %v1738
    %v1911 = vunpack.c.h.b16 %v1738
    %v1912 = vunpack.c.l.b16 %v1739
    %v1913 = vunpack.c.h.b16 %v1739
    %v1914 = vunpack.c.l.b16 %v1740
    %v1915 = vunpack.c.h.b16 %v1740
    %v1916 = vunpack.c.l.b16 %v1741
    %v1917 = vunpack.c.h.b16 %v1741
    %v1918 = vunpack.c.l.b16 %v1742
    %v1919 = vunpack.c.h.b16 %v1742
    %v1920 = vunpack.c.l.b16 %v1743
    %v1921 = vunpack.c.h.b16 %v1743
    %v1922 = vunpack.c.l.b16 %v1744
    %v1923 = vunpack.c.h.b16 %v1744
    %v1924 = vunpack.c.l.b16 %v1745
    %v1925 = vunpack.c.h.b16 %v1745
    %v1926 = vunpack.c.l.b16 %v1746
    %v1927 = vunpack.c.h.b16 %v1746
    %v1928 = vunpack.c.l.b16 %v1747
    %v1929 = vunpack.c.h.b16 %v1747
    %v1930 = vunpack.c.l.b16 %v1748
    %v1931 = vunpack.c.h.b16 %v1748
    %v1932 = vunpack.c.l.b16 %v1749
    %v1933 = vunpack.c.h.b16 %v1749
    %v1934 = vunpack.c.l.b16 %v1750
    %v1935 = vunpack.c.h.b16 %v1750
    %v1936 = vunpack.c.l.b16 %v1751
    %v1937 = vunpack.c.h.b16 %v1751
    %v1938 = vunpack.c.l.b16 %v1752
    %v1939 = vunpack.c.h.b16 %v1752
    %v1940 = vunpack.c.l.b16 %v1753
    %v1941 = vunpack.c.h.b16 %v1753
    %v1942 = vunpack.c.l.b16 %v1754
    %v1943 = vunpack.c.h.b16 %v1754
    %v1944 = vunpack.c.l.b16 %v1755
    %v1945 = vunpack.c.h.b16 %v1755
    %v1946 = vunpack.c.l.b16 %v1756
    %v1947 = vunpack.c.h.b16 %v1756
    %v1948 = vunpack.c.l.b16 %v1757
    %v1949 = vunpack.c.h.b16 %v1757
    %v1950 = vunpack.c.l.b16 %v1758
    %v1951 = vunpack.c.h.b16 %v1758
    %v1952 = vunpack.c.l.b16 %v1759
    %v1953 = vunpack.c.h.b16 %v1759
    %v1954 = vunpack.c.l.b16 %v1760
    %v1955 = vunpack.c.h.b16 %v1760
    %v1956 = vunpack.c.l.b16 %v1761
    %v1957 = vunpack.c.h.b16 %v1761
    %v1958 = vunpack.c.l.b16 %v1762
    %v1959 = vunpack.c.h.b16 %v1762
    %v1960 = vunpack.c.l.b16 %v1763
    %v1961 = vunpack.c.h.b16 %v1763
    %v1962 = vpack.c.b16 %v1836, %v1834
    %v1963 = vpack.c.b16 %v1837, %v1835
    %v1964 = vpack.c.b16 %v1840, %v1838
    %v1965 = vpack.c.b16 %v1841, %v1839
    %v1966 = vpack.c.b16 %v1844, %v1842
    %v1967 = vpack.c.b16 %v1845, %v1843
    %v1968 = vpack.c.b16 %v1848, %v1846
    %v1969 = vpack.c.b16 %v1849, %v1847
    %v1970 = vpack.c.b16 %v1852, %v1850
    %v1971 = vpack.c.b16 %v1853, %v1851
    %v1972 = vpack.c.b16 %v1856, %v1854
    %v1973 = vpack.c.b16 %v1857, %v1855
    %v1974 = vpack.c.b16 %v1860, %v1858
    %v1975 = vpack.c.b16 %v1861, %v1859
    %v1976 = vpack.c.b16 %v1864, %v1862
    %v1977 = vpack.c.b16 %v1865, %v1863
    %v1978 = vpack.c.b16 %v1868, %v1866
    %v1979 = vpack.c.b16 %v1869, %v1867
    %v1980 = vpack.c.b16 %v1872, %v1870
    %v1981 = vpack.c.b16 %v1873, %v1871
    %v1982 = vpack.c.b16 %v1876, %v1874
    %v1983 = vpack.c.b16 %v1877, %v1875
    %v1984 = vpack.c.b16 %v1880, %v1878
    %v1985 = vpack.c.b16 %v1881, %v1879
    %v1986 = vpack.c.b16 %v1884, %v1882
    %v1987 = vpack.c.b16 %v1885, %v1883
    %v1988 = vpack.c.b16 %v1888, %v1886
    %v1989 = vpack.c.b16 %v1889, %v1887
    %v1990 = vpack.c.b16 %v1892, %v1890
    %v1991 = vpack.c.b16 %v1893, %v1891
    %v1992 = vpack.c.b16 %v1896, %v1894
    %v1993 = vpack.c.b16 %v1897, %v1895
    %v1994 = vpack.c.b16 %v1900, %v1898
    %v1995 = vpack.c.b16 %v1901, %v1899
    %v1996 = vpack.c.b16 %v1904, %v1902
    %v1997 = vpack.c.b16 %v1905, %v1903
    %v1998 = vpack.c.b16 %v1908, %v1906
    %v1999 = vpack.c.b16 %v1909, %v1907
    %v2000 = vpack.c.b16 %v1912, %v1910
    %v2001 = vpack.c.b16 %v1913, %v1911
    %v2002 = vpack.c.b16 %v1916, %v1914
    %v2003 = vpack.c.b16 %v1917, %v1915
    %v2004 = vpack.c.b16 %v1920, %v1918
    %v2005 = vpack.c.b16 %v1921, %v1919
    %v2006 = vpack.c.b16 %v1924, %v1922
    %v2007 = vpack.c.b16 %v1925, %v1923
    %v2008 = vpack.c.b16 %v1928, %v1926
    %v2009 = vpack.c.b16 %v1929, %v1927
    %v2010 = vpack.c.b16 %v1932, %v1930
    %v2011 = vpack.c.b16 %v1933, %v1931
    %v2012 = vpack.c.b16 %v1936, %v1934
    %v2013 = vpack.c.b16 %v1937, %v1935
    %v2014 = vpack.c.b16 %v1940, %v1938
    %v2015 = vpack.c.b16 %v1941, %v1939
    %v2016 = vpack.c.b16 %v1944, %v1942
    %v2017 = vpack.c.b16 %v1945, %v1943
    %v2018 = vpack.c.b16 %v1948, %v1946
    %v2019 = vpack.c.b16 %v1949, %v1947
    %v2020 = vpack.c.b16 %v1952, %v1950
    %v2021 = vpack.c.b16 %v1953, %v1951
    %v2022 = vpack.c.b16 %v1956, %v1954
    %v2023 = vpack.c.b16 %v1957, %v1955
    %v2024 = vpack.c.b16 %v1960, %v1958
    %v2025 = vpack.c.b16 %v1961, %v1959
    %2090 = vmatpush.bf16.msra.mxu0 %v1976
    %2091 = vmatpush.bf16.msra.mxu0 %v1974
    %2092 = vmatpush.bf16.msra.mxu0 %v1972
    %2093 = vmatpush.bf16.msra.mxu0 %v1970
    %2094 = vmatpush.bf16.msra.mxu0 %v1968
    %2095 = vmatpush.bf16.msra.mxu0 %v1966
    %2096 = vmatpush.bf16.msra.mxu0 %v1964
    %2097 = vmatpush.bf16.msra.mxu0 %v1962
    %2098 = vmatmul.bf16.gmra.mxu0 %v1696
    %v2099 = vpop.f32.mrf.mxu0
    %v2100 = vadd.f32 %v1766, %v2099
    %v2101 = vpop.f32.mrf.mxu0
    %2102 = vdwg.mxu0
    %2103 = vmatpush.bf16.msra.mxu0 %v1992
    %2104 = vmatpush.bf16.msra.mxu0 %v1990
    %2105 = vmatpush.bf16.msra.mxu0 %v1988
    %2106 = vmatpush.bf16.msra.mxu0 %v1986
    %2107 = vmatpush.bf16.msra.mxu0 %v1984
    %2108 = vmatpush.bf16.msra.mxu0 %v1982
    %2109 = vmatpush.bf16.msra.mxu0 %v1980
    %2110 = vmatpush.bf16.msra.mxu0 %v1978
    %2111 = vmatmul.bf16.gmra.mxu0 %v1697
    %v2112 = vpop.f32.mrf.mxu0
    %v2113 = vadd.f32 %v2100, %v2112
    %v2114 = vpop.f32.mrf.mxu0
    %2115 = vdwg.mxu0
    %2116 = vmatpush.bf16.msra.mxu0 %v2008
    %2117 = vmatpush.bf16.msra.mxu0 %v2006
    %2118 = vmatpush.bf16.msra.mxu0 %v2004
    %2119 = vmatpush.bf16.msra.mxu0 %v2002
    %2120 = vmatpush.bf16.msra.mxu0 %v2000
    %2121 = vmatpush.bf16.msra.mxu0 %v1998
    %2122 = vmatpush.bf16.msra.mxu0 %v1996
    %2123 = vmatpush.bf16.msra.mxu0 %v1994
    %2124 = vmatmul.bf16.gmra.mxu0 %v1698
    %v2125 = vpop.f32.mrf.mxu0
    %v2126 = vadd.f32 %v2113, %v2125
    %v2127 = vpop.f32.mrf.mxu0
    %2128 = vdwg.mxu0
    %2129 = vmatpush.bf16.msra.mxu0 %v2024
    %2130 = vmatpush.bf16.msra.mxu0 %v2022
    %2131 = vmatpush.bf16.msra.mxu0 %v2020
    %2132 = vmatpush.bf16.msra.mxu0 %v2018
    %2133 = vmatpush.bf16.msra.mxu0 %v2016
    %2134 = vmatpush.bf16.msra.mxu0 %v2014
    %2135 = vmatpush.bf16.msra.mxu0 %v2012
    %2136 = vmatpush.bf16.msra.mxu0 %v2010
    %2137 = vmatmul.bf16.gmra.mxu0 %v1699
    %v2138 = vpop.f32.mrf.mxu0
    %v2139 = vadd.f32 %v2126, %v2138
    %v2140 = vpop.f32.mrf.mxu0
    %2141 = vdwg.mxu0
    %2142 = vmatpush.bf16.msra.mxu0 %v1977
    %2143 = vmatpush.bf16.msra.mxu0 %v1975
    %2144 = vmatpush.bf16.msra.mxu0 %v1973
    %2145 = vmatpush.bf16.msra.mxu0 %v1971
    %2146 = vmatpush.bf16.msra.mxu0 %v1969
    %2147 = vmatpush.bf16.msra.mxu0 %v1967
    %2148 = vmatpush.bf16.msra.mxu0 %v1965
    %2149 = vmatpush.bf16.msra.mxu0 %v1963
    %2150 = vmatmul.bf16.gmra.mxu0 %v1696
    %v2151 = vpop.f32.mrf.mxu0
    %v2152 = vadd.f32 %v1767, %v2151
    %v2153 = vpop.f32.mrf.mxu0
    %2154 = vdwg.mxu0
    %2155 = vmatpush.bf16.msra.mxu0 %v1993
    %2156 = vmatpush.bf16.msra.mxu0 %v1991
    %2157 = vmatpush.bf16.msra.mxu0 %v1989
    %2158 = vmatpush.bf16.msra.mxu0 %v1987
    %2159 = vmatpush.bf16.msra.mxu0 %v1985
    %2160 = vmatpush.bf16.msra.mxu0 %v1983
    %2161 = vmatpush.bf16.msra.mxu0 %v1981
    %2162 = vmatpush.bf16.msra.mxu0 %v1979
    %2163 = vmatmul.bf16.gmra.mxu0 %v1697
    %v2164 = vpop.f32.mrf.mxu0
    %v2165 = vadd.f32 %v2152, %v2164
    %v2166 = vpop.f32.mrf.mxu0
    %2167 = vdwg.mxu0
    %2168 = vmatpush.bf16.msra.mxu0 %v2009
    %2169 = vmatpush.bf16.msra.mxu0 %v2007
    %2170 = vmatpush.bf16.msra.mxu0 %v2005
    %2171 = vmatpush.bf16.msra.mxu0 %v2003
    %2172 = vmatpush.bf16.msra.mxu0 %v2001
    %2173 = vmatpush.bf16.msra.mxu0 %v1999
    %2174 = vmatpush.bf16.msra.mxu0 %v1997
    %2175 = vmatpush.bf16.msra.mxu0 %v1995
    %2176 = vmatmul.bf16.gmra.mxu0 %v1698
    %v2177 = vpop.f32.mrf.mxu0
    %v2178 = vadd.f32 %v2165, %v2177
    %v2179 = vpop.f32.mrf.mxu0
    %2180 = vdwg.mxu0
    %2181 = vmatpush.bf16.msra.mxu0 %v2025
    %2182 = vmatpush.bf16.msra.mxu0 %v2023
    %2183 = vmatpush.bf16.msra.mxu0 %v2021
    %2184 = vmatpush.bf16.msra.mxu0 %v2019
    %2185 = vmatpush.bf16.msra.mxu0 %v2017
    %2186 = vmatpush.bf16.msra.mxu0 %v2015
    %2187 = vmatpush.bf16.msra.mxu0 %v2013
    %2188 = vmatpush.bf16.msra.mxu0 %v2011
    %2189 = vmatmul.bf16.gmra.mxu0 %v1699
    %v2190 = vpop.f32.mrf.mxu0
    %v2191 = vadd.f32 %v2178, %v2190
    %v2192 = vpop.f32.mrf.mxu0
    %2193 = vdwg.mxu0
    %v2194 = vmax.f32 %v2139, 0.0
    %v2195 = vmax.f32 %v2191, 0.0
    %v2196 = vpack.c.bf16 %v2194, %v2194
    %v2197 = vpack.c.bf16 %v2195, %v2195
    %v2198 = vld [vmem:[#allocation10] sm:$0xf]
    %v2199 = vld [vmem:[#allocation10 + $0x4] sm:$0xf]
    %v2200 = vld [vmem:[#allocation10 + $0x8] sm:$0xf]
    %v2201 = vld [vmem:[#allocation10 + $0xc] sm:$0xf]
    %v2202 = vld [vmem:[#allocation10 + $0x10] sm:$0xf]
    %v2203 = vld [vmem:[#allocation10 + $0x14] sm:$0xf]
    %v2204 = vld [vmem:[#allocation10 + $0x18] sm:$0xf]
    %v2205 = vld [vmem:[#allocation10 + $0x1c] sm:$0xf]
    %v2206 = vld [vmem:[#allocation10 + $0x20] sm:$0xf]
    %v2207 = vld [vmem:[#allocation10 + $0x24] sm:$0xf]
    %v2208 = vld [vmem:[#allocation10 + $0x28] sm:$0xf]
    %v2209 = vld [vmem:[#allocation10 + $0x2c] sm:$0xf]
    %v2210 = vld [vmem:[#allocation10 + $0x30] sm:$0xf]
    %v2211 = vld [vmem:[#allocation10 + $0x34] sm:$0xf]
    %v2212 = vld [vmem:[#allocation10 + $0x38] sm:$0xf]
    %v2213 = vld [vmem:[#allocation10 + $0x3c] sm:$0xf]
    %v2214 = vld [vmem:[#allocation10 + $0x40] sm:$0xf]
    %v2215 = vld [vmem:[#allocation10 + $0x44] sm:$0xf]
    %v2216 = vld [vmem:[#allocation10 + $0x48] sm:$0xf]
    %v2217 = vld [vmem:[#allocation10 + $0x4c] sm:$0xf]
    %v2218 = vld [vmem:[#allocation10 + $0x50] sm:$0xf]
    %v2219 = vld [vmem:[#allocation10 + $0x54] sm:$0xf]
    %v2220 = vld [vmem:[#allocation10 + $0x58] sm:$0xf]
    %v2221 = vld [vmem:[#allocation10 + $0x5c] sm:$0xf]
    %v2222 = vld [vmem:[#allocation10 + $0x60] sm:$0xf]
    %v2223 = vld [vmem:[#allocation10 + $0x64] sm:$0xf]
    %v2224 = vld [vmem:[#allocation10 + $0x68] sm:$0xf]
    %v2225 = vld [vmem:[#allocation10 + $0x6c] sm:$0xf]
    %v2226 = vld [vmem:[#allocation10 + $0x70] sm:$0xf]
    %v2227 = vld [vmem:[#allocation10 + $0x74] sm:$0xf]
    %v2228 = vld [vmem:[#allocation10 + $0x78] sm:$0xf]
    %v2229 = vld [vmem:[#allocation10 + $0x7c] sm:$0xf]
    %v2230 = vld [vmem:[%s6] sm:$0x1]
    %v2232 = vperm.slane %v2230, 0
    %v2266 = vunpack.c.l.b16 %v2198
    %v2267 = vunpack.c.l.b16 %v2199
    %v2268 = vunpack.c.l.b16 %v2200
    %v2269 = vunpack.c.l.b16 %v2201
    %v2270 = vunpack.c.l.b16 %v2202
    %v2271 = vunpack.c.l.b16 %v2203
    %v2272 = vunpack.c.l.b16 %v2204
    %v2273 = vunpack.c.l.b16 %v2205
    %v2274 = vunpack.c.l.b16 %v2206
    %v2275 = vunpack.c.l.b16 %v2207
    %v2276 = vunpack.c.l.b16 %v2208
    %v2277 = vunpack.c.l.b16 %v2209
    %v2278 = vunpack.c.l.b16 %v2210
    %v2279 = vunpack.c.l.b16 %v2211
    %v2280 = vunpack.c.l.b16 %v2212
    %v2281 = vunpack.c.l.b16 %v2213
    %v2282 = vunpack.c.l.b16 %v2214
    %v2283 = vunpack.c.l.b16 %v2215
    %v2284 = vunpack.c.l.b16 %v2216
    %v2285 = vunpack.c.l.b16 %v2217
    %v2286 = vunpack.c.l.b16 %v2218
    %v2287 = vunpack.c.l.b16 %v2219
    %v2288 = vunpack.c.l.b16 %v2220
    %v2289 = vunpack.c.l.b16 %v2221
    %v2290 = vunpack.c.l.b16 %v2222
    %v2291 = vunpack.c.l.b16 %v2223
    %v2292 = vunpack.c.l.b16 %v2224
    %v2293 = vunpack.c.l.b16 %v2225
    %v2294 = vunpack.c.l.b16 %v2226
    %v2295 = vunpack.c.l.b16 %v2227
    %v2296 = vunpack.c.l.b16 %v2228
    %v2297 = vunpack.c.l.b16 %v2229
    %v2298 = vpack.c.b16 %v2267, %v2266
    %v2299 = vpack.c.b16 %v2269, %v2268
    %v2300 = vpack.c.b16 %v2271, %v2270
    %v2301 = vpack.c.b16 %v2273, %v2272
    %v2302 = vpack.c.b16 %v2275, %v2274
    %v2303 = vpack.c.b16 %v2277, %v2276
    %v2304 = vpack.c.b16 %v2279, %v2278
    %v2305 = vpack.c.b16 %v2281, %v2280
    %v2306 = vpack.c.b16 %v2283, %v2282
    %v2307 = vpack.c.b16 %v2285, %v2284
    %v2308 = vpack.c.b16 %v2287, %v2286
    %v2309 = vpack.c.b16 %v2289, %v2288
    %v2310 = vpack.c.b16 %v2291, %v2290
    %v2311 = vpack.c.b16 %v2293, %v2292
    %v2312 = vpack.c.b16 %v2295, %v2294
    %v2313 = vpack.c.b16 %v2297, %v2296
    %2330 = vmatpush.bf16.msra.mxu0 %v2305
    %2331 = vmatpush.bf16.msra.mxu0 %v2304
    %2332 = vmatpush.bf16.msra.mxu0 %v2303
    %2333 = vmatpush.bf16.msra.mxu0 %v2302
    %2334 = vmatpush.bf16.msra.mxu0 %v2301
    %2335 = vmatpush.bf16.msra.mxu0 %v2300
    %2336 = vmatpush.bf16.msra.mxu0 %v2299
    %2337 = vmatpush.bf16.msra.mxu0 %v2298
    %2338 = vmatmul.bf16.gmra.mxu0 %v2196
    %v2339 = vpop.f32.mrf.mxu0
    %v2340 = vadd.f32 %v2232, %v2339
    %v2341 = vpop.f32.mrf.mxu0
    %2342 = vdwg.mxu0
    %2343 = vmatpush.bf16.msra.mxu0 %v2313
    %2344 = vmatpush.bf16.msra.mxu0 %v2312
    %2345 = vmatpush.bf16.msra.mxu0 %v2311
    %2346 = vmatpush.bf16.msra.mxu0 %v2310
    %2347 = vmatpush.bf16.msra.mxu0 %v2309
    %2348 = vmatpush.bf16.msra.mxu0 %v2308
    %2349 = vmatpush.bf16.msra.mxu0 %v2307
    %2350 = vmatpush.bf16.msra.mxu0 %v2306
    %2351 = vmatmul.bf16.gmra.mxu0 %v2197
    %v2352 = vpop.f32.mrf.mxu0
    %v2353 = vadd.f32 %v2340, %v2352
    %v2354 = vpop.f32.mrf.mxu0
    %2355 = vdwg.mxu0
    %v2356 = vmax.f32 %v2353, 0.0
    %v2357 = vpack.c.bf16 %v2356, %v2356
    %v2358 = vld [vmem:[#allocation11] sm:$0xf]
    %v2359 = vld [vmem:[#allocation11 + $0x4] sm:$0xf]
    %v2360 = vld [vmem:[#allocation11 + $0x8] sm:$0xf]
    %v2361 = vld [vmem:[#allocation11 + $0xc] sm:$0xf]
    %v2362 = vld [vmem:[#allocation11 + $0x10] sm:$0xf]
    %v2363 = vld [vmem:[#allocation11 + $0x14] sm:$0xf]
    %v2364 = vld [vmem:[#allocation11 + $0x18] sm:$0xf]
    %v2365 = vld [vmem:[#allocation11 + $0x1c] sm:$0xf]
    %v2366 = vld [vmem:[#allocation11 + $0x20] sm:$0xf]
    %v2367 = vld [vmem:[#allocation11 + $0x24] sm:$0xf]
    %v2368 = vld [vmem:[#allocation11 + $0x28] sm:$0xf]
    %v2369 = vld [vmem:[#allocation11 + $0x2c] sm:$0xf]
    %v2370 = vld [vmem:[#allocation11 + $0x30] sm:$0xf]
    %v2371 = vld [vmem:[#allocation11 + $0x34] sm:$0xf]
    %v2372 = vld [vmem:[#allocation11 + $0x38] sm:$0xf]
    %v2373 = vld [vmem:[#allocation11 + $0x3c] sm:$0xf]
    %v2374 = vld [vmem:[%s8] sm:$0x1]
    %v2376 = vperm.slane %v2374, 0
    %v2394 = vunpack.c.l.b16 %v2358
    %v2395 = vunpack.c.l.b16 %v2359
    %v2396 = vunpack.c.l.b16 %v2360
    %v2397 = vunpack.c.l.b16 %v2361
    %v2398 = vunpack.c.l.b16 %v2362
    %v2399 = vunpack.c.l.b16 %v2363
    %v2400 = vunpack.c.l.b16 %v2364
    %v2401 = vunpack.c.l.b16 %v2365
    %v2402 = vunpack.c.l.b16 %v2366
    %v2403 = vunpack.c.l.b16 %v2367
    %v2404 = vunpack.c.l.b16 %v2368
    %v2405 = vunpack.c.l.b16 %v2369
    %v2406 = vunpack.c.l.b16 %v2370
    %v2407 = vunpack.c.l.b16 %v2371
    %v2408 = vunpack.c.l.b16 %v2372
    %v2409 = vunpack.c.l.b16 %v2373
    %v2410 = vpack.c.b16 %v2395, %v2394
    %v2411 = vpack.c.b16 %v2397, %v2396
    %v2412 = vpack.c.b16 %v2399, %v2398
    %v2413 = vpack.c.b16 %v2401, %v2400
    %v2414 = vpack.c.b16 %v2403, %v2402
    %v2415 = vpack.c.b16 %v2405, %v2404
    %v2416 = vpack.c.b16 %v2407, %v2406
    %v2417 = vpack.c.b16 %v2409, %v2408
    %2426 = vmatpush.bf16.msra.mxu0 %v2417
    %2427 = vmatpush.bf16.msra.mxu0 %v2416
    %2428 = vmatpush.bf16.msra.mxu0 %v2415
    %2429 = vmatpush.bf16.msra.mxu0 %v2414
    %2430 = vmatpush.bf16.msra.mxu0 %v2413
    %2431 = vmatpush.bf16.msra.mxu0 %v2412
    %2432 = vmatpush.bf16.msra.mxu0 %v2411
    %2433 = vmatpush.bf16.msra.mxu0 %v2410
    %2434 = vmatmul.bf16.gmra.mxu0 %v2357
    %v2435 = vpop.f32.mrf.mxu0
    %v2436 = vadd.f32 %v2376, %v2435
    %v2437 = vpop.f32.mrf.mxu0
    %2438 = vdwg.mxu0
    %v2439 = vpack.c.bf16 %v2436, %v2436
    %2440 = vst [vmem:[#allocation13] sm:$0xf] %v2439
    // Predicated region
    $region62: #{tpu_custom_call.1} parent=1 // pred_check
      _
    $region63: #{tpu_custom_call.1} parent=1 // pred_check_branch
      %2442 = sbr.rel (0) target = $region65
    $region64: #{tpu_custom_call.1} parent=1 // pred_region
      %2444 = vsyncadd [#allocation4], 0
      %s2446 = sshll.u32 [#allocation13], 4
      %s2447 = int_to_ptr.vmem [resolvable:$true] %s2446
      %s2448 = sshll.u32 %s9, 4
      %s2449 = int_to_ptr.hbm [resolvable:$true] %s2448
      %2451 = dma.vmem_to_hbm [thread:$0]  %s2447, 64, %s2449, [#allocation4]
    $region65: #{tpu_custom_call.1} parent=1 // pred_fallthru
      _
    // Predicated region
    $region66: #{tpu_custom_call.1} parent=1 // pred_check
      _
    $region67: #{tpu_custom_call.1} parent=1 // pred_check_branch
      %2453 = sbr.rel (0) target = $region69
    $region68: #{tpu_custom_call.1} parent=1 // pred_region
      %2455 = dma.done [#allocation4], 64
    $region69: #{tpu_custom_call.1} parent=1 // pred_fallthru
      _
    %2456 = vsyncpa [#allocation3], 1
    %2457 = vsyncpa [#allocation6], 1
    %2458 = vsyncpa [#allocation9], 1
    %2459 = vsyncpa [#allocation12], 1
    %2460 = vsyncpa [#allocation4], 1

</llo_original>
